<compile_context>
chip_gen: v7x
topology: tpu7x:2x2x1
jax: 0.10.0
libtpu: 0.0.40
codegen_flags: <defaults>
</compile_context>

<pallas_src>
import functools

import jax
import jax.numpy as jnp
from jax import lax
from jax.experimental import pallas as pl
from jax.experimental.pallas import tpu as pltpu


def _heads_per_group(num_heads, head_dim):
    """Largest head-group size so the group lane width targets 128 lanes."""
    if head_dim >= 128 or (128 % head_dim) != 0:
        return 1
    hpg = min(num_heads, 128 // head_dim)
    while hpg > 1 and (num_heads % hpg) != 0:
        hpg -= 1
    return max(hpg, 1)


def _attn_kernel(x_ref, wqkv_ref, wp_ref, bp_ref, o_ref, acc_ref, *,
                 num_heads, mxu_dtype):
    N = x_ref.shape[1]
    C = x_ref.shape[2]
    D = C // num_heads
    hpg = _heads_per_group(num_heads, D)     # heads per lane-aligned group
    gw = hpg * D                             # group lane width (128 for ViT D=64)
    n_groups = num_heads // hpg

    x = x_ref[0].astype(mxu_dtype)           # (N, C)
    wqkv = wqkv_ref[...].astype(mxu_dtype)   # (C, 3C), scale folded into Q cols
    wp = wp_ref[...].astype(mxu_dtype)       # (C, C)

    # Single wide QKV projection (MXU), f32 accumulation.
    qkv = jnp.dot(x, wqkv, preferred_element_type=jnp.float32)       # (N, 3C)

    # Hoisted casts: one cast per operand instead of per head.
    q_all = qkv[:, 0 * C:1 * C].astype(mxu_dtype)                    # (N, C)
    k_all = qkv[:, 1 * C:2 * C].astype(mxu_dtype)                    # (N, C)
    v_all = qkv[:, 2 * C:3 * C].astype(mxu_dtype)                    # (N, C)
    # NOTE: K stays (N, C); the per-head score matmul uses dot_general with
    # contraction on dim 1 of both operands (MXU transposed-RHS mode).  An
    # explicit hoisted (C, N) transpose was reviewed as a "modest, verify in
    # bundle" change and is skipped to keep lowering simple/robust.

    exact_recip = (mxu_dtype == jnp.float32)

    for g in range(n_groups):                # static unroll, lane-aligned slices
        q_g = q_all[:, g * gw:(g + 1) * gw]
        k_g = k_all[:, g * gw:(g + 1) * gw]
        v_g = v_all[:, g * gw:(g + 1) * gw]

        outs = []
        for hh in range(hpg):
            q = q_g[:, hh * D:(hh + 1) * D]                          # (N, D)
            k = k_g[:, hh * D:(hh + 1) * D]                          # (N, D)
            v = v_g[:, hh * D:(hh + 1) * D]                          # (N, D)

            # Scores; softmax scale was folded into W_qkv's Q columns.
            s = lax.dot_general(q, k, (((1,), (1,)), ((), ())),
                                preferred_element_type=jnp.float32)  # (N, N)
            s = s - jnp.max(s, axis=-1, keepdims=True)
            p = jnp.exp(s)                                           # f32 softmax
            denom = jnp.sum(p, axis=-1, keepdims=True)               # (N, 1)

            # Unnormalized attn @ V, then normalize the (N, D) result.
            oh = jnp.dot(p.astype(mxu_dtype), v,
                         preferred_element_type=jnp.float32)         # (N, D)
            oh = oh * pl.reciprocal(denom, approx=not exact_recip)
            outs.append(oh)

        slab = outs[0] if hpg == 1 else jnp.concatenate(outs, axis=-1)
        # Lane-dense slab store into the scratch accumulator as soon as the
        # group finishes: keeps register pressure flat and avoids a big
        # all-heads concatenate at the end.
        acc_ref[:, g * gw:(g + 1) * gw] = slab

    # Single wide output projection + bias, written once per batch element.
    concat = acc_ref[...].astype(mxu_dtype)                          # (N, C)
    out = jnp.dot(concat, wp, preferred_element_type=jnp.float32)    # (N, C)
    o_ref[0] = out + bp_ref[...]


def attention_pallas(x, w_qkv, w_proj, b_proj, *, num_heads,
                     mxu_dtype=jnp.bfloat16):
    """ViT Attention forward (eval mode) as a Pallas TPU kernel.

    x      : (B, N, C) float32
    w_qkv  : (3C, C) float32   (PyTorch nn.Linear weight layout: out x in; no bias)
    w_proj : (C, C)  float32   (out x in)
    b_proj : (C,)    float32
    mxu_dtype : dtype of MXU operands (bf16 default; softmax/accum stay f32).
    """
    B, N, C = x.shape
    D = C // num_heads
    scale = D ** (-0.5)

    # Fold the softmax scale into the Q rows of W_qkv (one-time XLA work),
    # then transpose so the kernel does plain right-multiplies.
    wq_scaled = w_qkv[0 * C:1 * C] * scale
    wqkv = jnp.concatenate([wq_scaled, w_qkv[1 * C:3 * C]], axis=0).T   # (C, 3C)
    wp = w_proj.T                                                       # (C, C)
    bias2d = b_proj.reshape(1, C).astype(jnp.float32)                   # bias stays f32

    if mxu_dtype != jnp.float32:
        # Halve weight/activation DMA bytes and hit the bf16 MXU rate.
        x = x.astype(mxu_dtype)
        wqkv = wqkv.astype(mxu_dtype)
        wp = wp.astype(mxu_dtype)

    # Generation-aware VMEM budget: ~85% of physical, capped at 100 MiB
    # (~54 MiB on 64 MiB v7x, ~100 MiB on 128 MiB v5e/v6e parts).
    try:
        vmem_cap = int(pltpu.get_tpu_info().vmem_capacity_bytes)
    except Exception:
        vmem_cap = 64 * 1024 * 1024
    vmem_limit = int(min(vmem_cap * 0.85, 100 * 1024 * 1024))

    kernel = functools.partial(_attn_kernel, num_heads=num_heads,
                               mxu_dtype=mxu_dtype)

    def build(weight_pipeline_mode):
        wkw = ({} if weight_pipeline_mode is None
               else dict(pipeline_mode=weight_pipeline_mode))
        return pl.pallas_call(
            kernel,
            out_shape=jax.ShapeDtypeStruct((B, N, C), jnp.float32),
            grid_spec=pltpu.PrefetchScalarGridSpec(
                num_scalar_prefetch=0,
                grid=(B,),
                in_specs=[
                    pl.BlockSpec((1, N, C), lambda b: (b, 0, 0)),        # x (per batch)
                    pl.BlockSpec((C, 3 * C), lambda b: (0, 0), **wkw),   # W_qkv (resident)
                    pl.BlockSpec((C, C), lambda b: (0, 0), **wkw),       # W_proj (resident)
                    pl.BlockSpec((1, C), lambda b: (0, 0), **wkw),       # proj bias (resident)
                ],
                out_specs=pl.BlockSpec((1, N, C), lambda b: (b, 0, 0)),
                scratch_shapes=[pltpu.VMEM((N, C), jnp.float32)],        # head-concat accumulator
            ),
            compiler_params=pltpu.CompilerParams(
                dimension_semantics=("parallel",),
                vmem_limit_bytes=vmem_limit,
            ),
        )

    try:
        # Constant-index weights: single-buffer them (double-buffering a
        # constant input only doubles resident VMEM, never overlaps anything).
        return build(pl.Buffered(1))(x, wqkv, wp, bias2d)
    except Exception:
        # Fallback for JAX builds that reject Buffered(1) on these specs.
        return build(None)(x, wqkv, wp, bias2d)


def attention_ref(x, w_qkv, w_proj, b_proj, *, num_heads):
    """Pure-JAX reference matching the PyTorch module (eval mode)."""
    B, N, C = x.shape
    D = C // num_heads
    scale = D ** (-0.5)
    qkv = x @ w_qkv.T                                   # (B, N, 3C)
    qkv = qkv.reshape(B, N, 3, num_heads, D)
    qkv = jnp.transpose(qkv, (2, 0, 3, 1, 4))           # (3, B, H, N, D)
    q, k, v = qkv[0], qkv[1], qkv[2]
    attn = (q @ jnp.swapaxes(k, -2, -1)) * scale        # (B, H, N, N)
    attn = jax.nn.softmax(attn, axis=-1)
    out = attn @ v                                      # (B, H, N, D)
    out = jnp.transpose(out, (0, 2, 1, 3)).reshape(B, N, C)
    return out @ w_proj.T + b_proj


if __name__ == "__main__":
    B, N, C, num_heads = 2, 8, 32, 8

    key = jax.random.PRNGKey(0)
    kx, kqkv, kp, kb = jax.random.split(key, 4)
    x = jax.random.normal(kx, (B, N, C), dtype=jnp.float32)
    w_qkv = jax.random.normal(kqkv, (3 * C, C), dtype=jnp.float32) * 0.02
    w_proj = jax.random.normal(kp, (C, C), dtype=jnp.float32) * 0.02
    b_proj = jax.random.normal(kb, (C,), dtype=jnp.float32) * 0.02

    ref = attention_ref(x, w_qkv, w_proj, b_proj, num_heads=num_heads)

    # Strict f32 MXU path (exact reciprocal) vs reference.
    out_f32 = attention_pallas(x, w_qkv, w_proj, b_proj, num_heads=num_heads,
                               mxu_dtype=jnp.float32)
    out_f32 = jax.block_until_ready(out_f32)
    assert out_f32.shape == (B, N, C)
    assert jnp.allclose(out_f32, ref, atol=1e-4, rtol=1e-4), "f32 mismatch vs reference"

    # Default bf16 MXU-operand path (softmax / accumulation stay f32), looser tol.
    out_bf16 = attention_pallas(x, w_qkv, w_proj, b_proj, num_heads=num_heads)
    out_bf16 = jax.block_until_ready(out_bf16)
    assert out_bf16.shape == (B, N, C)
    assert jnp.allclose(out_bf16, ref, atol=5e-2, rtol=5e-2), "bf16 mismatch vs reference"

    print("KERNEL_OK")
</pallas_src>

<mosaic_0001>
module attributes {stable_mosaic.version = 11 : i64} {
  func.func @_attn_kernel(%arg0: i32, %arg1: memref<1x8x32xf32, #tpu.memory_space<vmem>>, %arg2: memref<32x96xf32, #tpu.memory_space<vmem>>, %arg3: memref<32x32xf32, #tpu.memory_space<vmem>>, %arg4: memref<1x32xf32, #tpu.memory_space<vmem>>, %arg5: memref<1x8x32xf32, #tpu.memory_space<vmem>>, %arg6: memref<8x32xf32, #tpu.memory_space<vmem>>) attributes {dimension_semantics = [#tpu.dimension_semantics<parallel>], iteration_bounds = array<i64: 2>, scalar_prefetch = 0 : i64, scratch_operands = 1 : i64, tpu.core_type = #tpu.core_type<tc>, window_params = [{transform_indices = @transform_0, window_bounds = array<i64: 1, 8, 32>}, {pipeline_mode = #tpu.pipeline_mode<synchronous>, transform_indices = @transform_1, window_bounds = array<i64: 32, 96>}, {pipeline_mode = #tpu.pipeline_mode<synchronous>, transform_indices = @transform_2, window_bounds = array<i64: 32, 32>}, {pipeline_mode = #tpu.pipeline_mode<synchronous>, transform_indices = @transform_3, window_bounds = array<i64: 1, 32>}, {transform_indices = @transform_4, window_bounds = array<i64: 1, 8, 32>}]} {
    %c0 = arith.constant 0 : index
    %c0_0 = arith.constant 0 : index
    %c0_1 = arith.constant 0 : index
    %0 = vector.load %arg1[%c0, %c0_0, %c0_1] : memref<1x8x32xf32, #tpu.memory_space<vmem>>, vector<1x8x32xf32>
    %1 = vector.shape_cast %0 : vector<1x8x32xf32> to vector<8x32xf32>
    %c0_2 = arith.constant 0 : index
    %c0_3 = arith.constant 0 : index
    %2 = vector.load %arg2[%c0_2, %c0_3] : memref<32x96xf32, #tpu.memory_space<vmem>>, vector<32x96xf32>
    %c0_4 = arith.constant 0 : index
    %c0_5 = arith.constant 0 : index
    %3 = vector.load %arg3[%c0_4, %c0_5] : memref<32x32xf32, #tpu.memory_space<vmem>>, vector<32x32xf32>
    %cst = arith.constant dense<0.000000e+00> : vector<8x96xf32>
    %4 = tpu.matmul %1, %2, %cst {dimension_numbers = #tpu.dot_dimension_numbers<[1], [0], [0], [1], [0, 0, 1, 1], [], []>} : vector<8x32xf32>, vector<32x96xf32>, vector<8x96xf32> -> vector<8x96xf32>
    %5 = vector.extract_strided_slice %4 {offsets = [0, 0], sizes = [8, 32], strides = [1, 1]} : vector<8x96xf32> to vector<8x32xf32>
    %6 = vector.extract_strided_slice %4 {offsets = [0, 32], sizes = [8, 32], strides = [1, 1]} : vector<8x96xf32> to vector<8x32xf32>
    %7 = vector.extract_strided_slice %4 {offsets = [0, 64], sizes = [8, 32], strides = [1, 1]} : vector<8x96xf32> to vector<8x32xf32>
    %8 = vector.extract_strided_slice %5 {offsets = [0, 0], sizes = [8, 4], strides = [1, 1]} : vector<8x32xf32> to vector<8x4xf32>
    %9 = vector.extract_strided_slice %6 {offsets = [0, 0], sizes = [8, 4], strides = [1, 1]} : vector<8x32xf32> to vector<8x4xf32>
    %10 = vector.extract_strided_slice %7 {offsets = [0, 0], sizes = [8, 4], strides = [1, 1]} : vector<8x32xf32> to vector<8x4xf32>
    %cst_6 = arith.constant dense<0.000000e+00> : vector<8x8xf32>
    %11 = tpu.matmul %8, %9, %cst_6 {dimension_numbers = #tpu.dot_dimension_numbers<[1], [1], [0], [0], [0, 0, 1, 0], [], []>} : vector<8x4xf32>, vector<8x4xf32>, vector<8x8xf32> -> vector<8x8xf32>
    %cst_7 = arith.constant dense<0xFF800000> : vector<8xf32>
    %12 = vector.multi_reduction <maximumf>, %11, %cst_7 [1] : vector<8x8xf32> to vector<8xf32>
    %13 = vector.shape_cast %12 : vector<8xf32> to vector<8x1xf32>
    %14 = vector.broadcast %13 : vector<8x1xf32> to vector<8x8xf32>
    %15 = arith.subf %11, %14 : vector<8x8xf32>
    %16 = math.exp %15 : vector<8x8xf32>
    %cst_8 = arith.constant dense<0.000000e+00> : vector<8xf32>
    %17 = vector.multi_reduction <add>, %16, %cst_8 [1] : vector<8x8xf32> to vector<8xf32>
    %18 = vector.shape_cast %17 : vector<8xf32> to vector<8x1xf32>
    %cst_9 = arith.constant dense<0.000000e+00> : vector<8x4xf32>
    %19 = tpu.matmul %16, %10, %cst_9 {dimension_numbers = #tpu.dot_dimension_numbers<[1], [0], [0], [1], [0, 0, 1, 1], [], []>} : vector<8x8xf32>, vector<8x4xf32>, vector<8x4xf32> -> vector<8x4xf32>
    %20 = tpu.reciprocal %18 : vector<8x1xf32> -> vector<8x1xf32>
    %21 = vector.broadcast %20 : vector<8x1xf32> to vector<8x4xf32>
    %22 = arith.mulf %19, %21 : vector<8x4xf32>
    %23 = vector.extract_strided_slice %5 {offsets = [0, 4], sizes = [8, 4], strides = [1, 1]} : vector<8x32xf32> to vector<8x4xf32>
    %24 = vector.extract_strided_slice %6 {offsets = [0, 4], sizes = [8, 4], strides = [1, 1]} : vector<8x32xf32> to vector<8x4xf32>
    %25 = vector.extract_strided_slice %7 {offsets = [0, 4], sizes = [8, 4], strides = [1, 1]} : vector<8x32xf32> to vector<8x4xf32>
    %cst_10 = arith.constant dense<0.000000e+00> : vector<8x8xf32>
    %26 = tpu.matmul %23, %24, %cst_10 {dimension_numbers = #tpu.dot_dimension_numbers<[1], [1], [0], [0], [0, 0, 1, 0], [], []>} : vector<8x4xf32>, vector<8x4xf32>, vector<8x8xf32> -> vector<8x8xf32>
    %cst_11 = arith.constant dense<0xFF800000> : vector<8xf32>
    %27 = vector.multi_reduction <maximumf>, %26, %cst_11 [1] : vector<8x8xf32> to vector<8xf32>
    %28 = vector.shape_cast %27 : vector<8xf32> to vector<8x1xf32>
    %29 = vector.broadcast %28 : vector<8x1xf32> to vector<8x8xf32>
    %30 = arith.subf %26, %29 : vector<8x8xf32>
    %31 = math.exp %30 : vector<8x8xf32>
    %cst_12 = arith.constant dense<0.000000e+00> : vector<8xf32>
    %32 = vector.multi_reduction <add>, %31, %cst_12 [1] : vector<8x8xf32> to vector<8xf32>
    %33 = vector.shape_cast %32 : vector<8xf32> to vector<8x1xf32>
    %cst_13 = arith.constant dense<0.000000e+00> : vector<8x4xf32>
    %34 = tpu.matmul %31, %25, %cst_13 {dimension_numbers = #tpu.dot_dimension_numbers<[1], [0], [0], [1], [0, 0, 1, 1], [], []>} : vector<8x8xf32>, vector<8x4xf32>, vector<8x4xf32> -> vector<8x4xf32>
    %35 = tpu.reciprocal %33 : vector<8x1xf32> -> vector<8x1xf32>
    %36 = vector.broadcast %35 : vector<8x1xf32> to vector<8x4xf32>
    %37 = arith.mulf %34, %36 : vector<8x4xf32>
    %38 = vector.extract_strided_slice %5 {offsets = [0, 8], sizes = [8, 4], strides = [1, 1]} : vector<8x32xf32> to vector<8x4xf32>
    %39 = vector.extract_strided_slice %6 {offsets = [0, 8], sizes = [8, 4], strides = [1, 1]} : vector<8x32xf32> to vector<8x4xf32>
    %40 = vector.extract_strided_slice %7 {offsets = [0, 8], sizes = [8, 4], strides = [1, 1]} : vector<8x32xf32> to vector<8x4xf32>
    %cst_14 = arith.constant dense<0.000000e+00> : vector<8x8xf32>
    %41 = tpu.matmul %38, %39, %cst_14 {dimension_numbers = #tpu.dot_dimension_numbers<[1], [1], [0], [0], [0, 0, 1, 0], [], []>} : vector<8x4xf32>, vector<8x4xf32>, vector<8x8xf32> -> vector<8x8xf32>
    %cst_15 = arith.constant dense<0xFF800000> : vector<8xf32>
    %42 = vector.multi_reduction <maximumf>, %41, %cst_15 [1] : vector<8x8xf32> to vector<8xf32>
    %43 = vector.shape_cast %42 : vector<8xf32> to vector<8x1xf32>
    %44 = vector.broadcast %43 : vector<8x1xf32> to vector<8x8xf32>
    %45 = arith.subf %41, %44 : vector<8x8xf32>
    %46 = math.exp %45 : vector<8x8xf32>
    %cst_16 = arith.constant dense<0.000000e+00> : vector<8xf32>
    %47 = vector.multi_reduction <add>, %46, %cst_16 [1] : vector<8x8xf32> to vector<8xf32>
    %48 = vector.shape_cast %47 : vector<8xf32> to vector<8x1xf32>
    %cst_17 = arith.constant dense<0.000000e+00> : vector<8x4xf32>
    %49 = tpu.matmul %46, %40, %cst_17 {dimension_numbers = #tpu.dot_dimension_numbers<[1], [0], [0], [1], [0, 0, 1, 1], [], []>} : vector<8x8xf32>, vector<8x4xf32>, vector<8x4xf32> -> vector<8x4xf32>
    %50 = tpu.reciprocal %48 : vector<8x1xf32> -> vector<8x1xf32>
    %51 = vector.broadcast %50 : vector<8x1xf32> to vector<8x4xf32>
    %52 = arith.mulf %49, %51 : vector<8x4xf32>
    %53 = vector.extract_strided_slice %5 {offsets = [0, 12], sizes = [8, 4], strides = [1, 1]} : vector<8x32xf32> to vector<8x4xf32>
    %54 = vector.extract_strided_slice %6 {offsets = [0, 12], sizes = [8, 4], strides = [1, 1]} : vector<8x32xf32> to vector<8x4xf32>
    %55 = vector.extract_strided_slice %7 {offsets = [0, 12], sizes = [8, 4], strides = [1, 1]} : vector<8x32xf32> to vector<8x4xf32>
    %cst_18 = arith.constant dense<0.000000e+00> : vector<8x8xf32>
    %56 = tpu.matmul %53, %54, %cst_18 {dimension_numbers = #tpu.dot_dimension_numbers<[1], [1], [0], [0], [0, 0, 1, 0], [], []>} : vector<8x4xf32>, vector<8x4xf32>, vector<8x8xf32> -> vector<8x8xf32>
    %cst_19 = arith.constant dense<0xFF800000> : vector<8xf32>
    %57 = vector.multi_reduction <maximumf>, %56, %cst_19 [1] : vector<8x8xf32> to vector<8xf32>
    %58 = vector.shape_cast %57 : vector<8xf32> to vector<8x1xf32>
    %59 = vector.broadcast %58 : vector<8x1xf32> to vector<8x8xf32>
    %60 = arith.subf %56, %59 : vector<8x8xf32>
    %61 = math.exp %60 : vector<8x8xf32>
    %cst_20 = arith.constant dense<0.000000e+00> : vector<8xf32>
    %62 = vector.multi_reduction <add>, %61, %cst_20 [1] : vector<8x8xf32> to vector<8xf32>
    %63 = vector.shape_cast %62 : vector<8xf32> to vector<8x1xf32>
    %cst_21 = arith.constant dense<0.000000e+00> : vector<8x4xf32>
    %64 = tpu.matmul %61, %55, %cst_21 {dimension_numbers = #tpu.dot_dimension_numbers<[1], [0], [0], [1], [0, 0, 1, 1], [], []>} : vector<8x8xf32>, vector<8x4xf32>, vector<8x4xf32> -> vector<8x4xf32>
    %65 = tpu.reciprocal %63 : vector<8x1xf32> -> vector<8x1xf32>
    %66 = vector.broadcast %65 : vector<8x1xf32> to vector<8x4xf32>
    %67 = arith.mulf %64, %66 : vector<8x4xf32>
    %68 = vector.extract_strided_slice %5 {offsets = [0, 16], sizes = [8, 4], strides = [1, 1]} : vector<8x32xf32> to vector<8x4xf32>
    %69 = vector.extract_strided_slice %6 {offsets = [0, 16], sizes = [8, 4], strides = [1, 1]} : vector<8x32xf32> to vector<8x4xf32>
    %70 = vector.extract_strided_slice %7 {offsets = [0, 16], sizes = [8, 4], strides = [1, 1]} : vector<8x32xf32> to vector<8x4xf32>
    %cst_22 = arith.constant dense<0.000000e+00> : vector<8x8xf32>
    %71 = tpu.matmul %68, %69, %cst_22 {dimension_numbers = #tpu.dot_dimension_numbers<[1], [1], [0], [0], [0, 0, 1, 0], [], []>} : vector<8x4xf32>, vector<8x4xf32>, vector<8x8xf32> -> vector<8x8xf32>
    %cst_23 = arith.constant dense<0xFF800000> : vector<8xf32>
    %72 = vector.multi_reduction <maximumf>, %71, %cst_23 [1] : vector<8x8xf32> to vector<8xf32>
    %73 = vector.shape_cast %72 : vector<8xf32> to vector<8x1xf32>
    %74 = vector.broadcast %73 : vector<8x1xf32> to vector<8x8xf32>
    %75 = arith.subf %71, %74 : vector<8x8xf32>
    %76 = math.exp %75 : vector<8x8xf32>
    %cst_24 = arith.constant dense<0.000000e+00> : vector<8xf32>
    %77 = vector.multi_reduction <add>, %76, %cst_24 [1] : vector<8x8xf32> to vector<8xf32>
    %78 = vector.shape_cast %77 : vector<8xf32> to vector<8x1xf32>
    %cst_25 = arith.constant dense<0.000000e+00> : vector<8x4xf32>
    %79 = tpu.matmul %76, %70, %cst_25 {dimension_numbers = #tpu.dot_dimension_numbers<[1], [0], [0], [1], [0, 0, 1, 1], [], []>} : vector<8x8xf32>, vector<8x4xf32>, vector<8x4xf32> -> vector<8x4xf32>
    %80 = tpu.reciprocal %78 : vector<8x1xf32> -> vector<8x1xf32>
    %81 = vector.broadcast %80 : vector<8x1xf32> to vector<8x4xf32>
    %82 = arith.mulf %79, %81 : vector<8x4xf32>
    %83 = vector.extract_strided_slice %5 {offsets = [0, 20], sizes = [8, 4], strides = [1, 1]} : vector<8x32xf32> to vector<8x4xf32>
    %84 = vector.extract_strided_slice %6 {offsets = [0, 20], sizes = [8, 4], strides = [1, 1]} : vector<8x32xf32> to vector<8x4xf32>
    %85 = vector.extract_strided_slice %7 {offsets = [0, 20], sizes = [8, 4], strides = [1, 1]} : vector<8x32xf32> to vector<8x4xf32>
    %cst_26 = arith.constant dense<0.000000e+00> : vector<8x8xf32>
    %86 = tpu.matmul %83, %84, %cst_26 {dimension_numbers = #tpu.dot_dimension_numbers<[1], [1], [0], [0], [0, 0, 1, 0], [], []>} : vector<8x4xf32>, vector<8x4xf32>, vector<8x8xf32> -> vector<8x8xf32>
    %cst_27 = arith.constant dense<0xFF800000> : vector<8xf32>
    %87 = vector.multi_reduction <maximumf>, %86, %cst_27 [1] : vector<8x8xf32> to vector<8xf32>
    %88 = vector.shape_cast %87 : vector<8xf32> to vector<8x1xf32>
    %89 = vector.broadcast %88 : vector<8x1xf32> to vector<8x8xf32>
    %90 = arith.subf %86, %89 : vector<8x8xf32>
    %91 = math.exp %90 : vector<8x8xf32>
    %cst_28 = arith.constant dense<0.000000e+00> : vector<8xf32>
    %92 = vector.multi_reduction <add>, %91, %cst_28 [1] : vector<8x8xf32> to vector<8xf32>
    %93 = vector.shape_cast %92 : vector<8xf32> to vector<8x1xf32>
    %cst_29 = arith.constant dense<0.000000e+00> : vector<8x4xf32>
    %94 = tpu.matmul %91, %85, %cst_29 {dimension_numbers = #tpu.dot_dimension_numbers<[1], [0], [0], [1], [0, 0, 1, 1], [], []>} : vector<8x8xf32>, vector<8x4xf32>, vector<8x4xf32> -> vector<8x4xf32>
    %95 = tpu.reciprocal %93 : vector<8x1xf32> -> vector<8x1xf32>
    %96 = vector.broadcast %95 : vector<8x1xf32> to vector<8x4xf32>
    %97 = arith.mulf %94, %96 : vector<8x4xf32>
    %98 = vector.extract_strided_slice %5 {offsets = [0, 24], sizes = [8, 4], strides = [1, 1]} : vector<8x32xf32> to vector<8x4xf32>
    %99 = vector.extract_strided_slice %6 {offsets = [0, 24], sizes = [8, 4], strides = [1, 1]} : vector<8x32xf32> to vector<8x4xf32>
    %100 = vector.extract_strided_slice %7 {offsets = [0, 24], sizes = [8, 4], strides = [1, 1]} : vector<8x32xf32> to vector<8x4xf32>
    %cst_30 = arith.constant dense<0.000000e+00> : vector<8x8xf32>
    %101 = tpu.matmul %98, %99, %cst_30 {dimension_numbers = #tpu.dot_dimension_numbers<[1], [1], [0], [0], [0, 0, 1, 0], [], []>} : vector<8x4xf32>, vector<8x4xf32>, vector<8x8xf32> -> vector<8x8xf32>
    %cst_31 = arith.constant dense<0xFF800000> : vector<8xf32>
    %102 = vector.multi_reduction <maximumf>, %101, %cst_31 [1] : vector<8x8xf32> to vector<8xf32>
    %103 = vector.shape_cast %102 : vector<8xf32> to vector<8x1xf32>
    %104 = vector.broadcast %103 : vector<8x1xf32> to vector<8x8xf32>
    %105 = arith.subf %101, %104 : vector<8x8xf32>
    %106 = math.exp %105 : vector<8x8xf32>
    %cst_32 = arith.constant dense<0.000000e+00> : vector<8xf32>
    %107 = vector.multi_reduction <add>, %106, %cst_32 [1] : vector<8x8xf32> to vector<8xf32>
    %108 = vector.shape_cast %107 : vector<8xf32> to vector<8x1xf32>
    %cst_33 = arith.constant dense<0.000000e+00> : vector<8x4xf32>
    %109 = tpu.matmul %106, %100, %cst_33 {dimension_numbers = #tpu.dot_dimension_numbers<[1], [0], [0], [1], [0, 0, 1, 1], [], []>} : vector<8x8xf32>, vector<8x4xf32>, vector<8x4xf32> -> vector<8x4xf32>
    %110 = tpu.reciprocal %108 : vector<8x1xf32> -> vector<8x1xf32>
    %111 = vector.broadcast %110 : vector<8x1xf32> to vector<8x4xf32>
    %112 = arith.mulf %109, %111 : vector<8x4xf32>
    %113 = vector.extract_strided_slice %5 {offsets = [0, 28], sizes = [8, 4], strides = [1, 1]} : vector<8x32xf32> to vector<8x4xf32>
    %114 = vector.extract_strided_slice %6 {offsets = [0, 28], sizes = [8, 4], strides = [1, 1]} : vector<8x32xf32> to vector<8x4xf32>
    %115 = vector.extract_strided_slice %7 {offsets = [0, 28], sizes = [8, 4], strides = [1, 1]} : vector<8x32xf32> to vector<8x4xf32>
    %cst_34 = arith.constant dense<0.000000e+00> : vector<8x8xf32>
    %116 = tpu.matmul %113, %114, %cst_34 {dimension_numbers = #tpu.dot_dimension_numbers<[1], [1], [0], [0], [0, 0, 1, 0], [], []>} : vector<8x4xf32>, vector<8x4xf32>, vector<8x8xf32> -> vector<8x8xf32>
    %cst_35 = arith.constant dense<0xFF800000> : vector<8xf32>
    %117 = vector.multi_reduction <maximumf>, %116, %cst_35 [1] : vector<8x8xf32> to vector<8xf32>
    %118 = vector.shape_cast %117 : vector<8xf32> to vector<8x1xf32>
    %119 = vector.broadcast %118 : vector<8x1xf32> to vector<8x8xf32>
    %120 = arith.subf %116, %119 : vector<8x8xf32>
    %121 = math.exp %120 : vector<8x8xf32>
    %cst_36 = arith.constant dense<0.000000e+00> : vector<8xf32>
    %122 = vector.multi_reduction <add>, %121, %cst_36 [1] : vector<8x8xf32> to vector<8xf32>
    %123 = vector.shape_cast %122 : vector<8xf32> to vector<8x1xf32>
    %cst_37 = arith.constant dense<0.000000e+00> : vector<8x4xf32>
    %124 = tpu.matmul %121, %115, %cst_37 {dimension_numbers = #tpu.dot_dimension_numbers<[1], [0], [0], [1], [0, 0, 1, 1], [], []>} : vector<8x8xf32>, vector<8x4xf32>, vector<8x4xf32> -> vector<8x4xf32>
    %125 = tpu.reciprocal %123 : vector<8x1xf32> -> vector<8x1xf32>
    %126 = vector.broadcast %125 : vector<8x1xf32> to vector<8x4xf32>
    %127 = arith.mulf %124, %126 : vector<8x4xf32>
    %128 = tpu.concatenate %22, %37, %52, %67, %82, %97, %112, %127 in 1 : vector<8x4xf32>, vector<8x4xf32>, vector<8x4xf32>, vector<8x4xf32>, vector<8x4xf32>, vector<8x4xf32>, vector<8x4xf32>, vector<8x4xf32> -> vector<8x32xf32>
    %c0_38 = arith.constant 0 : index
    %c0_39 = arith.constant 0 : index
    %129 = vector.load %arg6[%c0_38, %c0_39] : memref<8x32xf32, #tpu.memory_space<vmem>>, vector<8x32xf32>
    tpu.vector_store %arg6[%c0_38, %c0_39], %128 {strides = array<i32>} : memref<8x32xf32, #tpu.memory_space<vmem>>, vector<8x32xf32>,
    %c0_40 = arith.constant 0 : index
    %c0_41 = arith.constant 0 : index
    %130 = vector.load %arg6[%c0_40, %c0_41] : memref<8x32xf32, #tpu.memory_space<vmem>>, vector<8x32xf32>
    %cst_42 = arith.constant dense<0.000000e+00> : vector<8x32xf32>
    %131 = tpu.matmul %130, %3, %cst_42 {dimension_numbers = #tpu.dot_dimension_numbers<[1], [0], [0], [1], [0, 0, 1, 1], [], []>} : vector<8x32xf32>, vector<32x32xf32>, vector<8x32xf32> -> vector<8x32xf32>
    %c0_43 = arith.constant 0 : index
    %c0_44 = arith.constant 0 : index
    %132 = vector.load %arg4[%c0_43, %c0_44] : memref<1x32xf32, #tpu.memory_space<vmem>>, vector<1x32xf32>
    %133 = vector.broadcast %132 : vector<1x32xf32> to vector<8x32xf32>
    %134 = arith.addf %131, %133 : vector<8x32xf32>
    %c0_45 = arith.constant 0 : index
    %c0_46 = arith.constant 0 : index
    %c0_47 = arith.constant 0 : index
    %135 = vector.load %arg5[%c0_45, %c0_46, %c0_47] : memref<1x8x32xf32, #tpu.memory_space<vmem>>, vector<1x8x32xf32>
    %136 = vector.shape_cast %135 : vector<1x8x32xf32> to vector<8x32xf32>
    %137 = vector.shape_cast %134 : vector<8x32xf32> to vector<1x8x32xf32>
    tpu.vector_store %arg5[%c0_45, %c0_46, %c0_47], %137 {strides = array<i32>} : memref<1x8x32xf32, #tpu.memory_space<vmem>>, vector<1x8x32xf32>,
    return
  }
  func.func @transform_0(%arg0: i32) -> (i32, i32, i32) {
    %c0_i32 = arith.constant 0 : i32
    %c0_i32_0 = arith.constant 0 : i32
    %c0_i32_1 = arith.constant 0 : i32
    return %arg0, %c0_i32, %c0_i32_0 : i32, i32, i32
  }
  func.func @transform_1(%arg0: i32) -> (i32, i32) {
    %c0_i32 = arith.constant 0 : i32
    %c0_i32_0 = arith.constant 0 : i32
    %c0_i32_1 = arith.constant 0 : i32
    return %c0_i32, %c0_i32_0 : i32, i32
  }
  func.func @transform_2(%arg0: i32) -> (i32, i32) {
    %c0_i32 = arith.constant 0 : i32
    %c0_i32_0 = arith.constant 0 : i32
    %c0_i32_1 = arith.constant 0 : i32
    return %c0_i32, %c0_i32_0 : i32, i32
  }
  func.func @transform_3(%arg0: i32) -> (i32, i32) {
    %c0_i32 = arith.constant 0 : i32
    %c0_i32_0 = arith.constant 0 : i32
    %c0_i32_1 = arith.constant 0 : i32
    return %c0_i32, %c0_i32_0 : i32, i32
  }
  func.func @transform_4(%arg0: i32) -> (i32, i32, i32) {
    %c0_i32 = arith.constant 0 : i32
    %c0_i32_0 = arith.constant 0 : i32
    %c0_i32_1 = arith.constant 0 : i32
    return %arg0, %c0_i32, %c0_i32_0 : i32, i32, i32
  }
}

module attributes {stable_mosaic.version = 11 : i64} {
  func.func @_attn_kernel(%arg0: i32, %arg1: memref<1x8x32xf32, #tpu.memory_space<vmem>>, %arg2: memref<32x96xf32, #tpu.memory_space<vmem>>, %arg3: memref<32x32xf32, #tpu.memory_space<vmem>>, %arg4: memref<1x32xf32, #tpu.memory_space<vmem>>, %arg5: memref<1x8x32xf32, #tpu.memory_space<vmem>>, %arg6: memref<8x32xf32, #tpu.memory_space<vmem>>) attributes {dimension_semantics = [#tpu.dimension_semantics<parallel>], iteration_bounds = array<i64: 2>, scalar_prefetch = 0 : i64, scratch_operands = 1 : i64, tpu.core_type = #tpu.core_type<tc>, window_params = [{transform_indices = @transform_0, window_bounds = array<i64: 1, 8, 32>}, {pipeline_mode = #tpu.pipeline_mode<synchronous>, transform_indices = @transform_1, window_bounds = array<i64: 32, 96>}, {pipeline_mode = #tpu.pipeline_mode<synchronous>, transform_indices = @transform_2, window_bounds = array<i64: 32, 32>}, {pipeline_mode = #tpu.pipeline_mode<synchronous>, transform_indices = @transform_3, window_bounds = array<i64: 1, 32>}, {transform_indices = @transform_4, window_bounds = array<i64: 1, 8, 32>}]} {
    %c0 = arith.constant 0 : index
    %c0_0 = arith.constant 0 : index
    %c0_1 = arith.constant 0 : index
    %0 = vector.load %arg1[%c0, %c0_0, %c0_1] : memref<1x8x32xf32, #tpu.memory_space<vmem>>, vector<1x8x32xf32>
    %1 = vector.shape_cast %0 : vector<1x8x32xf32> to vector<8x32xf32>
    %c0_2 = arith.constant 0 : index
    %c0_3 = arith.constant 0 : index
    %2 = vector.load %arg2[%c0_2, %c0_3] : memref<32x96xf32, #tpu.memory_space<vmem>>, vector<32x96xf32>
    %c0_4 = arith.constant 0 : index
    %c0_5 = arith.constant 0 : index
    %3 = vector.load %arg3[%c0_4, %c0_5] : memref<32x32xf32, #tpu.memory_space<vmem>>, vector<32x32xf32>
    %cst = arith.constant dense<0.000000e+00> : vector<8x96xf32>
    %4 = tpu.matmul %1, %2, %cst {dimension_numbers = #tpu.dot_dimension_numbers<[1], [0], [0], [1], [0, 0, 1, 1], [], []>} : vector<8x32xf32>, vector<32x96xf32>, vector<8x96xf32> -> vector<8x96xf32>
    %5 = vector.extract_strided_slice %4 {offsets = [0, 0], sizes = [8, 32], strides = [1, 1]} : vector<8x96xf32> to vector<8x32xf32>
    %6 = vector.extract_strided_slice %4 {offsets = [0, 32], sizes = [8, 32], strides = [1, 1]} : vector<8x96xf32> to vector<8x32xf32>
    %7 = vector.extract_strided_slice %4 {offsets = [0, 64], sizes = [8, 32], strides = [1, 1]} : vector<8x96xf32> to vector<8x32xf32>
    %8 = vector.extract_strided_slice %5 {offsets = [0, 0], sizes = [8, 4], strides = [1, 1]} : vector<8x32xf32> to vector<8x4xf32>
    %9 = vector.extract_strided_slice %6 {offsets = [0, 0], sizes = [8, 4], strides = [1, 1]} : vector<8x32xf32> to vector<8x4xf32>
    %10 = vector.extract_strided_slice %7 {offsets = [0, 0], sizes = [8, 4], strides = [1, 1]} : vector<8x32xf32> to vector<8x4xf32>
    %cst_6 = arith.constant dense<0.000000e+00> : vector<8x8xf32>
    %11 = tpu.matmul %8, %9, %cst_6 {dimension_numbers = #tpu.dot_dimension_numbers<[1], [1], [0], [0], [0, 0, 1, 0], [], []>} : vector<8x4xf32>, vector<8x4xf32>, vector<8x8xf32> -> vector<8x8xf32>
    %cst_7 = arith.constant dense<0xFF800000> : vector<8xf32>
    %12 = vector.multi_reduction <maximumf>, %11, %cst_7 [1] : vector<8x8xf32> to vector<8xf32>
    %13 = vector.shape_cast %12 : vector<8xf32> to vector<8x1xf32>
    %14 = vector.broadcast %13 : vector<8x1xf32> to vector<8x8xf32>
    %15 = arith.subf %11, %14 : vector<8x8xf32>
    %16 = math.exp %15 : vector<8x8xf32>
    %cst_8 = arith.constant dense<0.000000e+00> : vector<8xf32>
    %17 = vector.multi_reduction <add>, %16, %cst_8 [1] : vector<8x8xf32> to vector<8xf32>
    %18 = vector.shape_cast %17 : vector<8xf32> to vector<8x1xf32>
    %cst_9 = arith.constant dense<0.000000e+00> : vector<8x4xf32>
    %19 = tpu.matmul %16, %10, %cst_9 {dimension_numbers = #tpu.dot_dimension_numbers<[1], [0], [0], [1], [0, 0, 1, 1], [], []>} : vector<8x8xf32>, vector<8x4xf32>, vector<8x4xf32> -> vector<8x4xf32>
    %20 = tpu.reciprocal %18 : vector<8x1xf32> -> vector<8x1xf32>
    %21 = vector.broadcast %20 : vector<8x1xf32> to vector<8x4xf32>
    %22 = arith.mulf %19, %21 : vector<8x4xf32>
    %23 = vector.extract_strided_slice %5 {offsets = [0, 4], sizes = [8, 4], strides = [1, 1]} : vector<8x32xf32> to vector<8x4xf32>
    %24 = vector.extract_strided_slice %6 {offsets = [0, 4], sizes = [8, 4], strides = [1, 1]} : vector<8x32xf32> to vector<8x4xf32>
    %25 = vector.extract_strided_slice %7 {offsets = [0, 4], sizes = [8, 4], strides = [1, 1]} : vector<8x32xf32> to vector<8x4xf32>
    %cst_10 = arith.constant dense<0.000000e+00> : vector<8x8xf32>
    %26 = tpu.matmul %23, %24, %cst_10 {dimension_numbers = #tpu.dot_dimension_numbers<[1], [1], [0], [0], [0, 0, 1, 0], [], []>} : vector<8x4xf32>, vector<8x4xf32>, vector<8x8xf32> -> vector<8x8xf32>
    %cst_11 = arith.constant dense<0xFF800000> : vector<8xf32>
    %27 = vector.multi_reduction <maximumf>, %26, %cst_11 [1] : vector<8x8xf32> to vector<8xf32>
    %28 = vector.shape_cast %27 : vector<8xf32> to vector<8x1xf32>
    %29 = vector.broadcast %28 : vector<8x1xf32> to vector<8x8xf32>
    %30 = arith.subf %26, %29 : vector<8x8xf32>
    %31 = math.exp %30 : vector<8x8xf32>
    %cst_12 = arith.constant dense<0.000000e+00> : vector<8xf32>
    %32 = vector.multi_reduction <add>, %31, %cst_12 [1] : vector<8x8xf32> to vector<8xf32>
    %33 = vector.shape_cast %32 : vector<8xf32> to vector<8x1xf32>
    %cst_13 = arith.constant dense<0.000000e+00> : vector<8x4xf32>
    %34 = tpu.matmul %31, %25, %cst_13 {dimension_numbers = #tpu.dot_dimension_numbers<[1], [0], [0], [1], [0, 0, 1, 1], [], []>} : vector<8x8xf32>, vector<8x4xf32>, vector<8x4xf32> -> vector<8x4xf32>
    %35 = tpu.reciprocal %33 : vector<8x1xf32> -> vector<8x1xf32>
    %36 = vector.broadcast %35 : vector<8x1xf32> to vector<8x4xf32>
    %37 = arith.mulf %34, %36 : vector<8x4xf32>
    %38 = vector.extract_strided_slice %5 {offsets = [0, 8], sizes = [8, 4], strides = [1, 1]} : vector<8x32xf32> to vector<8x4xf32>
    %39 = vector.extract_strided_slice %6 {offsets = [0, 8], sizes = [8, 4], strides = [1, 1]} : vector<8x32xf32> to vector<8x4xf32>
    %40 = vector.extract_strided_slice %7 {offsets = [0, 8], sizes = [8, 4], strides = [1, 1]} : vector<8x32xf32> to vector<8x4xf32>
    %cst_14 = arith.constant dense<0.000000e+00> : vector<8x8xf32>
    %41 = tpu.matmul %38, %39, %cst_14 {dimension_numbers = #tpu.dot_dimension_numbers<[1], [1], [0], [0], [0, 0, 1, 0], [], []>} : vector<8x4xf32>, vector<8x4xf32>, vector<8x8xf32> -> vector<8x8xf32>
    %cst_15 = arith.constant dense<0xFF800000> : vector<8xf32>
    %42 = vector.multi_reduction <maximumf>, %41, %cst_15 [1] : vector<8x8xf32> to vector<8xf32>
    %43 = vector.shape_cast %42 : vector<8xf32> to vector<8x1xf32>
    %44 = vector.broadcast %43 : vector<8x1xf32> to vector<8x8xf32>
    %45 = arith.subf %41, %44 : vector<8x8xf32>
    %46 = math.exp %45 : vector<8x8xf32>
    %cst_16 = arith.constant dense<0.000000e+00> : vector<8xf32>
    %47 = vector.multi_reduction <add>, %46, %cst_16 [1] : vector<8x8xf32> to vector<8xf32>
    %48 = vector.shape_cast %47 : vector<8xf32> to vector<8x1xf32>
    %cst_17 = arith.constant dense<0.000000e+00> : vector<8x4xf32>
    %49 = tpu.matmul %46, %40, %cst_17 {dimension_numbers = #tpu.dot_dimension_numbers<[1], [0], [0], [1], [0, 0, 1, 1], [], []>} : vector<8x8xf32>, vector<8x4xf32>, vector<8x4xf32> -> vector<8x4xf32>
    %50 = tpu.reciprocal %48 : vector<8x1xf32> -> vector<8x1xf32>
    %51 = vector.broadcast %50 : vector<8x1xf32> to vector<8x4xf32>
    %52 = arith.mulf %49, %51 : vector<8x4xf32>
    %53 = vector.extract_strided_slice %5 {offsets = [0, 12], sizes = [8, 4], strides = [1, 1]} : vector<8x32xf32> to vector<8x4xf32>
    %54 = vector.extract_strided_slice %6 {offsets = [0, 12], sizes = [8, 4], strides = [1, 1]} : vector<8x32xf32> to vector<8x4xf32>
    %55 = vector.extract_strided_slice %7 {offsets = [0, 12], sizes = [8, 4], strides = [1, 1]} : vector<8x32xf32> to vector<8x4xf32>
    %cst_18 = arith.constant dense<0.000000e+00> : vector<8x8xf32>
    %56 = tpu.matmul %53, %54, %cst_18 {dimension_numbers = #tpu.dot_dimension_numbers<[1], [1], [0], [0], [0, 0, 1, 0], [], []>} : vector<8x4xf32>, vector<8x4xf32>, vector<8x8xf32> -> vector<8x8xf32>
    %cst_19 = arith.constant dense<0xFF800000> : vector<8xf32>
    %57 = vector.multi_reduction <maximumf>, %56, %cst_19 [1] : vector<8x8xf32> to vector<8xf32>
    %58 = vector.shape_cast %57 : vector<8xf32> to vector<8x1xf32>
    %59 = vector.broadcast %58 : vector<8x1xf32> to vector<8x8xf32>
    %60 = arith.subf %56, %59 : vector<8x8xf32>
    %61 = math.exp %60 : vector<8x8xf32>
    %cst_20 = arith.constant dense<0.000000e+00> : vector<8xf32>
    %62 = vector.multi_reduction <add>, %61, %cst_20 [1] : vector<8x8xf32> to vector<8xf32>
    %63 = vector.shape_cast %62 : vector<8xf32> to vector<8x1xf32>
    %cst_21 = arith.constant dense<0.000000e+00> : vector<8x4xf32>
    %64 = tpu.matmul %61, %55, %cst_21 {dimension_numbers = #tpu.dot_dimension_numbers<[1], [0], [0], [1], [0, 0, 1, 1], [], []>} : vector<8x8xf32>, vector<8x4xf32>, vector<8x4xf32> -> vector<8x4xf32>
    %65 = tpu.reciprocal %63 : vector<8x1xf32> -> vector<8x1xf32>
    %66 = vector.broadcast %65 : vector<8x1xf32> to vector<8x4xf32>
    %67 = arith.mulf %64, %66 : vector<8x4xf32>
    %68 = vector.extract_strided_slice %5 {offsets = [0, 16], sizes = [8, 4], strides = [1, 1]} : vector<8x32xf32> to vector<8x4xf32>
    %69 = vector.extract_strided_slice %6 {offsets = [0, 16], sizes = [8, 4], strides = [1, 1]} : vector<8x32xf32> to vector<8x4xf32>
    %70 = vector.extract_strided_slice %7 {offsets = [0, 16], sizes = [8, 4], strides = [1, 1]} : vector<8x32xf32> to vector<8x4xf32>
    %cst_22 = arith.constant dense<0.000000e+00> : vector<8x8xf32>
    %71 = tpu.matmul %68, %69, %cst_22 {dimension_numbers = #tpu.dot_dimension_numbers<[1], [1], [0], [0], [0, 0, 1, 0], [], []>} : vector<8x4xf32>, vector<8x4xf32>, vector<8x8xf32> -> vector<8x8xf32>
    %cst_23 = arith.constant dense<0xFF800000> : vector<8xf32>
    %72 = vector.multi_reduction <maximumf>, %71, %cst_23 [1] : vector<8x8xf32> to vector<8xf32>
    %73 = vector.shape_cast %72 : vector<8xf32> to vector<8x1xf32>
    %74 = vector.broadcast %73 : vector<8x1xf32> to vector<8x8xf32>
    %75 = arith.subf %71, %74 : vector<8x8xf32>
    %76 = math.exp %75 : vector<8x8xf32>
    %cst_24 = arith.constant dense<0.000000e+00> : vector<8xf32>
    %77 = vector.multi_reduction <add>, %76, %cst_24 [1] : vector<8x8xf32> to vector<8xf32>
    %78 = vector.shape_cast %77 : vector<8xf32> to vector<8x1xf32>
    %cst_25 = arith.constant dense<0.000000e+00> : vector<8x4xf32>
    %79 = tpu.matmul %76, %70, %cst_25 {dimension_numbers = #tpu.dot_dimension_numbers<[1], [0], [0], [1], [0, 0, 1, 1], [], []>} : vector<8x8xf32>, vector<8x4xf32>, vector<8x4xf32> -> vector<8x4xf32>
    %80 = tpu.reciprocal %78 : vector<8x1xf32> -> vector<8x1xf32>
    %81 = vector.broadcast %80 : vector<8x1xf32> to vector<8x4xf32>
    %82 = arith.mulf %79, %81 : vector<8x4xf32>
    %83 = vector.extract_strided_slice %5 {offsets = [0, 20], sizes = [8, 4], strides = [1, 1]} : vector<8x32xf32> to vector<8x4xf32>
    %84 = vector.extract_strided_slice %6 {offsets = [0, 20], sizes = [8, 4], strides = [1, 1]} : vector<8x32xf32> to vector<8x4xf32>
    %85 = vector.extract_strided_slice %7 {offsets = [0, 20], sizes = [8, 4], strides = [1, 1]} : vector<8x32xf32> to vector<8x4xf32>
    %cst_26 = arith.constant dense<0.000000e+00> : vector<8x8xf32>
    %86 = tpu.matmul %83, %84, %cst_26 {dimension_numbers = #tpu.dot_dimension_numbers<[1], [1], [0], [0], [0, 0, 1, 0], [], []>} : vector<8x4xf32>, vector<8x4xf32>, vector<8x8xf32> -> vector<8x8xf32>
    %cst_27 = arith.constant dense<0xFF800000> : vector<8xf32>
    %87 = vector.multi_reduction <maximumf>, %86, %cst_27 [1] : vector<8x8xf32> to vector<8xf32>
    %88 = vector.shape_cast %87 : vector<8xf32> to vector<8x1xf32>
    %89 = vector.broadcast %88 : vector<8x1xf32> to vector<8x8xf32>
    %90 = arith.subf %86, %89 : vector<8x8xf32>
    %91 = math.exp %90 : vector<8x8xf32>
    %cst_28 = arith.constant dense<0.000000e+00> : vector<8xf32>
    %92 = vector.multi_reduction <add>, %91, %cst_28 [1] : vector<8x8xf32> to vector<8xf32>
    %93 = vector.shape_cast %92 : vector<8xf32> to vector<8x1xf32>
    %cst_29 = arith.constant dense<0.000000e+00> : vector<8x4xf32>
    %94 = tpu.matmul %91, %85, %cst_29 {dimension_numbers = #tpu.dot_dimension_numbers<[1], [0], [0], [1], [0, 0, 1, 1], [], []>} : vector<8x8xf32>, vector<8x4xf32>, vector<8x4xf32> -> vector<8x4xf32>
    %95 = tpu.reciprocal %93 : vector<8x1xf32> -> vector<8x1xf32>
    %96 = vector.broadcast %95 : vector<8x1xf32> to vector<8x4xf32>
    %97 = arith.mulf %94, %96 : vector<8x4xf32>
    %98 = vector.extract_strided_slice %5 {offsets = [0, 24], sizes = [8, 4], strides = [1, 1]} : vector<8x32xf32> to vector<8x4xf32>
    %99 = vector.extract_strided_slice %6 {offsets = [0, 24], sizes = [8, 4], strides = [1, 1]} : vector<8x32xf32> to vector<8x4xf32>
    %100 = vector.extract_strided_slice %7 {offsets = [0, 24], sizes = [8, 4], strides = [1, 1]} : vector<8x32xf32> to vector<8x4xf32>
    %cst_30 = arith.constant dense<0.000000e+00> : vector<8x8xf32>
    %101 = tpu.matmul %98, %99, %cst_30 {dimension_numbers = #tpu.dot_dimension_numbers<[1], [1], [0], [0], [0, 0, 1, 0], [], []>} : vector<8x4xf32>, vector<8x4xf32>, vector<8x8xf32> -> vector<8x8xf32>
    %cst_31 = arith.constant dense<0xFF800000> : vector<8xf32>
    %102 = vector.multi_reduction <maximumf>, %101, %cst_31 [1] : vector<8x8xf32> to vector<8xf32>
    %103 = vector.shape_cast %102 : vector<8xf32> to vector<8x1xf32>
    %104 = vector.broadcast %103 : vector<8x1xf32> to vector<8x8xf32>
    %105 = arith.subf %101, %104 : vector<8x8xf32>
    %106 = math.exp %105 : vector<8x8xf32>
    %cst_32 = arith.constant dense<0.000000e+00> : vector<8xf32>
    %107 = vector.multi_reduction <add>, %106, %cst_32 [1] : vector<8x8xf32> to vector<8xf32>
    %108 = vector.shape_cast %107 : vector<8xf32> to vector<8x1xf32>
    %cst_33 = arith.constant dense<0.000000e+00> : vector<8x4xf32>
    %109 = tpu.matmul %106, %100, %cst_33 {dimension_numbers = #tpu.dot_dimension_numbers<[1], [0], [0], [1], [0, 0, 1, 1], [], []>} : vector<8x8xf32>, vector<8x4xf32>, vector<8x4xf32> -> vector<8x4xf32>
    %110 = tpu.reciprocal %108 : vector<8x1xf32> -> vector<8x1xf32>
    %111 = vector.broadcast %110 : vector<8x1xf32> to vector<8x4xf32>
    %112 = arith.mulf %109, %111 : vector<8x4xf32>
    %113 = vector.extract_strided_slice %5 {offsets = [0, 28], sizes = [8, 4], strides = [1, 1]} : vector<8x32xf32> to vector<8x4xf32>
    %114 = vector.extract_strided_slice %6 {offsets = [0, 28], sizes = [8, 4], strides = [1, 1]} : vector<8x32xf32> to vector<8x4xf32>
    %115 = vector.extract_strided_slice %7 {offsets = [0, 28], sizes = [8, 4], strides = [1, 1]} : vector<8x32xf32> to vector<8x4xf32>
    %cst_34 = arith.constant dense<0.000000e+00> : vector<8x8xf32>
    %116 = tpu.matmul %113, %114, %cst_34 {dimension_numbers = #tpu.dot_dimension_numbers<[1], [1], [0], [0], [0, 0, 1, 0], [], []>} : vector<8x4xf32>, vector<8x4xf32>, vector<8x8xf32> -> vector<8x8xf32>
    %cst_35 = arith.constant dense<0xFF800000> : vector<8xf32>
    %117 = vector.multi_reduction <maximumf>, %116, %cst_35 [1] : vector<8x8xf32> to vector<8xf32>
    %118 = vector.shape_cast %117 : vector<8xf32> to vector<8x1xf32>
    %119 = vector.broadcast %118 : vector<8x1xf32> to vector<8x8xf32>
    %120 = arith.subf %116, %119 : vector<8x8xf32>
    %121 = math.exp %120 : vector<8x8xf32>
    %cst_36 = arith.constant dense<0.000000e+00> : vector<8xf32>
    %122 = vector.multi_reduction <add>, %121, %cst_36 [1] : vector<8x8xf32> to vector<8xf32>
    %123 = vector.shape_cast %122 : vector<8xf32> to vector<8x1xf32>
    %cst_37 = arith.constant dense<0.000000e+00> : vector<8x4xf32>
    %124 = tpu.matmul %121, %115, %cst_37 {dimension_numbers = #tpu.dot_dimension_numbers<[1], [0], [0], [1], [0, 0, 1, 1], [], []>} : vector<8x8xf32>, vector<8x4xf32>, vector<8x4xf32> -> vector<8x4xf32>
    %125 = tpu.reciprocal %123 : vector<8x1xf32> -> vector<8x1xf32>
    %126 = vector.broadcast %125 : vector<8x1xf32> to vector<8x4xf32>
    %127 = arith.mulf %124, %126 : vector<8x4xf32>
    %128 = tpu.concatenate %22, %37, %52, %67, %82, %97, %112, %127 in 1 : vector<8x4xf32>, vector<8x4xf32>, vector<8x4xf32>, vector<8x4xf32>, vector<8x4xf32>, vector<8x4xf32>, vector<8x4xf32>, vector<8x4xf32> -> vector<8x32xf32>
    %c0_38 = arith.constant 0 : index
    %c0_39 = arith.constant 0 : index
    %129 = vector.load %arg6[%c0_38, %c0_39] : memref<8x32xf32, #tpu.memory_space<vmem>>, vector<8x32xf32>
    tpu.vector_store %arg6[%c0_38, %c0_39], %128 {strides = array<i32>} : memref<8x32xf32, #tpu.memory_space<vmem>>, vector<8x32xf32>,
    %c0_40 = arith.constant 0 : index
    %c0_41 = arith.constant 0 : index
    %130 = vector.load %arg6[%c0_40, %c0_41] : memref<8x32xf32, #tpu.memory_space<vmem>>, vector<8x32xf32>
    %cst_42 = arith.constant dense<0.000000e+00> : vector<8x32xf32>
    %131 = tpu.matmul %130, %3, %cst_42 {dimension_numbers = #tpu.dot_dimension_numbers<[1], [0], [0], [1], [0, 0, 1, 1], [], []>} : vector<8x32xf32>, vector<32x32xf32>, vector<8x32xf32> -> vector<8x32xf32>
    %c0_43 = arith.constant 0 : index
    %c0_44 = arith.constant 0 : index
    %132 = vector.load %arg4[%c0_43, %c0_44] : memref<1x32xf32, #tpu.memory_space<vmem>>, vector<1x32xf32>
    %133 = vector.broadcast %132 : vector<1x32xf32> to vector<8x32xf32>
    %134 = arith.addf %131, %133 : vector<8x32xf32>
    %c0_45 = arith.constant 0 : index
    %c0_46 = arith.constant 0 : index
    %c0_47 = arith.constant 0 : index
    %135 = vector.load %arg5[%c0_45, %c0_46, %c0_47] : memref<1x8x32xf32, #tpu.memory_space<vmem>>, vector<1x8x32xf32>
    %136 = vector.shape_cast %135 : vector<1x8x32xf32> to vector<8x32xf32>
    %137 = vector.shape_cast %134 : vector<8x32xf32> to vector<1x8x32xf32>
    tpu.vector_store %arg5[%c0_45, %c0_46, %c0_47], %137 {strides = array<i32>} : memref<1x8x32xf32, #tpu.memory_space<vmem>>, vector<1x8x32xf32>,
    return
  }
  func.func @transform_0(%arg0: i32) -> (i32, i32, i32) {
    %c0_i32 = arith.constant 0 : i32
    %c0_i32_0 = arith.constant 0 : i32
    %c0_i32_1 = arith.constant 0 : i32
    return %arg0, %c0_i32, %c0_i32_0 : i32, i32, i32
  }
  func.func @transform_1(%arg0: i32) -> (i32, i32) {
    %c0_i32 = arith.constant 0 : i32
    %c0_i32_0 = arith.constant 0 : i32
    %c0_i32_1 = arith.constant 0 : i32
    return %c0_i32, %c0_i32_0 : i32, i32
  }
  func.func @transform_2(%arg0: i32) -> (i32, i32) {
    %c0_i32 = arith.constant 0 : i32
    %c0_i32_0 = arith.constant 0 : i32
    %c0_i32_1 = arith.constant 0 : i32
    return %c0_i32, %c0_i32_0 : i32, i32
  }
  func.func @transform_3(%arg0: i32) -> (i32, i32) {
    %c0_i32 = arith.constant 0 : i32
    %c0_i32_0 = arith.constant 0 : i32
    %c0_i32_1 = arith.constant 0 : i32
    return %c0_i32, %c0_i32_0 : i32, i32
  }
  func.func @transform_4(%arg0: i32) -> (i32, i32, i32) {
    %c0_i32 = arith.constant 0 : i32
    %c0_i32_0 = arith.constant 0 : i32
    %c0_i32_1 = arith.constant 0 : i32
    return %arg0, %c0_i32, %c0_i32_0 : i32, i32, i32
  }
}

</mosaic_0001>

<llo_original>
// kernel: tpu_custom_call.1
$region0: #{tpu_custom_call.1}
  #allocation0 [shape = 'u32[]', space=smem, size = 0x4, offset = 0x4, fixed_abs, tag = 'smem constant byte address 0x4 - core index']
  #allocation1 [shape = 'u32[144,128]{1,0:T(1,128)}', space=vmem, size = 0x12000, scoped, tag = 'internal scratch']
  #allocation2 [shape = 'f32[8,32]{1,0:T(8,128)}', space=vmem, size = 0x1000, scoped, tag = 'scratch operand']
  %s0 = inlined_call_operand.hbm [shape: f32[2,8,32], index: 0, kind: input, shape index: {}]
  %s1 = inlined_call_operand.hbm [shape: f32[32,96], index: 1, kind: input, shape index: {}]
  %s2 = inlined_call_operand.hbm [shape: f32[32,32], index: 2, kind: input, shape index: {}]
  %s3 = inlined_call_operand.vmem [shape: f32[1,32], index: 3, kind: input, shape index: {}]
  %s4 = inlined_call_operand.hbm [shape: f32[2,8,32], index: 4, kind: output, shape index: {}]
  %s5 = sld [smem:[#allocation0]]
  $region61: #{tpu_custom_call.1} parent=0
    _
  %s7 = ssub.s32 1, %s5
  %s8 = scalar_select 0, %s7, %s5
  $region1: #{tpu_custom_call.1} parent=0
    #allocation3 [shape = 'u8[8192]{0}', space=vmem, size = 0x2000, scoped, tag = 'input window, operand 0']
    #allocation4 [shape = 's32[2]{0}', space=sflag, size = 0x8, scoped, tag = 'scoped memory for tpu_custom_call.1']
    #allocation5 [shape = 's32[2]{0}', space=sflag, size = 0x8, scoped, tag = 'scoped memory for tpu_custom_call.1']
    #allocation6 [shape = 'u8[16384]{0}', space=vmem, size = 0x4000, scoped, tag = 'input window, operand 1, single buffered']
    #allocation7 [shape = 's32[1]{0}', space=sflag, size = 0x4, scoped, tag = 'scoped memory for tpu_custom_call.1']
    #allocation8 [shape = 'u8[16384]{0}', space=vmem, size = 0x4000, scoped, tag = 'input window, operand 2, single buffered']
    #allocation9 [shape = 'u8[8192]{0}', space=vmem, size = 0x2000, scoped, tag = 'output window, operand 0']
    %9 = vsyncpa [#allocation4], 0
    %s10 = scalar_lea.sflag [#allocation4], 1
    %11 = vsyncpa %s10, 0
    %12 = vsyncpa [#allocation7], 0
    %13 = vsyncpa [#allocation5], 0
    %s14 = scalar_lea.sflag [#allocation5], 1
    %15 = vsyncpa %s14, 0
    loop: start=0, step=1, limit=4
    $region2: #{tpu_custom_call.1} parent=1 // loop_pre_header
      _
    $region3: #{tpu_custom_call.1} parent=1 // loop_header
      %s17 = sphi 0, %s21
      %p18 = scmp.ge.s32.totalorder %s17, 4
      %s27 = sphi 0, %s29
      %s30 = sphi 0, %s27
      %s31 = sphi 0, %s30
      %s47 = sphi 0, %s31
      %s51 = sphi 0, %s51
      %s53 = sphi 0, %s51
      %s54 = sphi 0, %s53
      %s68 = sphi 0, %s54
      %s72 = sphi 0, %s72
      %s74 = sphi 0, %s72
      %s75 = sphi 0, %s74
      %s89 = sphi 0, %s75
      %s93 = sphi 0, %s93
      %s95 = sphi 0, %s93
      %s96 = sphi 0, %s95
      %s110 = sphi 0, %s96
      %s116 = sphi 0, %s118
      %s119 = sphi 0, %s116
      %s120 = sphi 0, %s119
      %s136 = sphi 0, %s120
    $region4: #{tpu_custom_call.1} parent=1 // loop_header_branch
      %20 = sbr.rel (%p18) target = $region8
    $region5: #{tpu_custom_call.1} parent=1 // loop_body
      %s22 = ssub.s32 %s17, 1
      %s23 = ssub.s32 %s17, 2
      %s24 = sadd.s32 %s17, 1
      %s25 = ssub.s32 %s17, %s24
      %p26 = scmp.eq.s32.totalorder %s25, 0
      %s28 = sadd.s32 %s27, 1
      %s29 = scalar_select %p26, %s27, %s28
      %p32 = pneg %p26
      %p33 = scmp.eq.s32.totalorder %s17, 1
      %p34 = por %p32, %p33
      %p35 = scmp.ne.s32.totalorder %s27, %s30
      %p36 = scmp.eq.s32.totalorder %s17, 0
      %p37 = por %p35, %p36
      %p38 = scmp.ne.s32.totalorder %s27, %s30
      %p39 = scmp.eq.s32.totalorder %s22, 1
      %p40 = por %p38, %p39
      %p41 = scmp.ne.s32.totalorder %s30, %s31
      %p42 = scmp.eq.s32.totalorder %s22, 0
      %p43 = por %p41, %p42
      %p44 = scmp.ne.s32.totalorder %s30, %s31
      %p45 = scmp.eq.s32.totalorder %s23, 1
      %p46 = por %p44, %p45
      %p48 = scmp.ne.s32.totalorder %s31, %s47
      %p49 = scmp.eq.s32.totalorder %s23, 0
      %p50 = por %p48, %p49
      %s52 = sadd.s32 %s51, 1
      %p55 = scmp.eq.s32.totalorder %s17, 1
      %p56 = scmp.ne.s32.totalorder %s51, %s53
      %p57 = scmp.eq.s32.totalorder %s17, 0
      %p58 = por %p56, %p57
      %p59 = scmp.ne.s32.totalorder %s51, %s53
      %p60 = scmp.eq.s32.totalorder %s22, 1
      %p61 = por %p59, %p60
      %p62 = scmp.ne.s32.totalorder %s53, %s54
      %p63 = scmp.eq.s32.totalorder %s22, 0
      %p64 = por %p62, %p63
      %p65 = scmp.ne.s32.totalorder %s53, %s54
      %p66 = scmp.eq.s32.totalorder %s23, 1
      %p67 = por %p65, %p66
      %p69 = scmp.ne.s32.totalorder %s54, %s68
      %p70 = scmp.eq.s32.totalorder %s23, 0
      %p71 = por %p69, %p70
      %s73 = sadd.s32 %s72, 1
      %p76 = scmp.eq.s32.totalorder %s17, 1
      %p77 = scmp.ne.s32.totalorder %s72, %s74
      %p78 = scmp.eq.s32.totalorder %s17, 0
      %p79 = por %p77, %p78
      %p80 = scmp.ne.s32.totalorder %s72, %s74
      %p81 = scmp.eq.s32.totalorder %s22, 1
      %p82 = por %p80, %p81
      %p83 = scmp.ne.s32.totalorder %s74, %s75
      %p84 = scmp.eq.s32.totalorder %s22, 0
      %p85 = por %p83, %p84
      %p86 = scmp.ne.s32.totalorder %s74, %s75
      %p87 = scmp.eq.s32.totalorder %s23, 1
      %p88 = por %p86, %p87
      %p90 = scmp.ne.s32.totalorder %s75, %s89
      %p91 = scmp.eq.s32.totalorder %s23, 0
      %p92 = por %p90, %p91
      %s94 = sadd.s32 %s93, 1
      %p97 = scmp.eq.s32.totalorder %s17, 1
      %p98 = scmp.ne.s32.totalorder %s93, %s95
      %p99 = scmp.eq.s32.totalorder %s17, 0
      %p100 = por %p98, %p99
      %p101 = scmp.ne.s32.totalorder %s93, %s95
      %p102 = scmp.eq.s32.totalorder %s22, 1
      %p103 = por %p101, %p102
      %p104 = scmp.ne.s32.totalorder %s95, %s96
      %p105 = scmp.eq.s32.totalorder %s22, 0
      %p106 = por %p104, %p105
      %p107 = scmp.ne.s32.totalorder %s95, %s96
      %p108 = scmp.eq.s32.totalorder %s23, 1
      %p109 = por %p107, %p108
      %p111 = scmp.ne.s32.totalorder %s96, %s110
      %p112 = scmp.eq.s32.totalorder %s23, 0
      %p113 = por %p111, %p112
      %s114 = ssub.s32 %s17, %s24
      %p115 = scmp.eq.s32.totalorder %s114, 0
      %s117 = sadd.s32 %s116, 1
      %s118 = scalar_select %p115, %s116, %s117
      %p121 = pneg %p115
      %p122 = scmp.eq.s32.totalorder %s17, 1
      %p123 = por %p121, %p122
      %p124 = scmp.ne.s32.totalorder %s116, %s119
      %p125 = scmp.eq.s32.totalorder %s17, 0
      %p126 = por %p124, %p125
      %p127 = scmp.ne.s32.totalorder %s116, %s119
      %p128 = scmp.eq.s32.totalorder %s22, 1
      %p129 = por %p127, %p128
      %p130 = scmp.ne.s32.totalorder %s119, %s120
      %p131 = scmp.eq.s32.totalorder %s22, 0
      %p132 = por %p130, %p131
      %p133 = scmp.ne.s32.totalorder %s119, %s120
      %p134 = scmp.eq.s32.totalorder %s23, 1
      %p135 = por %p133, %p134
      %p137 = scmp.ne.s32.totalorder %s120, %s136
      %p138 = scmp.eq.s32.totalorder %s23, 0
      %p139 = por %p137, %p138
      %p140 = scmp.le.s32.totalorder 1, %s17
      %p141 = scmp.lt.s32.totalorder %s17, 3
      %p142 = pnand %p140, %p141
      %p143 = pneg %p142
      // Predicated region
      $region9: #{tpu_custom_call.1} parent=5 // pred_check
        _
      $region10: #{tpu_custom_call.1} parent=5 // pred_check_branch
        %145 = sbr.rel (%p142) target = $region12
      $region11: #{tpu_custom_call.1} parent=5 // pred_region
        %s146 = ssub.s32 %s17, 1
        // Predicated region
        $region13: #{tpu_custom_call.1} parent=11 // pred_check
          %p147 = pneg %p64
        $region14: #{tpu_custom_call.1} parent=11 // pred_check_branch
          %149 = sbr.rel (%p147) target = $region16
        $region15: #{tpu_custom_call.1} parent=11 // pred_region
          %s151 = ssub.s32 512, 512
          %152 = vsyncadd [#allocation7], %s151
          %s153 = sshll.u32 [#allocation6], 4
          %s154 = int_to_ptr.vmem [resolvable:$true] %s153
          %159 = dma.hbm_to_vmem [thread:$0]  %s1, 512, %s154, [#allocation7], 128, 128, 8
        $region16: #{tpu_custom_call.1} parent=11 // pred_fallthru
          _
        // Predicated region
        $region17: #{tpu_custom_call.1} parent=11 // pred_check
          %p160 = pneg %p85
        $region18: #{tpu_custom_call.1} parent=11 // pred_check_branch
          %162 = sbr.rel (%p160) target = $region20
        $region19: #{tpu_custom_call.1} parent=11 // pred_region
          %s164 = ssub.s32 512, 512
          %165 = vsyncadd [#allocation7], %s164
          %s166 = sshll.u32 [#allocation8], 4
          %s167 = int_to_ptr.vmem [resolvable:$true] %s166
          %172 = dma.hbm_to_vmem [thread:$0]  %s2, 512, %s167, [#allocation7], 128, 128, 8
        $region20: #{tpu_custom_call.1} parent=11 // pred_fallthru
          _
        // Predicated region
        $region21: #{tpu_custom_call.1} parent=11 // pred_check
          %p173 = pneg %p106
        $region22: #{tpu_custom_call.1} parent=11 // pred_check_branch
          %175 = sbr.rel (%p173) target = $region24
        $region23: #{tpu_custom_call.1} parent=11 // pred_region
          _
        $region24: #{tpu_custom_call.1} parent=11 // pred_fallthru
          _
      $region12: #{tpu_custom_call.1} parent=5 // pred_fallthru
        _
      %p176 = scmp.lt.s32.totalorder %s17, 2
      // Predicated region
      $region25: #{tpu_custom_call.1} parent=5 // pred_check
        %p177 = pneg %p176
      $region26: #{tpu_custom_call.1} parent=5 // pred_check_branch
        %179 = sbr.rel (%p177) target = $region28
      $region27: #{tpu_custom_call.1} parent=5 // pred_region
        // Predicated region
        $region29: #{tpu_custom_call.1} parent=27 // pred_check
          %p180 = pneg %p37
        $region30: #{tpu_custom_call.1} parent=27 // pred_check_branch
          %182 = sbr.rel (%p180) target = $region32
        $region31: #{tpu_custom_call.1} parent=27 // pred_region
          %s183 = sand.u32 %s27, 1
          %s184 = scalar_lea.sflag [#allocation4], %s183
          %s185 = sand.u32 %s27, 1
          %s186 = smul.addr %s185, 8
          %s187 = scalar_lea.vmem [#allocation3], %s186
          %s189 = ssub.s32 128, 128
          %190 = vsyncadd %s184, %s189
          %s191 = smul.addr %s17, 128
          %s192 = scalar_lea.hbm %s0, %s191
          %s194 = sshll.u32 %s187, 4
          %s195 = int_to_ptr.vmem [resolvable:$true] %s194
          %197 = dma.hbm_to_vmem [thread:$0]  %s192, 128, %s195, %s184
        $region32: #{tpu_custom_call.1} parent=27 // pred_fallthru
          _
      $region28: #{tpu_custom_call.1} parent=5 // pred_fallthru
        _
      %p198 = scmp.le.s32.totalorder 1, %s17
      %p199 = scmp.lt.s32.totalorder %s17, 3
      %p200 = pnand %p198, %p199
      %p201 = pneg %p200
      // Predicated region
      $region33: #{tpu_custom_call.1} parent=5 // pred_check
        _
      $region34: #{tpu_custom_call.1} parent=5 // pred_check_branch
        %203 = sbr.rel (%p200) target = $region36
      $region35: #{tpu_custom_call.1} parent=5 // pred_region
        %s204 = ssub.s32 %s17, 1
        %s205 = sand.u32 %s30, 1
        %s206 = scalar_lea.sflag [#allocation4], %s205
        %s207 = sand.u32 %s30, 1
        %s208 = smul.addr %s207, 8
        %s209 = scalar_lea.vmem [#allocation3], %s208
        // Predicated region
        $region37: #{tpu_custom_call.1} parent=35 // pred_check
          %p210 = pneg %p43
        $region38: #{tpu_custom_call.1} parent=35 // pred_check_branch
          %212 = sbr.rel (%p210) target = $region40
        $region39: #{tpu_custom_call.1} parent=35 // pred_region
          %213 = dma.done %s206, 128
        $region40: #{tpu_custom_call.1} parent=35 // pred_fallthru
          _
        // Predicated region
        $region41: #{tpu_custom_call.1} parent=35 // pred_check
          %p214 = pneg %p64
        $region42: #{tpu_custom_call.1} parent=35 // pred_check_branch
          %216 = sbr.rel (%p214) target = $region44
        $region43: #{tpu_custom_call.1} parent=35 // pred_region
          %217 = dma.done [#allocation7], 512
        $region44: #{tpu_custom_call.1} parent=35 // pred_fallthru
          _
        // Predicated region
        $region45: #{tpu_custom_call.1} parent=35 // pred_check
          %p218 = pneg %p85
        $region46: #{tpu_custom_call.1} parent=35 // pred_check_branch
          %220 = sbr.rel (%p218) target = $region48
        $region47: #{tpu_custom_call.1} parent=35 // pred_region
          %221 = dma.done [#allocation7], 512
        $region48: #{tpu_custom_call.1} parent=35 // pred_fallthru
          _
        %s222 = sand.u32 %s30, 1
        %s223 = scalar_lea.sflag [#allocation4], %s222
        %s224 = sand.u32 %s30, 1
        %s225 = smul.addr %s224, 8
        %s226 = scalar_lea.vmem [#allocation3], %s225
        %p227 = pneg %p43
        %p228 = pneg %p40
        %p229 = pneg %p64
        %p230 = pneg %p61
        %p231 = pneg %p85
        %p232 = pneg %p82
        %p233 = pneg %p106
        %p234 = pneg %p103
        %p235 = pneg %p132
        %p236 = pneg %p129
        %s237 = sand.u32 %s119, 1
        %s238 = scalar_lea.sflag [#allocation5], %s237
        %s239 = sand.u32 %s119, 1
        %s240 = smul.addr %s239, 8
        %s241 = scalar_lea.vmem [#allocation9], %s240
        %v242 = vld [vmem:[%s209] sm:$0xff]
        %v243 = vld [vmem:[#allocation6] sm:$0xff]
        %v244 = vld [vmem:[#allocation6 + $0x8] sm:$0xff]
        %v245 = vld [vmem:[#allocation6 + $0x10] sm:$0xff]
        %v246 = vld [vmem:[#allocation6 + $0x18] sm:$0xff]
        %v247 = vld [vmem:[#allocation8] sm:$0xff]
        %v248 = vld [vmem:[#allocation8 + $0x8] sm:$0xff]
        %v249 = vld [vmem:[#allocation8 + $0x10] sm:$0xff]
        %v250 = vld [vmem:[#allocation8 + $0x18] sm:$0xff]
        %vm251 = vcmask 261120
        %v253 = vsel %vm251, %v242, 0
        %255 = vmatprep.subr.mxu0 0.0
        %256 = vmatpush1.msra.mxu0 %v243
        %257 = vmatprep.subr.mxu0 0.0
        %258 = vmatpush1.msra.mxu0 %v244
        %259 = vmatprep.subr.mxu0 0.0
        %260 = vmatpush1.msra.mxu0 %v245
        %261 = vmatprep.subr.mxu0 0.0
        %262 = vmatpush1.msra.mxu0 %v246
        %263 = vmatprep.subr.mxu0 0.0
        %264 = vmatpush1.msra.mxu0 0.0
        %265 = vmatprep.subr.mxu0 0.0
        %266 = vmatpush1.msra.mxu0 0.0
        %267 = vmatprep.subr.mxu0 0.0
        %268 = vmatpush1.msra.mxu0 0.0
        %269 = vmatprep.subr.mxu0 0.0
        %270 = vmatpush1.msra.mxu0 0.0
        %271 = vmatprep.subr.mxu0 0.0
        %272 = vmatpush1.msra.mxu0 0.0
        %273 = vmatprep.subr.mxu0 0.0
        %274 = vmatpush1.msra.mxu0 0.0
        %275 = vmatprep.subr.mxu0 0.0
        %276 = vmatpush1.msra.mxu0 0.0
        %277 = vmatprep.subr.mxu0 0.0
        %278 = vmatpush1.msra.mxu0 0.0
        %279 = vmatprep.subr.mxu0 0.0
        %280 = vmatpush1.msra.mxu0 0.0
        %281 = vmatprep.subr.mxu0 0.0
        %282 = vmatpush1.msra.mxu0 0.0
        %283 = vmatprep.subr.mxu0 0.0
        %284 = vmatpush1.msra.mxu0 0.0
        %285 = vmatprep.subr.mxu0 0.0
        %286 = vmatpush1.msra.mxu0 0.0
        %287 = vmatprep.subr.mxu0 0.0
        %288 = vmatpush1.msra.mxu0 0.0
        %289 = vmatprep.subr.mxu0 0.0
        %290 = vmatpush1.msra.mxu0 0.0
        %291 = vmatprep.subr.mxu0 0.0
        %292 = vmatpush1.msra.mxu0 0.0
        %293 = vmatprep.subr.mxu0 0.0
        %294 = vmatpush1.msra.mxu0 0.0
        %295 = vmatprep.subr.mxu0 0.0
        %296 = vmatpush1.msra.mxu0 0.0
        %297 = vmatprep.subr.mxu0 0.0
        %298 = vmatpush1.msra.mxu0 0.0
        %299 = vmatprep.subr.mxu0 0.0
        %300 = vmatpush1.msra.mxu0 0.0
        %301 = vmatprep.subr.mxu0 0.0
        %302 = vmatpush1.msra.mxu0 0.0
        %303 = vmatprep.subr.mxu0 0.0
        %304 = vmatpush1.msra.mxu0 0.0
        %305 = vmatprep.subr.mxu0 0.0
        %306 = vmatpush1.msra.mxu0 0.0
        %307 = vmatprep.subr.mxu0 0.0
        %308 = vmatpush1.msra.mxu0 0.0
        %309 = vmatprep.subr.mxu0 0.0
        %310 = vmatpush1.msra.mxu0 0.0
        %311 = vmatprep.subr.mxu0 0.0
        %312 = vmatpush1.msra.mxu0 0.0
        %313 = vmatprep.subr.mxu0 0.0
        %314 = vmatpush1.msra.mxu0 0.0
        %315 = vmatprep.subr.mxu0 0.0
        %316 = vmatpush1.msra.mxu0 0.0
        %317 = vmatprep.subr.mxu0 0.0
        %318 = vmatpush1.msra.mxu0 0.0
        %319 = vmatprep.mubr.f32.mxu0 0.0
        %320 = vmatmul.mubr.f32.gmra.mrb[0].mxu0 %v253
        %v321 = vpop.f32.mrb[0].mxu0
        %v322 = vadd.f32 0.0, %v321
        %v323 = vpop.f32.mrb[0].mxu0
        %324 = vdwg.mxu0
        %326 = vrot.lane.b32.xlu0 %v322, 96
        %v327 = vpop.permute.xlu0 %326
        %vm328 = vcmask 31744
        %v329 = vsel %vm328, %v322, 0
        %v331 = vsel %vm328, %v327, 0
        %333 = vmatprep.subr.mxu0 0.0
        %334 = vmatpush1.xpose.msra.mxu0 %v331
        %335 = vmatprep.subr.mxu0 0.0
        %336 = vmatpush1.xpose.msra.mxu0 0.0
        %337 = vmatprep.subr.mxu0 0.0
        %338 = vmatpush1.xpose.msra.mxu0 0.0
        %339 = vmatprep.subr.mxu0 0.0
        %340 = vmatpush1.xpose.msra.mxu0 0.0
        %341 = vmatprep.subr.mxu0 0.0
        %342 = vmatpush1.xpose.msra.mxu0 0.0
        %343 = vmatprep.subr.mxu0 0.0
        %344 = vmatpush1.xpose.msra.mxu0 0.0
        %345 = vmatprep.subr.mxu0 0.0
        %346 = vmatpush1.xpose.msra.mxu0 0.0
        %347 = vmatprep.subr.mxu0 0.0
        %348 = vmatpush1.xpose.msra.mxu0 0.0
        %349 = vmatprep.subr.mxu0 0.0
        %350 = vmatpush1.xpose.msra.mxu0 0.0
        %351 = vmatprep.subr.mxu0 0.0
        %352 = vmatpush1.xpose.msra.mxu0 0.0
        %353 = vmatprep.subr.mxu0 0.0
        %354 = vmatpush1.xpose.msra.mxu0 0.0
        %355 = vmatprep.subr.mxu0 0.0
        %356 = vmatpush1.xpose.msra.mxu0 0.0
        %357 = vmatprep.subr.mxu0 0.0
        %358 = vmatpush1.xpose.msra.mxu0 0.0
        %359 = vmatprep.subr.mxu0 0.0
        %360 = vmatpush1.xpose.msra.mxu0 0.0
        %361 = vmatprep.subr.mxu0 0.0
        %362 = vmatpush1.xpose.msra.mxu0 0.0
        %363 = vmatprep.subr.mxu0 0.0
        %364 = vmatpush1.xpose.msra.mxu0 0.0
        %365 = vmatprep.subr.mxu0 0.0
        %366 = vmatpush1.xpose.msra.mxu0 0.0
        %367 = vmatprep.subr.mxu0 0.0
        %368 = vmatpush1.xpose.msra.mxu0 0.0
        %369 = vmatprep.subr.mxu0 0.0
        %370 = vmatpush1.xpose.msra.mxu0 0.0
        %371 = vmatprep.subr.mxu0 0.0
        %372 = vmatpush1.xpose.msra.mxu0 0.0
        %373 = vmatprep.subr.mxu0 0.0
        %374 = vmatpush1.xpose.msra.mxu0 0.0
        %375 = vmatprep.subr.mxu0 0.0
        %376 = vmatpush1.xpose.msra.mxu0 0.0
        %377 = vmatprep.subr.mxu0 0.0
        %378 = vmatpush1.xpose.msra.mxu0 0.0
        %379 = vmatprep.subr.mxu0 0.0
        %380 = vmatpush1.xpose.msra.mxu0 0.0
        %381 = vmatprep.subr.mxu0 0.0
        %382 = vmatpush1.xpose.msra.mxu0 0.0
        %383 = vmatprep.subr.mxu0 0.0
        %384 = vmatpush1.xpose.msra.mxu0 0.0
        %385 = vmatprep.subr.mxu0 0.0
        %386 = vmatpush1.xpose.msra.mxu0 0.0
        %387 = vmatprep.subr.mxu0 0.0
        %388 = vmatpush1.xpose.msra.mxu0 0.0
        %389 = vmatprep.subr.mxu0 0.0
        %390 = vmatpush1.xpose.msra.mxu0 0.0
        %391 = vmatprep.subr.mxu0 0.0
        %392 = vmatpush1.xpose.msra.mxu0 0.0
        %393 = vmatprep.subr.mxu0 0.0
        %394 = vmatpush1.xpose.msra.mxu0 0.0
        %395 = vmatprep.subr.mxu0 0.0
        %396 = vmatpush1.xpose.msra.mxu0 0.0
        %397 = vmatprep.mubr.f32.mxu0 0.0
        %398 = vmatmul.mubr.f32.gmra.mrb[0].mxu0 %v329
        %v399 = vpop.f32.mrb[0].mxu0
        %v400 = vadd.f32 0.0, %v399
        %v401 = vpop.f32.mrb[0].mxu0
        %402 = vdwg.mxu0
        %vm403 = vcmask 64512
        %v404 = vsel %vm403, %v400, -inf
        %405 = vmax.xlane.f32.xlu0 %v404
        %v406 = vpop.xlane.xlu0 %405
        %v407 = vsub.f32 %v400, %v406
        %v408 = vmul.f32 %v407, 1.442695
        %v409 = vpow.pop %v408
        %v410 = vsel %vm403, %v409, 0.0
        %411 = vadd.xlane.f32.xlu0 %v410
        %v412 = vpop.xlane.xlu0 %411
        %413 = vrot.lane.b32.xlu0 %v322, 64
        %v414 = vpop.permute.xlu0 %413
        %v417 = vsel %vm403, %v409, 0
        %419 = vmatprep.subr.mxu0 0.0
        %420 = vmatpush1.msra.mxu0 %v414
        %421 = vmatprep.subr.mxu0 0.0
        %422 = vmatpush1.msra.mxu0 0.0
        %423 = vmatprep.subr.mxu0 0.0
        %424 = vmatpush1.msra.mxu0 0.0
        %425 = vmatprep.subr.mxu0 0.0
        %426 = vmatpush1.msra.mxu0 0.0
        %427 = vmatprep.subr.mxu0 0.0
        %428 = vmatpush1.msra.mxu0 0.0
        %429 = vmatprep.subr.mxu0 0.0
        %430 = vmatpush1.msra.mxu0 0.0
        %431 = vmatprep.subr.mxu0 0.0
        %432 = vmatpush1.msra.mxu0 0.0
        %433 = vmatprep.subr.mxu0 0.0
        %434 = vmatpush1.msra.mxu0 0.0
        %435 = vmatprep.subr.mxu0 0.0
        %436 = vmatpush1.msra.mxu0 0.0
        %437 = vmatprep.subr.mxu0 0.0
        %438 = vmatpush1.msra.mxu0 0.0
        %439 = vmatprep.subr.mxu0 0.0
        %440 = vmatpush1.msra.mxu0 0.0
        %441 = vmatprep.subr.mxu0 0.0
        %442 = vmatpush1.msra.mxu0 0.0
        %443 = vmatprep.subr.mxu0 0.0
        %444 = vmatpush1.msra.mxu0 0.0
        %445 = vmatprep.subr.mxu0 0.0
        %446 = vmatpush1.msra.mxu0 0.0
        %447 = vmatprep.subr.mxu0 0.0
        %448 = vmatpush1.msra.mxu0 0.0
        %449 = vmatprep.subr.mxu0 0.0
        %450 = vmatpush1.msra.mxu0 0.0
        %451 = vmatprep.subr.mxu0 0.0
        %452 = vmatpush1.msra.mxu0 0.0
        %453 = vmatprep.subr.mxu0 0.0
        %454 = vmatpush1.msra.mxu0 0.0
        %455 = vmatprep.subr.mxu0 0.0
        %456 = vmatpush1.msra.mxu0 0.0
        %457 = vmatprep.subr.mxu0 0.0
        %458 = vmatpush1.msra.mxu0 0.0
        %459 = vmatprep.subr.mxu0 0.0
        %460 = vmatpush1.msra.mxu0 0.0
        %461 = vmatprep.subr.mxu0 0.0
        %462 = vmatpush1.msra.mxu0 0.0
        %463 = vmatprep.subr.mxu0 0.0
        %464 = vmatpush1.msra.mxu0 0.0
        %465 = vmatprep.subr.mxu0 0.0
        %466 = vmatpush1.msra.mxu0 0.0
        %467 = vmatprep.subr.mxu0 0.0
        %468 = vmatpush1.msra.mxu0 0.0
        %469 = vmatprep.subr.mxu0 0.0
        %470 = vmatpush1.msra.mxu0 0.0
        %471 = vmatprep.subr.mxu0 0.0
        %472 = vmatpush1.msra.mxu0 0.0
        %473 = vmatprep.subr.mxu0 0.0
        %474 = vmatpush1.msra.mxu0 0.0
        %475 = vmatprep.subr.mxu0 0.0
        %476 = vmatpush1.msra.mxu0 0.0
        %477 = vmatprep.subr.mxu0 0.0
        %478 = vmatpush1.msra.mxu0 0.0
        %479 = vmatprep.subr.mxu0 0.0
        %480 = vmatpush1.msra.mxu0 0.0
        %481 = vmatprep.subr.mxu0 0.0
        %482 = vmatpush1.msra.mxu0 0.0
        %483 = vmatprep.mubr.f32.mxu0 0.0
        %484 = vmatmul.mubr.f32.gmra.mrb[0].mxu0 %v417
        %v485 = vpop.f32.mrb[0].mxu0
        %v486 = vadd.f32 0.0, %v485
        %v487 = vpop.f32.mrb[0].mxu0
        %488 = vdwg.mxu0
        %v489 = vrcp.pop %v412
        %v490 = vmul.f32 %v486, %v489
        %491 = vrot.lane.b32.xlu0 %v322, 124
        %v492 = vpop.permute.xlu0 %491
        %493 = vrot.lane.b32.xlu0 %v322, 92
        %v494 = vpop.permute.xlu0 %493
        %v495 = vsel %vm328, %v492, 0
        %v497 = vsel %vm328, %v494, 0
        %499 = vmatprep.subr.mxu0 0.0
        %500 = vmatpush1.xpose.msra.mxu0 %v497
        %501 = vmatprep.subr.mxu0 0.0
        %502 = vmatpush1.xpose.msra.mxu0 0.0
        %503 = vmatprep.subr.mxu0 0.0
        %504 = vmatpush1.xpose.msra.mxu0 0.0
        %505 = vmatprep.subr.mxu0 0.0
        %506 = vmatpush1.xpose.msra.mxu0 0.0
        %507 = vmatprep.subr.mxu0 0.0
        %508 = vmatpush1.xpose.msra.mxu0 0.0
        %509 = vmatprep.subr.mxu0 0.0
        %510 = vmatpush1.xpose.msra.mxu0 0.0
        %511 = vmatprep.subr.mxu0 0.0
        %512 = vmatpush1.xpose.msra.mxu0 0.0
        %513 = vmatprep.subr.mxu0 0.0
        %514 = vmatpush1.xpose.msra.mxu0 0.0
        %515 = vmatprep.subr.mxu0 0.0
        %516 = vmatpush1.xpose.msra.mxu0 0.0
        %517 = vmatprep.subr.mxu0 0.0
        %518 = vmatpush1.xpose.msra.mxu0 0.0
        %519 = vmatprep.subr.mxu0 0.0
        %520 = vmatpush1.xpose.msra.mxu0 0.0
        %521 = vmatprep.subr.mxu0 0.0
        %522 = vmatpush1.xpose.msra.mxu0 0.0
        %523 = vmatprep.subr.mxu0 0.0
        %524 = vmatpush1.xpose.msra.mxu0 0.0
        %525 = vmatprep.subr.mxu0 0.0
        %526 = vmatpush1.xpose.msra.mxu0 0.0
        %527 = vmatprep.subr.mxu0 0.0
        %528 = vmatpush1.xpose.msra.mxu0 0.0
        %529 = vmatprep.subr.mxu0 0.0
        %530 = vmatpush1.xpose.msra.mxu0 0.0
        %531 = vmatprep.subr.mxu0 0.0
        %532 = vmatpush1.xpose.msra.mxu0 0.0
        %533 = vmatprep.subr.mxu0 0.0
        %534 = vmatpush1.xpose.msra.mxu0 0.0
        %535 = vmatprep.subr.mxu0 0.0
        %536 = vmatpush1.xpose.msra.mxu0 0.0
        %537 = vmatprep.subr.mxu0 0.0
        %538 = vmatpush1.xpose.msra.mxu0 0.0
        %539 = vmatprep.subr.mxu0 0.0
        %540 = vmatpush1.xpose.msra.mxu0 0.0
        %541 = vmatprep.subr.mxu0 0.0
        %542 = vmatpush1.xpose.msra.mxu0 0.0
        %543 = vmatprep.subr.mxu0 0.0
        %544 = vmatpush1.xpose.msra.mxu0 0.0
        %545 = vmatprep.subr.mxu0 0.0
        %546 = vmatpush1.xpose.msra.mxu0 0.0
        %547 = vmatprep.subr.mxu0 0.0
        %548 = vmatpush1.xpose.msra.mxu0 0.0
        %549 = vmatprep.subr.mxu0 0.0
        %550 = vmatpush1.xpose.msra.mxu0 0.0
        %551 = vmatprep.subr.mxu0 0.0
        %552 = vmatpush1.xpose.msra.mxu0 0.0
        %553 = vmatprep.subr.mxu0 0.0
        %554 = vmatpush1.xpose.msra.mxu0 0.0
        %555 = vmatprep.subr.mxu0 0.0
        %556 = vmatpush1.xpose.msra.mxu0 0.0
        %557 = vmatprep.subr.mxu0 0.0
        %558 = vmatpush1.xpose.msra.mxu0 0.0
        %559 = vmatprep.subr.mxu0 0.0
        %560 = vmatpush1.xpose.msra.mxu0 0.0
        %561 = vmatprep.subr.mxu0 0.0
        %562 = vmatpush1.xpose.msra.mxu0 0.0
        %563 = vmatprep.mubr.f32.mxu0 0.0
        %564 = vmatmul.mubr.f32.gmra.mrb[0].mxu0 %v495
        %v565 = vpop.f32.mrb[0].mxu0
        %v566 = vadd.f32 0.0, %v565
        %v567 = vpop.f32.mrb[0].mxu0
        %568 = vdwg.mxu0
        %v569 = vsel %vm403, %v566, -inf
        %570 = vmax.xlane.f32.xlu0 %v569
        %v571 = vpop.xlane.xlu0 %570
        %v572 = vsub.f32 %v566, %v571
        %v573 = vmul.f32 %v572, 1.442695
        %v574 = vpow.pop %v573
        %v575 = vsel %vm403, %v574, 0.0
        %576 = vadd.xlane.f32.xlu0 %v575
        %v577 = vpop.xlane.xlu0 %576
        %578 = vrot.lane.b32.xlu0 %v322, 60
        %v579 = vpop.permute.xlu0 %578
        %v582 = vsel %vm403, %v574, 0
        %584 = vmatprep.subr.mxu0 0.0
        %585 = vmatpush1.msra.mxu0 %v579
        %586 = vmatprep.subr.mxu0 0.0
        %587 = vmatpush1.msra.mxu0 0.0
        %588 = vmatprep.subr.mxu0 0.0
        %589 = vmatpush1.msra.mxu0 0.0
        %590 = vmatprep.subr.mxu0 0.0
        %591 = vmatpush1.msra.mxu0 0.0
        %592 = vmatprep.subr.mxu0 0.0
        %593 = vmatpush1.msra.mxu0 0.0
        %594 = vmatprep.subr.mxu0 0.0
        %595 = vmatpush1.msra.mxu0 0.0
        %596 = vmatprep.subr.mxu0 0.0
        %597 = vmatpush1.msra.mxu0 0.0
        %598 = vmatprep.subr.mxu0 0.0
        %599 = vmatpush1.msra.mxu0 0.0
        %600 = vmatprep.subr.mxu0 0.0
        %601 = vmatpush1.msra.mxu0 0.0
        %602 = vmatprep.subr.mxu0 0.0
        %603 = vmatpush1.msra.mxu0 0.0
        %604 = vmatprep.subr.mxu0 0.0
        %605 = vmatpush1.msra.mxu0 0.0
        %606 = vmatprep.subr.mxu0 0.0
        %607 = vmatpush1.msra.mxu0 0.0
        %608 = vmatprep.subr.mxu0 0.0
        %609 = vmatpush1.msra.mxu0 0.0
        %610 = vmatprep.subr.mxu0 0.0
        %611 = vmatpush1.msra.mxu0 0.0
        %612 = vmatprep.subr.mxu0 0.0
        %613 = vmatpush1.msra.mxu0 0.0
        %614 = vmatprep.subr.mxu0 0.0
        %615 = vmatpush1.msra.mxu0 0.0
        %616 = vmatprep.subr.mxu0 0.0
        %617 = vmatpush1.msra.mxu0 0.0
        %618 = vmatprep.subr.mxu0 0.0
        %619 = vmatpush1.msra.mxu0 0.0
        %620 = vmatprep.subr.mxu0 0.0
        %621 = vmatpush1.msra.mxu0 0.0
        %622 = vmatprep.subr.mxu0 0.0
        %623 = vmatpush1.msra.mxu0 0.0
        %624 = vmatprep.subr.mxu0 0.0
        %625 = vmatpush1.msra.mxu0 0.0
        %626 = vmatprep.subr.mxu0 0.0
        %627 = vmatpush1.msra.mxu0 0.0
        %628 = vmatprep.subr.mxu0 0.0
        %629 = vmatpush1.msra.mxu0 0.0
        %630 = vmatprep.subr.mxu0 0.0
        %631 = vmatpush1.msra.mxu0 0.0
        %632 = vmatprep.subr.mxu0 0.0
        %633 = vmatpush1.msra.mxu0 0.0
        %634 = vmatprep.subr.mxu0 0.0
        %635 = vmatpush1.msra.mxu0 0.0
        %636 = vmatprep.subr.mxu0 0.0
        %637 = vmatpush1.msra.mxu0 0.0
        %638 = vmatprep.subr.mxu0 0.0
        %639 = vmatpush1.msra.mxu0 0.0
        %640 = vmatprep.subr.mxu0 0.0
        %641 = vmatpush1.msra.mxu0 0.0
        %642 = vmatprep.subr.mxu0 0.0
        %643 = vmatpush1.msra.mxu0 0.0
        %644 = vmatprep.subr.mxu0 0.0
        %645 = vmatpush1.msra.mxu0 0.0
        %646 = vmatprep.subr.mxu0 0.0
        %647 = vmatpush1.msra.mxu0 0.0
        %648 = vmatprep.mubr.f32.mxu0 0.0
        %649 = vmatmul.mubr.f32.gmra.mrb[0].mxu0 %v582
        %v650 = vpop.f32.mrb[0].mxu0
        %v651 = vadd.f32 0.0, %v650
        %v652 = vpop.f32.mrb[0].mxu0
        %653 = vdwg.mxu0
        %v654 = vrcp.pop %v577
        %v655 = vmul.f32 %v651, %v654
        %656 = vrot.lane.b32.xlu0 %v322, 120
        %v657 = vpop.permute.xlu0 %656
        %658 = vrot.lane.b32.xlu0 %v322, 88
        %v659 = vpop.permute.xlu0 %658
        %v660 = vsel %vm328, %v657, 0
        %v662 = vsel %vm328, %v659, 0
        %664 = vmatprep.subr.mxu0 0.0
        %665 = vmatpush1.xpose.msra.mxu0 %v662
        %666 = vmatprep.subr.mxu0 0.0
        %667 = vmatpush1.xpose.msra.mxu0 0.0
        %668 = vmatprep.subr.mxu0 0.0
        %669 = vmatpush1.xpose.msra.mxu0 0.0
        %670 = vmatprep.subr.mxu0 0.0
        %671 = vmatpush1.xpose.msra.mxu0 0.0
        %672 = vmatprep.subr.mxu0 0.0
        %673 = vmatpush1.xpose.msra.mxu0 0.0
        %674 = vmatprep.subr.mxu0 0.0
        %675 = vmatpush1.xpose.msra.mxu0 0.0
        %676 = vmatprep.subr.mxu0 0.0
        %677 = vmatpush1.xpose.msra.mxu0 0.0
        %678 = vmatprep.subr.mxu0 0.0
        %679 = vmatpush1.xpose.msra.mxu0 0.0
        %680 = vmatprep.subr.mxu0 0.0
        %681 = vmatpush1.xpose.msra.mxu0 0.0
        %682 = vmatprep.subr.mxu0 0.0
        %683 = vmatpush1.xpose.msra.mxu0 0.0
        %684 = vmatprep.subr.mxu0 0.0
        %685 = vmatpush1.xpose.msra.mxu0 0.0
        %686 = vmatprep.subr.mxu0 0.0
        %687 = vmatpush1.xpose.msra.mxu0 0.0
        %688 = vmatprep.subr.mxu0 0.0
        %689 = vmatpush1.xpose.msra.mxu0 0.0
        %690 = vmatprep.subr.mxu0 0.0
        %691 = vmatpush1.xpose.msra.mxu0 0.0
        %692 = vmatprep.subr.mxu0 0.0
        %693 = vmatpush1.xpose.msra.mxu0 0.0
        %694 = vmatprep.subr.mxu0 0.0
        %695 = vmatpush1.xpose.msra.mxu0 0.0
        %696 = vmatprep.subr.mxu0 0.0
        %697 = vmatpush1.xpose.msra.mxu0 0.0
        %698 = vmatprep.subr.mxu0 0.0
        %699 = vmatpush1.xpose.msra.mxu0 0.0
        %700 = vmatprep.subr.mxu0 0.0
        %701 = vmatpush1.xpose.msra.mxu0 0.0
        %702 = vmatprep.subr.mxu0 0.0
        %703 = vmatpush1.xpose.msra.mxu0 0.0
        %704 = vmatprep.subr.mxu0 0.0
        %705 = vmatpush1.xpose.msra.mxu0 0.0
        %706 = vmatprep.subr.mxu0 0.0
        %707 = vmatpush1.xpose.msra.mxu0 0.0
        %708 = vmatprep.subr.mxu0 0.0
        %709 = vmatpush1.xpose.msra.mxu0 0.0
        %710 = vmatprep.subr.mxu0 0.0
        %711 = vmatpush1.xpose.msra.mxu0 0.0
        %712 = vmatprep.subr.mxu0 0.0
        %713 = vmatpush1.xpose.msra.mxu0 0.0
        %714 = vmatprep.subr.mxu0 0.0
        %715 = vmatpush1.xpose.msra.mxu0 0.0
        %716 = vmatprep.subr.mxu0 0.0
        %717 = vmatpush1.xpose.msra.mxu0 0.0
        %718 = vmatprep.subr.mxu0 0.0
        %719 = vmatpush1.xpose.msra.mxu0 0.0
        %720 = vmatprep.subr.mxu0 0.0
        %721 = vmatpush1.xpose.msra.mxu0 0.0
        %722 = vmatprep.subr.mxu0 0.0
        %723 = vmatpush1.xpose.msra.mxu0 0.0
        %724 = vmatprep.subr.mxu0 0.0
        %725 = vmatpush1.xpose.msra.mxu0 0.0
        %726 = vmatprep.subr.mxu0 0.0
        %727 = vmatpush1.xpose.msra.mxu0 0.0
        %728 = vmatprep.mubr.f32.mxu0 0.0
        %729 = vmatmul.mubr.f32.gmra.mrb[0].mxu0 %v660
        %v730 = vpop.f32.mrb[0].mxu0
        %v731 = vadd.f32 0.0, %v730
        %v732 = vpop.f32.mrb[0].mxu0
        %733 = vdwg.mxu0
        %v734 = vsel %vm403, %v731, -inf
        %735 = vmax.xlane.f32.xlu0 %v734
        %v736 = vpop.xlane.xlu0 %735
        %v737 = vsub.f32 %v731, %v736
        %v738 = vmul.f32 %v737, 1.442695
        %v739 = vpow.pop %v738
        %v740 = vsel %vm403, %v739, 0.0
        %741 = vadd.xlane.f32.xlu0 %v740
        %v742 = vpop.xlane.xlu0 %741
        %743 = vrot.lane.b32.xlu0 %v322, 56
        %v744 = vpop.permute.xlu0 %743
        %v747 = vsel %vm403, %v739, 0
        %749 = vmatprep.subr.mxu0 0.0
        %750 = vmatpush1.msra.mxu0 %v744
        %751 = vmatprep.subr.mxu0 0.0
        %752 = vmatpush1.msra.mxu0 0.0
        %753 = vmatprep.subr.mxu0 0.0
        %754 = vmatpush1.msra.mxu0 0.0
        %755 = vmatprep.subr.mxu0 0.0
        %756 = vmatpush1.msra.mxu0 0.0
        %757 = vmatprep.subr.mxu0 0.0
        %758 = vmatpush1.msra.mxu0 0.0
        %759 = vmatprep.subr.mxu0 0.0
        %760 = vmatpush1.msra.mxu0 0.0
        %761 = vmatprep.subr.mxu0 0.0
        %762 = vmatpush1.msra.mxu0 0.0
        %763 = vmatprep.subr.mxu0 0.0
        %764 = vmatpush1.msra.mxu0 0.0
        %765 = vmatprep.subr.mxu0 0.0
        %766 = vmatpush1.msra.mxu0 0.0
        %767 = vmatprep.subr.mxu0 0.0
        %768 = vmatpush1.msra.mxu0 0.0
        %769 = vmatprep.subr.mxu0 0.0
        %770 = vmatpush1.msra.mxu0 0.0
        %771 = vmatprep.subr.mxu0 0.0
        %772 = vmatpush1.msra.mxu0 0.0
        %773 = vmatprep.subr.mxu0 0.0
        %774 = vmatpush1.msra.mxu0 0.0
        %775 = vmatprep.subr.mxu0 0.0
        %776 = vmatpush1.msra.mxu0 0.0
        %777 = vmatprep.subr.mxu0 0.0
        %778 = vmatpush1.msra.mxu0 0.0
        %779 = vmatprep.subr.mxu0 0.0
        %780 = vmatpush1.msra.mxu0 0.0
        %781 = vmatprep.subr.mxu0 0.0
        %782 = vmatpush1.msra.mxu0 0.0
        %783 = vmatprep.subr.mxu0 0.0
        %784 = vmatpush1.msra.mxu0 0.0
        %785 = vmatprep.subr.mxu0 0.0
        %786 = vmatpush1.msra.mxu0 0.0
        %787 = vmatprep.subr.mxu0 0.0
        %788 = vmatpush1.msra.mxu0 0.0
        %789 = vmatprep.subr.mxu0 0.0
        %790 = vmatpush1.msra.mxu0 0.0
        %791 = vmatprep.subr.mxu0 0.0
        %792 = vmatpush1.msra.mxu0 0.0
        %793 = vmatprep.subr.mxu0 0.0
        %794 = vmatpush1.msra.mxu0 0.0
        %795 = vmatprep.subr.mxu0 0.0
        %796 = vmatpush1.msra.mxu0 0.0
        %797 = vmatprep.subr.mxu0 0.0
        %798 = vmatpush1.msra.mxu0 0.0
        %799 = vmatprep.subr.mxu0 0.0
        %800 = vmatpush1.msra.mxu0 0.0
        %801 = vmatprep.subr.mxu0 0.0
        %802 = vmatpush1.msra.mxu0 0.0
        %803 = vmatprep.subr.mxu0 0.0
        %804 = vmatpush1.msra.mxu0 0.0
        %805 = vmatprep.subr.mxu0 0.0
        %806 = vmatpush1.msra.mxu0 0.0
        %807 = vmatprep.subr.mxu0 0.0
        %808 = vmatpush1.msra.mxu0 0.0
        %809 = vmatprep.subr.mxu0 0.0
        %810 = vmatpush1.msra.mxu0 0.0
        %811 = vmatprep.subr.mxu0 0.0
        %812 = vmatpush1.msra.mxu0 0.0
        %813 = vmatprep.mubr.f32.mxu0 0.0
        %814 = vmatmul.mubr.f32.gmra.mrb[0].mxu0 %v747
        %v815 = vpop.f32.mrb[0].mxu0
        %v816 = vadd.f32 0.0, %v815
        %v817 = vpop.f32.mrb[0].mxu0
        %818 = vdwg.mxu0
        %v819 = vrcp.pop %v742
        %v820 = vmul.f32 %v816, %v819
        %821 = vrot.lane.b32.xlu0 %v322, 116
        %v822 = vpop.permute.xlu0 %821
        %823 = vrot.lane.b32.xlu0 %v322, 84
        %v824 = vpop.permute.xlu0 %823
        %v825 = vsel %vm328, %v822, 0
        %v827 = vsel %vm328, %v824, 0
        %829 = vmatprep.subr.mxu0 0.0
        %830 = vmatpush1.xpose.msra.mxu0 %v827
        %831 = vmatprep.subr.mxu0 0.0
        %832 = vmatpush1.xpose.msra.mxu0 0.0
        %833 = vmatprep.subr.mxu0 0.0
        %834 = vmatpush1.xpose.msra.mxu0 0.0
        %835 = vmatprep.subr.mxu0 0.0
        %836 = vmatpush1.xpose.msra.mxu0 0.0
        %837 = vmatprep.subr.mxu0 0.0
        %838 = vmatpush1.xpose.msra.mxu0 0.0
        %839 = vmatprep.subr.mxu0 0.0
        %840 = vmatpush1.xpose.msra.mxu0 0.0
        %841 = vmatprep.subr.mxu0 0.0
        %842 = vmatpush1.xpose.msra.mxu0 0.0
        %843 = vmatprep.subr.mxu0 0.0
        %844 = vmatpush1.xpose.msra.mxu0 0.0
        %845 = vmatprep.subr.mxu0 0.0
        %846 = vmatpush1.xpose.msra.mxu0 0.0
        %847 = vmatprep.subr.mxu0 0.0
        %848 = vmatpush1.xpose.msra.mxu0 0.0
        %849 = vmatprep.subr.mxu0 0.0
        %850 = vmatpush1.xpose.msra.mxu0 0.0
        %851 = vmatprep.subr.mxu0 0.0
        %852 = vmatpush1.xpose.msra.mxu0 0.0
        %853 = vmatprep.subr.mxu0 0.0
        %854 = vmatpush1.xpose.msra.mxu0 0.0
        %855 = vmatprep.subr.mxu0 0.0
        %856 = vmatpush1.xpose.msra.mxu0 0.0
        %857 = vmatprep.subr.mxu0 0.0
        %858 = vmatpush1.xpose.msra.mxu0 0.0
        %859 = vmatprep.subr.mxu0 0.0
        %860 = vmatpush1.xpose.msra.mxu0 0.0
        %861 = vmatprep.subr.mxu0 0.0
        %862 = vmatpush1.xpose.msra.mxu0 0.0
        %863 = vmatprep.subr.mxu0 0.0
        %864 = vmatpush1.xpose.msra.mxu0 0.0
        %865 = vmatprep.subr.mxu0 0.0
        %866 = vmatpush1.xpose.msra.mxu0 0.0
        %867 = vmatprep.subr.mxu0 0.0
        %868 = vmatpush1.xpose.msra.mxu0 0.0
        %869 = vmatprep.subr.mxu0 0.0
        %870 = vmatpush1.xpose.msra.mxu0 0.0
        %871 = vmatprep.subr.mxu0 0.0
        %872 = vmatpush1.xpose.msra.mxu0 0.0
        %873 = vmatprep.subr.mxu0 0.0
        %874 = vmatpush1.xpose.msra.mxu0 0.0
        %875 = vmatprep.subr.mxu0 0.0
        %876 = vmatpush1.xpose.msra.mxu0 0.0
        %877 = vmatprep.subr.mxu0 0.0
        %878 = vmatpush1.xpose.msra.mxu0 0.0
        %879 = vmatprep.subr.mxu0 0.0
        %880 = vmatpush1.xpose.msra.mxu0 0.0
        %881 = vmatprep.subr.mxu0 0.0
        %882 = vmatpush1.xpose.msra.mxu0 0.0
        %883 = vmatprep.subr.mxu0 0.0
        %884 = vmatpush1.xpose.msra.mxu0 0.0
        %885 = vmatprep.subr.mxu0 0.0
        %886 = vmatpush1.xpose.msra.mxu0 0.0
        %887 = vmatprep.subr.mxu0 0.0
        %888 = vmatpush1.xpose.msra.mxu0 0.0
        %889 = vmatprep.subr.mxu0 0.0
        %890 = vmatpush1.xpose.msra.mxu0 0.0
        %891 = vmatprep.subr.mxu0 0.0
        %892 = vmatpush1.xpose.msra.mxu0 0.0
        %893 = vmatprep.mubr.f32.mxu0 0.0
        %894 = vmatmul.mubr.f32.gmra.mrb[0].mxu0 %v825
        %v895 = vpop.f32.mrb[0].mxu0
        %v896 = vadd.f32 0.0, %v895
        %v897 = vpop.f32.mrb[0].mxu0
        %898 = vdwg.mxu0
        %v899 = vsel %vm403, %v896, -inf
        %900 = vmax.xlane.f32.xlu0 %v899
        %v901 = vpop.xlane.xlu0 %900
        %v902 = vsub.f32 %v896, %v901
        %v903 = vmul.f32 %v902, 1.442695
        %v904 = vpow.pop %v903
        %v905 = vsel %vm403, %v904, 0.0
        %906 = vadd.xlane.f32.xlu0 %v905
        %v907 = vpop.xlane.xlu0 %906
        %908 = vrot.lane.b32.xlu0 %v322, 52
        %v909 = vpop.permute.xlu0 %908
        %v912 = vsel %vm403, %v904, 0
        %914 = vmatprep.subr.mxu0 0.0
        %915 = vmatpush1.msra.mxu0 %v909
        %916 = vmatprep.subr.mxu0 0.0
        %917 = vmatpush1.msra.mxu0 0.0
        %918 = vmatprep.subr.mxu0 0.0
        %919 = vmatpush1.msra.mxu0 0.0
        %920 = vmatprep.subr.mxu0 0.0
        %921 = vmatpush1.msra.mxu0 0.0
        %922 = vmatprep.subr.mxu0 0.0
        %923 = vmatpush1.msra.mxu0 0.0
        %924 = vmatprep.subr.mxu0 0.0
        %925 = vmatpush1.msra.mxu0 0.0
        %926 = vmatprep.subr.mxu0 0.0
        %927 = vmatpush1.msra.mxu0 0.0
        %928 = vmatprep.subr.mxu0 0.0
        %929 = vmatpush1.msra.mxu0 0.0
        %930 = vmatprep.subr.mxu0 0.0
        %931 = vmatpush1.msra.mxu0 0.0
        %932 = vmatprep.subr.mxu0 0.0
        %933 = vmatpush1.msra.mxu0 0.0
        %934 = vmatprep.subr.mxu0 0.0
        %935 = vmatpush1.msra.mxu0 0.0
        %936 = vmatprep.subr.mxu0 0.0
        %937 = vmatpush1.msra.mxu0 0.0
        %938 = vmatprep.subr.mxu0 0.0
        %939 = vmatpush1.msra.mxu0 0.0
        %940 = vmatprep.subr.mxu0 0.0
        %941 = vmatpush1.msra.mxu0 0.0
        %942 = vmatprep.subr.mxu0 0.0
        %943 = vmatpush1.msra.mxu0 0.0
        %944 = vmatprep.subr.mxu0 0.0
        %945 = vmatpush1.msra.mxu0 0.0
        %946 = vmatprep.subr.mxu0 0.0
        %947 = vmatpush1.msra.mxu0 0.0
        %948 = vmatprep.subr.mxu0 0.0
        %949 = vmatpush1.msra.mxu0 0.0
        %950 = vmatprep.subr.mxu0 0.0
        %951 = vmatpush1.msra.mxu0 0.0
        %952 = vmatprep.subr.mxu0 0.0
        %953 = vmatpush1.msra.mxu0 0.0
        %954 = vmatprep.subr.mxu0 0.0
        %955 = vmatpush1.msra.mxu0 0.0
        %956 = vmatprep.subr.mxu0 0.0
        %957 = vmatpush1.msra.mxu0 0.0
        %958 = vmatprep.subr.mxu0 0.0
        %959 = vmatpush1.msra.mxu0 0.0
        %960 = vmatprep.subr.mxu0 0.0
        %961 = vmatpush1.msra.mxu0 0.0
        %962 = vmatprep.subr.mxu0 0.0
        %963 = vmatpush1.msra.mxu0 0.0
        %964 = vmatprep.subr.mxu0 0.0
        %965 = vmatpush1.msra.mxu0 0.0
        %966 = vmatprep.subr.mxu0 0.0
        %967 = vmatpush1.msra.mxu0 0.0
        %968 = vmatprep.subr.mxu0 0.0
        %969 = vmatpush1.msra.mxu0 0.0
        %970 = vmatprep.subr.mxu0 0.0
        %971 = vmatpush1.msra.mxu0 0.0
        %972 = vmatprep.subr.mxu0 0.0
        %973 = vmatpush1.msra.mxu0 0.0
        %974 = vmatprep.subr.mxu0 0.0
        %975 = vmatpush1.msra.mxu0 0.0
        %976 = vmatprep.subr.mxu0 0.0
        %977 = vmatpush1.msra.mxu0 0.0
        %978 = vmatprep.mubr.f32.mxu0 0.0
        %979 = vmatmul.mubr.f32.gmra.mrb[0].mxu0 %v912
        %v980 = vpop.f32.mrb[0].mxu0
        %v981 = vadd.f32 0.0, %v980
        %v982 = vpop.f32.mrb[0].mxu0
        %983 = vdwg.mxu0
        %v984 = vrcp.pop %v907
        %v985 = vmul.f32 %v981, %v984
        %986 = vrot.lane.b32.xlu0 %v322, 112
        %v987 = vpop.permute.xlu0 %986
        %988 = vrot.lane.b32.xlu0 %v322, 80
        %v989 = vpop.permute.xlu0 %988
        %v990 = vsel %vm328, %v987, 0
        %v992 = vsel %vm328, %v989, 0
        %994 = vmatprep.subr.mxu0 0.0
        %995 = vmatpush1.xpose.msra.mxu0 %v992
        %996 = vmatprep.subr.mxu0 0.0
        %997 = vmatpush1.xpose.msra.mxu0 0.0
        %998 = vmatprep.subr.mxu0 0.0
        %999 = vmatpush1.xpose.msra.mxu0 0.0
        %1000 = vmatprep.subr.mxu0 0.0
        %1001 = vmatpush1.xpose.msra.mxu0 0.0
        %1002 = vmatprep.subr.mxu0 0.0
        %1003 = vmatpush1.xpose.msra.mxu0 0.0
        %1004 = vmatprep.subr.mxu0 0.0
        %1005 = vmatpush1.xpose.msra.mxu0 0.0
        %1006 = vmatprep.subr.mxu0 0.0
        %1007 = vmatpush1.xpose.msra.mxu0 0.0
        %1008 = vmatprep.subr.mxu0 0.0
        %1009 = vmatpush1.xpose.msra.mxu0 0.0
        %1010 = vmatprep.subr.mxu0 0.0
        %1011 = vmatpush1.xpose.msra.mxu0 0.0
        %1012 = vmatprep.subr.mxu0 0.0
        %1013 = vmatpush1.xpose.msra.mxu0 0.0
        %1014 = vmatprep.subr.mxu0 0.0
        %1015 = vmatpush1.xpose.msra.mxu0 0.0
        %1016 = vmatprep.subr.mxu0 0.0
        %1017 = vmatpush1.xpose.msra.mxu0 0.0
        %1018 = vmatprep.subr.mxu0 0.0
        %1019 = vmatpush1.xpose.msra.mxu0 0.0
        %1020 = vmatprep.subr.mxu0 0.0
        %1021 = vmatpush1.xpose.msra.mxu0 0.0
        %1022 = vmatprep.subr.mxu0 0.0
        %1023 = vmatpush1.xpose.msra.mxu0 0.0
        %1024 = vmatprep.subr.mxu0 0.0
        %1025 = vmatpush1.xpose.msra.mxu0 0.0
        %1026 = vmatprep.subr.mxu0 0.0
        %1027 = vmatpush1.xpose.msra.mxu0 0.0
        %1028 = vmatprep.subr.mxu0 0.0
        %1029 = vmatpush1.xpose.msra.mxu0 0.0
        %1030 = vmatprep.subr.mxu0 0.0
        %1031 = vmatpush1.xpose.msra.mxu0 0.0
        %1032 = vmatprep.subr.mxu0 0.0
        %1033 = vmatpush1.xpose.msra.mxu0 0.0
        %1034 = vmatprep.subr.mxu0 0.0
        %1035 = vmatpush1.xpose.msra.mxu0 0.0
        %1036 = vmatprep.subr.mxu0 0.0
        %1037 = vmatpush1.xpose.msra.mxu0 0.0
        %1038 = vmatprep.subr.mxu0 0.0
        %1039 = vmatpush1.xpose.msra.mxu0 0.0
        %1040 = vmatprep.subr.mxu0 0.0
        %1041 = vmatpush1.xpose.msra.mxu0 0.0
        %1042 = vmatprep.subr.mxu0 0.0
        %1043 = vmatpush1.xpose.msra.mxu0 0.0
        %1044 = vmatprep.subr.mxu0 0.0
        %1045 = vmatpush1.xpose.msra.mxu0 0.0
        %1046 = vmatprep.subr.mxu0 0.0
        %1047 = vmatpush1.xpose.msra.mxu0 0.0
        %1048 = vmatprep.subr.mxu0 0.0
        %1049 = vmatpush1.xpose.msra.mxu0 0.0
        %1050 = vmatprep.subr.mxu0 0.0
        %1051 = vmatpush1.xpose.msra.mxu0 0.0
        %1052 = vmatprep.subr.mxu0 0.0
        %1053 = vmatpush1.xpose.msra.mxu0 0.0
        %1054 = vmatprep.subr.mxu0 0.0
        %1055 = vmatpush1.xpose.msra.mxu0 0.0
        %1056 = vmatprep.subr.mxu0 0.0
        %1057 = vmatpush1.xpose.msra.mxu0 0.0
        %1058 = vmatprep.mubr.f32.mxu0 0.0
        %1059 = vmatmul.mubr.f32.gmra.mrb[0].mxu0 %v990
        %v1060 = vpop.f32.mrb[0].mxu0
        %v1061 = vadd.f32 0.0, %v1060
        %v1062 = vpop.f32.mrb[0].mxu0
        %1063 = vdwg.mxu0
        %v1064 = vsel %vm403, %v1061, -inf
        %1065 = vmax.xlane.f32.xlu0 %v1064
        %v1066 = vpop.xlane.xlu0 %1065
        %v1067 = vsub.f32 %v1061, %v1066
        %v1068 = vmul.f32 %v1067, 1.442695
        %v1069 = vpow.pop %v1068
        %v1070 = vsel %vm403, %v1069, 0.0
        %1071 = vadd.xlane.f32.xlu0 %v1070
        %v1072 = vpop.xlane.xlu0 %1071
        %1073 = vrot.lane.b32.xlu0 %v322, 48
        %v1074 = vpop.permute.xlu0 %1073
        %v1077 = vsel %vm403, %v1069, 0
        %1079 = vmatprep.subr.mxu0 0.0
        %1080 = vmatpush1.msra.mxu0 %v1074
        %1081 = vmatprep.subr.mxu0 0.0
        %1082 = vmatpush1.msra.mxu0 0.0
        %1083 = vmatprep.subr.mxu0 0.0
        %1084 = vmatpush1.msra.mxu0 0.0
        %1085 = vmatprep.subr.mxu0 0.0
        %1086 = vmatpush1.msra.mxu0 0.0
        %1087 = vmatprep.subr.mxu0 0.0
        %1088 = vmatpush1.msra.mxu0 0.0
        %1089 = vmatprep.subr.mxu0 0.0
        %1090 = vmatpush1.msra.mxu0 0.0
        %1091 = vmatprep.subr.mxu0 0.0
        %1092 = vmatpush1.msra.mxu0 0.0
        %1093 = vmatprep.subr.mxu0 0.0
        %1094 = vmatpush1.msra.mxu0 0.0
        %1095 = vmatprep.subr.mxu0 0.0
        %1096 = vmatpush1.msra.mxu0 0.0
        %1097 = vmatprep.subr.mxu0 0.0
        %1098 = vmatpush1.msra.mxu0 0.0
        %1099 = vmatprep.subr.mxu0 0.0
        %1100 = vmatpush1.msra.mxu0 0.0
        %1101 = vmatprep.subr.mxu0 0.0
        %1102 = vmatpush1.msra.mxu0 0.0
        %1103 = vmatprep.subr.mxu0 0.0
        %1104 = vmatpush1.msra.mxu0 0.0
        %1105 = vmatprep.subr.mxu0 0.0
        %1106 = vmatpush1.msra.mxu0 0.0
        %1107 = vmatprep.subr.mxu0 0.0
        %1108 = vmatpush1.msra.mxu0 0.0
        %1109 = vmatprep.subr.mxu0 0.0
        %1110 = vmatpush1.msra.mxu0 0.0
        %1111 = vmatprep.subr.mxu0 0.0
        %1112 = vmatpush1.msra.mxu0 0.0
        %1113 = vmatprep.subr.mxu0 0.0
        %1114 = vmatpush1.msra.mxu0 0.0
        %1115 = vmatprep.subr.mxu0 0.0
        %1116 = vmatpush1.msra.mxu0 0.0
        %1117 = vmatprep.subr.mxu0 0.0
        %1118 = vmatpush1.msra.mxu0 0.0
        %1119 = vmatprep.subr.mxu0 0.0
        %1120 = vmatpush1.msra.mxu0 0.0
        %1121 = vmatprep.subr.mxu0 0.0
        %1122 = vmatpush1.msra.mxu0 0.0
        %1123 = vmatprep.subr.mxu0 0.0
        %1124 = vmatpush1.msra.mxu0 0.0
        %1125 = vmatprep.subr.mxu0 0.0
        %1126 = vmatpush1.msra.mxu0 0.0
        %1127 = vmatprep.subr.mxu0 0.0
        %1128 = vmatpush1.msra.mxu0 0.0
        %1129 = vmatprep.subr.mxu0 0.0
        %1130 = vmatpush1.msra.mxu0 0.0
        %1131 = vmatprep.subr.mxu0 0.0
        %1132 = vmatpush1.msra.mxu0 0.0
        %1133 = vmatprep.subr.mxu0 0.0
        %1134 = vmatpush1.msra.mxu0 0.0
        %1135 = vmatprep.subr.mxu0 0.0
        %1136 = vmatpush1.msra.mxu0 0.0
        %1137 = vmatprep.subr.mxu0 0.0
        %1138 = vmatpush1.msra.mxu0 0.0
        %1139 = vmatprep.subr.mxu0 0.0
        %1140 = vmatpush1.msra.mxu0 0.0
        %1141 = vmatprep.subr.mxu0 0.0
        %1142 = vmatpush1.msra.mxu0 0.0
        %1143 = vmatprep.mubr.f32.mxu0 0.0
        %1144 = vmatmul.mubr.f32.gmra.mrb[0].mxu0 %v1077
        %v1145 = vpop.f32.mrb[0].mxu0
        %v1146 = vadd.f32 0.0, %v1145
        %v1147 = vpop.f32.mrb[0].mxu0
        %1148 = vdwg.mxu0
        %v1149 = vrcp.pop %v1072
        %v1150 = vmul.f32 %v1146, %v1149
        %1151 = vrot.lane.b32.xlu0 %v322, 108
        %v1152 = vpop.permute.xlu0 %1151
        %1153 = vrot.lane.b32.xlu0 %v322, 76
        %v1154 = vpop.permute.xlu0 %1153
        %v1155 = vsel %vm328, %v1152, 0
        %v1157 = vsel %vm328, %v1154, 0
        %1159 = vmatprep.subr.mxu0 0.0
        %1160 = vmatpush1.xpose.msra.mxu0 %v1157
        %1161 = vmatprep.subr.mxu0 0.0
        %1162 = vmatpush1.xpose.msra.mxu0 0.0
        %1163 = vmatprep.subr.mxu0 0.0
        %1164 = vmatpush1.xpose.msra.mxu0 0.0
        %1165 = vmatprep.subr.mxu0 0.0
        %1166 = vmatpush1.xpose.msra.mxu0 0.0
        %1167 = vmatprep.subr.mxu0 0.0
        %1168 = vmatpush1.xpose.msra.mxu0 0.0
        %1169 = vmatprep.subr.mxu0 0.0
        %1170 = vmatpush1.xpose.msra.mxu0 0.0
        %1171 = vmatprep.subr.mxu0 0.0
        %1172 = vmatpush1.xpose.msra.mxu0 0.0
        %1173 = vmatprep.subr.mxu0 0.0
        %1174 = vmatpush1.xpose.msra.mxu0 0.0
        %1175 = vmatprep.subr.mxu0 0.0
        %1176 = vmatpush1.xpose.msra.mxu0 0.0
        %1177 = vmatprep.subr.mxu0 0.0
        %1178 = vmatpush1.xpose.msra.mxu0 0.0
        %1179 = vmatprep.subr.mxu0 0.0
        %1180 = vmatpush1.xpose.msra.mxu0 0.0
        %1181 = vmatprep.subr.mxu0 0.0
        %1182 = vmatpush1.xpose.msra.mxu0 0.0
        %1183 = vmatprep.subr.mxu0 0.0
        %1184 = vmatpush1.xpose.msra.mxu0 0.0
        %1185 = vmatprep.subr.mxu0 0.0
        %1186 = vmatpush1.xpose.msra.mxu0 0.0
        %1187 = vmatprep.subr.mxu0 0.0
        %1188 = vmatpush1.xpose.msra.mxu0 0.0
        %1189 = vmatprep.subr.mxu0 0.0
        %1190 = vmatpush1.xpose.msra.mxu0 0.0
        %1191 = vmatprep.subr.mxu0 0.0
        %1192 = vmatpush1.xpose.msra.mxu0 0.0
        %1193 = vmatprep.subr.mxu0 0.0
        %1194 = vmatpush1.xpose.msra.mxu0 0.0
        %1195 = vmatprep.subr.mxu0 0.0
        %1196 = vmatpush1.xpose.msra.mxu0 0.0
        %1197 = vmatprep.subr.mxu0 0.0
        %1198 = vmatpush1.xpose.msra.mxu0 0.0
        %1199 = vmatprep.subr.mxu0 0.0
        %1200 = vmatpush1.xpose.msra.mxu0 0.0
        %1201 = vmatprep.subr.mxu0 0.0
        %1202 = vmatpush1.xpose.msra.mxu0 0.0
        %1203 = vmatprep.subr.mxu0 0.0
        %1204 = vmatpush1.xpose.msra.mxu0 0.0
        %1205 = vmatprep.subr.mxu0 0.0
        %1206 = vmatpush1.xpose.msra.mxu0 0.0
        %1207 = vmatprep.subr.mxu0 0.0
        %1208 = vmatpush1.xpose.msra.mxu0 0.0
        %1209 = vmatprep.subr.mxu0 0.0
        %1210 = vmatpush1.xpose.msra.mxu0 0.0
        %1211 = vmatprep.subr.mxu0 0.0
        %1212 = vmatpush1.xpose.msra.mxu0 0.0
        %1213 = vmatprep.subr.mxu0 0.0
        %1214 = vmatpush1.xpose.msra.mxu0 0.0
        %1215 = vmatprep.subr.mxu0 0.0
        %1216 = vmatpush1.xpose.msra.mxu0 0.0
        %1217 = vmatprep.subr.mxu0 0.0
        %1218 = vmatpush1.xpose.msra.mxu0 0.0
        %1219 = vmatprep.subr.mxu0 0.0
        %1220 = vmatpush1.xpose.msra.mxu0 0.0
        %1221 = vmatprep.subr.mxu0 0.0
        %1222 = vmatpush1.xpose.msra.mxu0 0.0
        %1223 = vmatprep.mubr.f32.mxu0 0.0
        %1224 = vmatmul.mubr.f32.gmra.mrb[0].mxu0 %v1155
        %v1225 = vpop.f32.mrb[0].mxu0
        %v1226 = vadd.f32 0.0, %v1225
        %v1227 = vpop.f32.mrb[0].mxu0
        %1228 = vdwg.mxu0
        %v1229 = vsel %vm403, %v1226, -inf
        %1230 = vmax.xlane.f32.xlu0 %v1229
        %v1231 = vpop.xlane.xlu0 %1230
        %v1232 = vsub.f32 %v1226, %v1231
        %v1233 = vmul.f32 %v1232, 1.442695
        %v1234 = vpow.pop %v1233
        %v1235 = vsel %vm403, %v1234, 0.0
        %1236 = vadd.xlane.f32.xlu0 %v1235
        %v1237 = vpop.xlane.xlu0 %1236
        %1238 = vrot.lane.b32.xlu0 %v322, 44
        %v1239 = vpop.permute.xlu0 %1238
        %v1242 = vsel %vm403, %v1234, 0
        %1244 = vmatprep.subr.mxu0 0.0
        %1245 = vmatpush1.msra.mxu0 %v1239
        %1246 = vmatprep.subr.mxu0 0.0
        %1247 = vmatpush1.msra.mxu0 0.0
        %1248 = vmatprep.subr.mxu0 0.0
        %1249 = vmatpush1.msra.mxu0 0.0
        %1250 = vmatprep.subr.mxu0 0.0
        %1251 = vmatpush1.msra.mxu0 0.0
        %1252 = vmatprep.subr.mxu0 0.0
        %1253 = vmatpush1.msra.mxu0 0.0
        %1254 = vmatprep.subr.mxu0 0.0
        %1255 = vmatpush1.msra.mxu0 0.0
        %1256 = vmatprep.subr.mxu0 0.0
        %1257 = vmatpush1.msra.mxu0 0.0
        %1258 = vmatprep.subr.mxu0 0.0
        %1259 = vmatpush1.msra.mxu0 0.0
        %1260 = vmatprep.subr.mxu0 0.0
        %1261 = vmatpush1.msra.mxu0 0.0
        %1262 = vmatprep.subr.mxu0 0.0
        %1263 = vmatpush1.msra.mxu0 0.0
        %1264 = vmatprep.subr.mxu0 0.0
        %1265 = vmatpush1.msra.mxu0 0.0
        %1266 = vmatprep.subr.mxu0 0.0
        %1267 = vmatpush1.msra.mxu0 0.0
        %1268 = vmatprep.subr.mxu0 0.0
        %1269 = vmatpush1.msra.mxu0 0.0
        %1270 = vmatprep.subr.mxu0 0.0
        %1271 = vmatpush1.msra.mxu0 0.0
        %1272 = vmatprep.subr.mxu0 0.0
        %1273 = vmatpush1.msra.mxu0 0.0
        %1274 = vmatprep.subr.mxu0 0.0
        %1275 = vmatpush1.msra.mxu0 0.0
        %1276 = vmatprep.subr.mxu0 0.0
        %1277 = vmatpush1.msra.mxu0 0.0
        %1278 = vmatprep.subr.mxu0 0.0
        %1279 = vmatpush1.msra.mxu0 0.0
        %1280 = vmatprep.subr.mxu0 0.0
        %1281 = vmatpush1.msra.mxu0 0.0
        %1282 = vmatprep.subr.mxu0 0.0
        %1283 = vmatpush1.msra.mxu0 0.0
        %1284 = vmatprep.subr.mxu0 0.0
        %1285 = vmatpush1.msra.mxu0 0.0
        %1286 = vmatprep.subr.mxu0 0.0
        %1287 = vmatpush1.msra.mxu0 0.0
        %1288 = vmatprep.subr.mxu0 0.0
        %1289 = vmatpush1.msra.mxu0 0.0
        %1290 = vmatprep.subr.mxu0 0.0
        %1291 = vmatpush1.msra.mxu0 0.0
        %1292 = vmatprep.subr.mxu0 0.0
        %1293 = vmatpush1.msra.mxu0 0.0
        %1294 = vmatprep.subr.mxu0 0.0
        %1295 = vmatpush1.msra.mxu0 0.0
        %1296 = vmatprep.subr.mxu0 0.0
        %1297 = vmatpush1.msra.mxu0 0.0
        %1298 = vmatprep.subr.mxu0 0.0
        %1299 = vmatpush1.msra.mxu0 0.0
        %1300 = vmatprep.subr.mxu0 0.0
        %1301 = vmatpush1.msra.mxu0 0.0
        %1302 = vmatprep.subr.mxu0 0.0
        %1303 = vmatpush1.msra.mxu0 0.0
        %1304 = vmatprep.subr.mxu0 0.0
        %1305 = vmatpush1.msra.mxu0 0.0
        %1306 = vmatprep.subr.mxu0 0.0
        %1307 = vmatpush1.msra.mxu0 0.0
        %1308 = vmatprep.mubr.f32.mxu0 0.0
        %1309 = vmatmul.mubr.f32.gmra.mrb[0].mxu0 %v1242
        %v1310 = vpop.f32.mrb[0].mxu0
        %v1311 = vadd.f32 0.0, %v1310
        %v1312 = vpop.f32.mrb[0].mxu0
        %1313 = vdwg.mxu0
        %v1314 = vrcp.pop %v1237
        %v1315 = vmul.f32 %v1311, %v1314
        %1316 = vrot.lane.b32.xlu0 %v322, 104
        %v1317 = vpop.permute.xlu0 %1316
        %1318 = vrot.lane.b32.xlu0 %v322, 72
        %v1319 = vpop.permute.xlu0 %1318
        %v1320 = vsel %vm328, %v1317, 0
        %v1322 = vsel %vm328, %v1319, 0
        %1324 = vmatprep.subr.mxu0 0.0
        %1325 = vmatpush1.xpose.msra.mxu0 %v1322
        %1326 = vmatprep.subr.mxu0 0.0
        %1327 = vmatpush1.xpose.msra.mxu0 0.0
        %1328 = vmatprep.subr.mxu0 0.0
        %1329 = vmatpush1.xpose.msra.mxu0 0.0
        %1330 = vmatprep.subr.mxu0 0.0
        %1331 = vmatpush1.xpose.msra.mxu0 0.0
        %1332 = vmatprep.subr.mxu0 0.0
        %1333 = vmatpush1.xpose.msra.mxu0 0.0
        %1334 = vmatprep.subr.mxu0 0.0
        %1335 = vmatpush1.xpose.msra.mxu0 0.0
        %1336 = vmatprep.subr.mxu0 0.0
        %1337 = vmatpush1.xpose.msra.mxu0 0.0
        %1338 = vmatprep.subr.mxu0 0.0
        %1339 = vmatpush1.xpose.msra.mxu0 0.0
        %1340 = vmatprep.subr.mxu0 0.0
        %1341 = vmatpush1.xpose.msra.mxu0 0.0
        %1342 = vmatprep.subr.mxu0 0.0
        %1343 = vmatpush1.xpose.msra.mxu0 0.0
        %1344 = vmatprep.subr.mxu0 0.0
        %1345 = vmatpush1.xpose.msra.mxu0 0.0
        %1346 = vmatprep.subr.mxu0 0.0
        %1347 = vmatpush1.xpose.msra.mxu0 0.0
        %1348 = vmatprep.subr.mxu0 0.0
        %1349 = vmatpush1.xpose.msra.mxu0 0.0
        %1350 = vmatprep.subr.mxu0 0.0
        %1351 = vmatpush1.xpose.msra.mxu0 0.0
        %1352 = vmatprep.subr.mxu0 0.0
        %1353 = vmatpush1.xpose.msra.mxu0 0.0
        %1354 = vmatprep.subr.mxu0 0.0
        %1355 = vmatpush1.xpose.msra.mxu0 0.0
        %1356 = vmatprep.subr.mxu0 0.0
        %1357 = vmatpush1.xpose.msra.mxu0 0.0
        %1358 = vmatprep.subr.mxu0 0.0
        %1359 = vmatpush1.xpose.msra.mxu0 0.0
        %1360 = vmatprep.subr.mxu0 0.0
        %1361 = vmatpush1.xpose.msra.mxu0 0.0
        %1362 = vmatprep.subr.mxu0 0.0
        %1363 = vmatpush1.xpose.msra.mxu0 0.0
        %1364 = vmatprep.subr.mxu0 0.0
        %1365 = vmatpush1.xpose.msra.mxu0 0.0
        %1366 = vmatprep.subr.mxu0 0.0
        %1367 = vmatpush1.xpose.msra.mxu0 0.0
        %1368 = vmatprep.subr.mxu0 0.0
        %1369 = vmatpush1.xpose.msra.mxu0 0.0
        %1370 = vmatprep.subr.mxu0 0.0
        %1371 = vmatpush1.xpose.msra.mxu0 0.0
        %1372 = vmatprep.subr.mxu0 0.0
        %1373 = vmatpush1.xpose.msra.mxu0 0.0
        %1374 = vmatprep.subr.mxu0 0.0
        %1375 = vmatpush1.xpose.msra.mxu0 0.0
        %1376 = vmatprep.subr.mxu0 0.0
        %1377 = vmatpush1.xpose.msra.mxu0 0.0
        %1378 = vmatprep.subr.mxu0 0.0
        %1379 = vmatpush1.xpose.msra.mxu0 0.0
        %1380 = vmatprep.subr.mxu0 0.0
        %1381 = vmatpush1.xpose.msra.mxu0 0.0
        %1382 = vmatprep.subr.mxu0 0.0
        %1383 = vmatpush1.xpose.msra.mxu0 0.0
        %1384 = vmatprep.subr.mxu0 0.0
        %1385 = vmatpush1.xpose.msra.mxu0 0.0
        %1386 = vmatprep.subr.mxu0 0.0
        %1387 = vmatpush1.xpose.msra.mxu0 0.0
        %1388 = vmatprep.mubr.f32.mxu0 0.0
        %1389 = vmatmul.mubr.f32.gmra.mrb[0].mxu0 %v1320
        %v1390 = vpop.f32.mrb[0].mxu0
        %v1391 = vadd.f32 0.0, %v1390
        %v1392 = vpop.f32.mrb[0].mxu0
        %1393 = vdwg.mxu0
        %v1394 = vsel %vm403, %v1391, -inf
        %1395 = vmax.xlane.f32.xlu0 %v1394
        %v1396 = vpop.xlane.xlu0 %1395
        %v1397 = vsub.f32 %v1391, %v1396
        %v1398 = vmul.f32 %v1397, 1.442695
        %v1399 = vpow.pop %v1398
        %v1400 = vsel %vm403, %v1399, 0.0
        %1401 = vadd.xlane.f32.xlu0 %v1400
        %v1402 = vpop.xlane.xlu0 %1401
        %1403 = vrot.lane.b32.xlu0 %v322, 40
        %v1404 = vpop.permute.xlu0 %1403
        %v1407 = vsel %vm403, %v1399, 0
        %1409 = vmatprep.subr.mxu0 0.0
        %1410 = vmatpush1.msra.mxu0 %v1404
        %1411 = vmatprep.subr.mxu0 0.0
        %1412 = vmatpush1.msra.mxu0 0.0
        %1413 = vmatprep.subr.mxu0 0.0
        %1414 = vmatpush1.msra.mxu0 0.0
        %1415 = vmatprep.subr.mxu0 0.0
        %1416 = vmatpush1.msra.mxu0 0.0
        %1417 = vmatprep.subr.mxu0 0.0
        %1418 = vmatpush1.msra.mxu0 0.0
        %1419 = vmatprep.subr.mxu0 0.0
        %1420 = vmatpush1.msra.mxu0 0.0
        %1421 = vmatprep.subr.mxu0 0.0
        %1422 = vmatpush1.msra.mxu0 0.0
        %1423 = vmatprep.subr.mxu0 0.0
        %1424 = vmatpush1.msra.mxu0 0.0
        %1425 = vmatprep.subr.mxu0 0.0
        %1426 = vmatpush1.msra.mxu0 0.0
        %1427 = vmatprep.subr.mxu0 0.0
        %1428 = vmatpush1.msra.mxu0 0.0
        %1429 = vmatprep.subr.mxu0 0.0
        %1430 = vmatpush1.msra.mxu0 0.0
        %1431 = vmatprep.subr.mxu0 0.0
        %1432 = vmatpush1.msra.mxu0 0.0
        %1433 = vmatprep.subr.mxu0 0.0
        %1434 = vmatpush1.msra.mxu0 0.0
        %1435 = vmatprep.subr.mxu0 0.0
        %1436 = vmatpush1.msra.mxu0 0.0
        %1437 = vmatprep.subr.mxu0 0.0
        %1438 = vmatpush1.msra.mxu0 0.0
        %1439 = vmatprep.subr.mxu0 0.0
        %1440 = vmatpush1.msra.mxu0 0.0
        %1441 = vmatprep.subr.mxu0 0.0
        %1442 = vmatpush1.msra.mxu0 0.0
        %1443 = vmatprep.subr.mxu0 0.0
        %1444 = vmatpush1.msra.mxu0 0.0
        %1445 = vmatprep.subr.mxu0 0.0
        %1446 = vmatpush1.msra.mxu0 0.0
        %1447 = vmatprep.subr.mxu0 0.0
        %1448 = vmatpush1.msra.mxu0 0.0
        %1449 = vmatprep.subr.mxu0 0.0
        %1450 = vmatpush1.msra.mxu0 0.0
        %1451 = vmatprep.subr.mxu0 0.0
        %1452 = vmatpush1.msra.mxu0 0.0
        %1453 = vmatprep.subr.mxu0 0.0
        %1454 = vmatpush1.msra.mxu0 0.0
        %1455 = vmatprep.subr.mxu0 0.0
        %1456 = vmatpush1.msra.mxu0 0.0
        %1457 = vmatprep.subr.mxu0 0.0
        %1458 = vmatpush1.msra.mxu0 0.0
        %1459 = vmatprep.subr.mxu0 0.0
        %1460 = vmatpush1.msra.mxu0 0.0
        %1461 = vmatprep.subr.mxu0 0.0
        %1462 = vmatpush1.msra.mxu0 0.0
        %1463 = vmatprep.subr.mxu0 0.0
        %1464 = vmatpush1.msra.mxu0 0.0
        %1465 = vmatprep.subr.mxu0 0.0
        %1466 = vmatpush1.msra.mxu0 0.0
        %1467 = vmatprep.subr.mxu0 0.0
        %1468 = vmatpush1.msra.mxu0 0.0
        %1469 = vmatprep.subr.mxu0 0.0
        %1470 = vmatpush1.msra.mxu0 0.0
        %1471 = vmatprep.subr.mxu0 0.0
        %1472 = vmatpush1.msra.mxu0 0.0
        %1473 = vmatprep.mubr.f32.mxu0 0.0
        %1474 = vmatmul.mubr.f32.gmra.mrb[0].mxu0 %v1407
        %v1475 = vpop.f32.mrb[0].mxu0
        %v1476 = vadd.f32 0.0, %v1475
        %v1477 = vpop.f32.mrb[0].mxu0
        %1478 = vdwg.mxu0
        %v1479 = vrcp.pop %v1402
        %v1480 = vmul.f32 %v1476, %v1479
        %1481 = vrot.lane.b32.xlu0 %v322, 100
        %v1482 = vpop.permute.xlu0 %1481
        %1483 = vrot.lane.b32.xlu0 %v322, 68
        %v1484 = vpop.permute.xlu0 %1483
        %v1485 = vsel %vm328, %v1482, 0
        %v1487 = vsel %vm328, %v1484, 0
        %1489 = vmatprep.subr.mxu0 0.0
        %1490 = vmatpush1.xpose.msra.mxu0 %v1487
        %1491 = vmatprep.subr.mxu0 0.0
        %1492 = vmatpush1.xpose.msra.mxu0 0.0
        %1493 = vmatprep.subr.mxu0 0.0
        %1494 = vmatpush1.xpose.msra.mxu0 0.0
        %1495 = vmatprep.subr.mxu0 0.0
        %1496 = vmatpush1.xpose.msra.mxu0 0.0
        %1497 = vmatprep.subr.mxu0 0.0
        %1498 = vmatpush1.xpose.msra.mxu0 0.0
        %1499 = vmatprep.subr.mxu0 0.0
        %1500 = vmatpush1.xpose.msra.mxu0 0.0
        %1501 = vmatprep.subr.mxu0 0.0
        %1502 = vmatpush1.xpose.msra.mxu0 0.0
        %1503 = vmatprep.subr.mxu0 0.0
        %1504 = vmatpush1.xpose.msra.mxu0 0.0
        %1505 = vmatprep.subr.mxu0 0.0
        %1506 = vmatpush1.xpose.msra.mxu0 0.0
        %1507 = vmatprep.subr.mxu0 0.0
        %1508 = vmatpush1.xpose.msra.mxu0 0.0
        %1509 = vmatprep.subr.mxu0 0.0
        %1510 = vmatpush1.xpose.msra.mxu0 0.0
        %1511 = vmatprep.subr.mxu0 0.0
        %1512 = vmatpush1.xpose.msra.mxu0 0.0
        %1513 = vmatprep.subr.mxu0 0.0
        %1514 = vmatpush1.xpose.msra.mxu0 0.0
        %1515 = vmatprep.subr.mxu0 0.0
        %1516 = vmatpush1.xpose.msra.mxu0 0.0
        %1517 = vmatprep.subr.mxu0 0.0
        %1518 = vmatpush1.xpose.msra.mxu0 0.0
        %1519 = vmatprep.subr.mxu0 0.0
        %1520 = vmatpush1.xpose.msra.mxu0 0.0
        %1521 = vmatprep.subr.mxu0 0.0
        %1522 = vmatpush1.xpose.msra.mxu0 0.0
        %1523 = vmatprep.subr.mxu0 0.0
        %1524 = vmatpush1.xpose.msra.mxu0 0.0
        %1525 = vmatprep.subr.mxu0 0.0
        %1526 = vmatpush1.xpose.msra.mxu0 0.0
        %1527 = vmatprep.subr.mxu0 0.0
        %1528 = vmatpush1.xpose.msra.mxu0 0.0
        %1529 = vmatprep.subr.mxu0 0.0
        %1530 = vmatpush1.xpose.msra.mxu0 0.0
        %1531 = vmatprep.subr.mxu0 0.0
        %1532 = vmatpush1.xpose.msra.mxu0 0.0
        %1533 = vmatprep.subr.mxu0 0.0
        %1534 = vmatpush1.xpose.msra.mxu0 0.0
        %1535 = vmatprep.subr.mxu0 0.0
        %1536 = vmatpush1.xpose.msra.mxu0 0.0
        %1537 = vmatprep.subr.mxu0 0.0
        %1538 = vmatpush1.xpose.msra.mxu0 0.0
        %1539 = vmatprep.subr.mxu0 0.0
        %1540 = vmatpush1.xpose.msra.mxu0 0.0
        %1541 = vmatprep.subr.mxu0 0.0
        %1542 = vmatpush1.xpose.msra.mxu0 0.0
        %1543 = vmatprep.subr.mxu0 0.0
        %1544 = vmatpush1.xpose.msra.mxu0 0.0
        %1545 = vmatprep.subr.mxu0 0.0
        %1546 = vmatpush1.xpose.msra.mxu0 0.0
        %1547 = vmatprep.subr.mxu0 0.0
        %1548 = vmatpush1.xpose.msra.mxu0 0.0
        %1549 = vmatprep.subr.mxu0 0.0
        %1550 = vmatpush1.xpose.msra.mxu0 0.0
        %1551 = vmatprep.subr.mxu0 0.0
        %1552 = vmatpush1.xpose.msra.mxu0 0.0
        %1553 = vmatprep.mubr.f32.mxu0 0.0
        %1554 = vmatmul.mubr.f32.gmra.mrb[0].mxu0 %v1485
        %v1555 = vpop.f32.mrb[0].mxu0
        %v1556 = vadd.f32 0.0, %v1555
        %v1557 = vpop.f32.mrb[0].mxu0
        %1558 = vdwg.mxu0
        %v1559 = vsel %vm403, %v1556, -inf
        %1560 = vmax.xlane.f32.xlu0 %v1559
        %v1561 = vpop.xlane.xlu0 %1560
        %v1562 = vsub.f32 %v1556, %v1561
        %v1563 = vmul.f32 %v1562, 1.442695
        %v1564 = vpow.pop %v1563
        %v1565 = vsel %vm403, %v1564, 0.0
        %1566 = vadd.xlane.f32.xlu0 %v1565
        %v1567 = vpop.xlane.xlu0 %1566
        %1568 = vrot.lane.b32.xlu0 %v322, 36
        %v1569 = vpop.permute.xlu0 %1568
        %v1572 = vsel %vm403, %v1564, 0
        %1574 = vmatprep.subr.mxu0 0.0
        %1575 = vmatpush1.msra.mxu0 %v1569
        %1576 = vmatprep.subr.mxu0 0.0
        %1577 = vmatpush1.msra.mxu0 0.0
        %1578 = vmatprep.subr.mxu0 0.0
        %1579 = vmatpush1.msra.mxu0 0.0
        %1580 = vmatprep.subr.mxu0 0.0
        %1581 = vmatpush1.msra.mxu0 0.0
        %1582 = vmatprep.subr.mxu0 0.0
        %1583 = vmatpush1.msra.mxu0 0.0
        %1584 = vmatprep.subr.mxu0 0.0
        %1585 = vmatpush1.msra.mxu0 0.0
        %1586 = vmatprep.subr.mxu0 0.0
        %1587 = vmatpush1.msra.mxu0 0.0
        %1588 = vmatprep.subr.mxu0 0.0
        %1589 = vmatpush1.msra.mxu0 0.0
        %1590 = vmatprep.subr.mxu0 0.0
        %1591 = vmatpush1.msra.mxu0 0.0
        %1592 = vmatprep.subr.mxu0 0.0
        %1593 = vmatpush1.msra.mxu0 0.0
        %1594 = vmatprep.subr.mxu0 0.0
        %1595 = vmatpush1.msra.mxu0 0.0
        %1596 = vmatprep.subr.mxu0 0.0
        %1597 = vmatpush1.msra.mxu0 0.0
        %1598 = vmatprep.subr.mxu0 0.0
        %1599 = vmatpush1.msra.mxu0 0.0
        %1600 = vmatprep.subr.mxu0 0.0
        %1601 = vmatpush1.msra.mxu0 0.0
        %1602 = vmatprep.subr.mxu0 0.0
        %1603 = vmatpush1.msra.mxu0 0.0
        %1604 = vmatprep.subr.mxu0 0.0
        %1605 = vmatpush1.msra.mxu0 0.0
        %1606 = vmatprep.subr.mxu0 0.0
        %1607 = vmatpush1.msra.mxu0 0.0
        %1608 = vmatprep.subr.mxu0 0.0
        %1609 = vmatpush1.msra.mxu0 0.0
        %1610 = vmatprep.subr.mxu0 0.0
        %1611 = vmatpush1.msra.mxu0 0.0
        %1612 = vmatprep.subr.mxu0 0.0
        %1613 = vmatpush1.msra.mxu0 0.0
        %1614 = vmatprep.subr.mxu0 0.0
        %1615 = vmatpush1.msra.mxu0 0.0
        %1616 = vmatprep.subr.mxu0 0.0
        %1617 = vmatpush1.msra.mxu0 0.0
        %1618 = vmatprep.subr.mxu0 0.0
        %1619 = vmatpush1.msra.mxu0 0.0
        %1620 = vmatprep.subr.mxu0 0.0
        %1621 = vmatpush1.msra.mxu0 0.0
        %1622 = vmatprep.subr.mxu0 0.0
        %1623 = vmatpush1.msra.mxu0 0.0
        %1624 = vmatprep.subr.mxu0 0.0
        %1625 = vmatpush1.msra.mxu0 0.0
        %1626 = vmatprep.subr.mxu0 0.0
        %1627 = vmatpush1.msra.mxu0 0.0
        %1628 = vmatprep.subr.mxu0 0.0
        %1629 = vmatpush1.msra.mxu0 0.0
        %1630 = vmatprep.subr.mxu0 0.0
        %1631 = vmatpush1.msra.mxu0 0.0
        %1632 = vmatprep.subr.mxu0 0.0
        %1633 = vmatpush1.msra.mxu0 0.0
        %1634 = vmatprep.subr.mxu0 0.0
        %1635 = vmatpush1.msra.mxu0 0.0
        %1636 = vmatprep.subr.mxu0 0.0
        %1637 = vmatpush1.msra.mxu0 0.0
        %1638 = vmatprep.mubr.f32.mxu0 0.0
        %1639 = vmatmul.mubr.f32.gmra.mrb[0].mxu0 %v1572
        %v1640 = vpop.f32.mrb[0].mxu0
        %v1641 = vadd.f32 0.0, %v1640
        %v1642 = vpop.f32.mrb[0].mxu0
        %1643 = vdwg.mxu0
        %v1644 = vrcp.pop %v1567
        %v1645 = vmul.f32 %v1641, %v1644
        %1647 = vrot.lane.b32.xlu0 %v655, 4
        %v1648 = vpop.permute.xlu0 %1647
        %1651 = vrot.lane.b32.xlu0 %v820, 8
        %v1652 = vpop.permute.xlu0 %1651
        %1655 = vrot.lane.b32.xlu0 %v985, 12
        %v1656 = vpop.permute.xlu0 %1655
        %1659 = vrot.lane.b32.xlu0 %v1150, 16
        %v1660 = vpop.permute.xlu0 %1659
        %1663 = vrot.lane.b32.xlu0 %v1315, 20
        %v1664 = vpop.permute.xlu0 %1663
        %1667 = vrot.lane.b32.xlu0 %v1480, 24
        %v1668 = vpop.permute.xlu0 %1667
        %1671 = vrot.lane.b32.xlu0 %v1645, 28
        %v1672 = vpop.permute.xlu0 %1671
        %v1674 = vsel %vm328, %v490, %v1648
        %v1675 = vsel %vm403, %v1674, %v1652
        %vm1676 = vcmask 97280
        %v1677 = vsel %vm1676, %v1675, %v1656
        %vm1678 = vcmask 130048
        %v1679 = vsel %vm1678, %v1677, %v1660
        %vm1680 = vcmask 162816
        %v1681 = vsel %vm1680, %v1679, %v1664
        %vm1682 = vcmask 195584
        %v1683 = vsel %vm1682, %v1681, %v1668
        %vm1684 = vcmask 228352
        %v1685 = vsel %vm1684, %v1683, %v1672
        %1686 = vst.msk [vmem:[#allocation2] sm:$0xff] %vm251, %v1685
        %v1687 = vld [vmem:[#allocation2] sm:$0xff]
        %v1688 = vld [vmem:[%s3] sm:$0x1]
        %v1690 = vlaneseq
        %v1691 = vshrl.u32 %v1690, 7
        %v1692 = vsub.s32 0, %v1691
        %v1693 = vrot.slane %v1688, %v1692
        %v1696 = vsel %vm251, %v1687, 0
        %1698 = vmatprep.subr.mxu0 0.0
        %1699 = vmatpush1.msra.mxu0 %v247
        %1700 = vmatprep.subr.mxu0 0.0
        %1701 = vmatpush1.msra.mxu0 %v248
        %1702 = vmatprep.subr.mxu0 0.0
        %1703 = vmatpush1.msra.mxu0 %v249
        %1704 = vmatprep.subr.mxu0 0.0
        %1705 = vmatpush1.msra.mxu0 %v250
        %1706 = vmatprep.subr.mxu0 0.0
        %1707 = vmatpush1.msra.mxu0 0.0
        %1708 = vmatprep.subr.mxu0 0.0
        %1709 = vmatpush1.msra.mxu0 0.0
        %1710 = vmatprep.subr.mxu0 0.0
        %1711 = vmatpush1.msra.mxu0 0.0
        %1712 = vmatprep.subr.mxu0 0.0
        %1713 = vmatpush1.msra.mxu0 0.0
        %1714 = vmatprep.subr.mxu0 0.0
        %1715 = vmatpush1.msra.mxu0 0.0
        %1716 = vmatprep.subr.mxu0 0.0
        %1717 = vmatpush1.msra.mxu0 0.0
        %1718 = vmatprep.subr.mxu0 0.0
        %1719 = vmatpush1.msra.mxu0 0.0
        %1720 = vmatprep.subr.mxu0 0.0
        %1721 = vmatpush1.msra.mxu0 0.0
        %1722 = vmatprep.subr.mxu0 0.0
        %1723 = vmatpush1.msra.mxu0 0.0
        %1724 = vmatprep.subr.mxu0 0.0
        %1725 = vmatpush1.msra.mxu0 0.0
        %1726 = vmatprep.subr.mxu0 0.0
        %1727 = vmatpush1.msra.mxu0 0.0
        %1728 = vmatprep.subr.mxu0 0.0
        %1729 = vmatpush1.msra.mxu0 0.0
        %1730 = vmatprep.subr.mxu0 0.0
        %1731 = vmatpush1.msra.mxu0 0.0
        %1732 = vmatprep.subr.mxu0 0.0
        %1733 = vmatpush1.msra.mxu0 0.0
        %1734 = vmatprep.subr.mxu0 0.0
        %1735 = vmatpush1.msra.mxu0 0.0
        %1736 = vmatprep.subr.mxu0 0.0
        %1737 = vmatpush1.msra.mxu0 0.0
        %1738 = vmatprep.subr.mxu0 0.0
        %1739 = vmatpush1.msra.mxu0 0.0
        %1740 = vmatprep.subr.mxu0 0.0
        %1741 = vmatpush1.msra.mxu0 0.0
        %1742 = vmatprep.subr.mxu0 0.0
        %1743 = vmatpush1.msra.mxu0 0.0
        %1744 = vmatprep.subr.mxu0 0.0
        %1745 = vmatpush1.msra.mxu0 0.0
        %1746 = vmatprep.subr.mxu0 0.0
        %1747 = vmatpush1.msra.mxu0 0.0
        %1748 = vmatprep.subr.mxu0 0.0
        %1749 = vmatpush1.msra.mxu0 0.0
        %1750 = vmatprep.subr.mxu0 0.0
        %1751 = vmatpush1.msra.mxu0 0.0
        %1752 = vmatprep.subr.mxu0 0.0
        %1753 = vmatpush1.msra.mxu0 0.0
        %1754 = vmatprep.subr.mxu0 0.0
        %1755 = vmatpush1.msra.mxu0 0.0
        %1756 = vmatprep.subr.mxu0 0.0
        %1757 = vmatpush1.msra.mxu0 0.0
        %1758 = vmatprep.subr.mxu0 0.0
        %1759 = vmatpush1.msra.mxu0 0.0
        %1760 = vmatprep.subr.mxu0 0.0
        %1761 = vmatpush1.msra.mxu0 0.0
        %1762 = vmatprep.mubr.f32.mxu0 0.0
        %1763 = vmatmul.mubr.f32.gmra.mrb[0].mxu0 %v1696
        %v1764 = vpop.f32.mrb[0].mxu0
        %v1765 = vadd.f32 %v1693, %v1764
        %v1766 = vpop.f32.mrb[0].mxu0
        %1767 = vdwg.mxu0
        %1768 = vst.msk [vmem:[%s241] sm:$0xff] %vm251, %v1765
        %s1769 = sand.u32 %s119, 1
        %s1770 = scalar_lea.sflag [#allocation5], %s1769
        %s1771 = sand.u32 %s119, 1
        %s1772 = smul.addr %s1771, 8
        %s1773 = scalar_lea.vmem [#allocation9], %s1772
        // Predicated region
        $region49: #{tpu_custom_call.1} parent=35 // pred_check
          %p1774 = pneg %p129
        $region50: #{tpu_custom_call.1} parent=35 // pred_check_branch
          %1776 = sbr.rel (%p1774) target = $region52
        $region51: #{tpu_custom_call.1} parent=35 // pred_region
          %s1778 = ssub.s32 128, 128
          %1779 = vsyncadd %s1770, %s1778
          %s1780 = smul.addr %s22, 128
          %s1781 = scalar_lea.hbm %s4, %s1780
          %s1783 = sshll.u32 %s1773, 4
          %s1784 = int_to_ptr.vmem [resolvable:$true] %s1783
          %1786 = dma.vmem_to_hbm [thread:$0]  %s1784, 128, %s1781, %s1770
        $region52: #{tpu_custom_call.1} parent=35 // pred_fallthru
          _
      $region36: #{tpu_custom_call.1} parent=5 // pred_fallthru
        _
      %p1787 = scmp.le.s32.totalorder 2, %s17
      // Predicated region
      $region53: #{tpu_custom_call.1} parent=5 // pred_check
        %p1788 = pneg %p1787
      $region54: #{tpu_custom_call.1} parent=5 // pred_check_branch
        %1790 = sbr.rel (%p1788) target = $region56
      $region55: #{tpu_custom_call.1} parent=5 // pred_region
        %s1791 = ssub.s32 %s17, 2
        // Predicated region
        $region57: #{tpu_custom_call.1} parent=55 // pred_check
          %p1792 = pneg %p135
        $region58: #{tpu_custom_call.1} parent=55 // pred_check_branch
          %1794 = sbr.rel (%p1792) target = $region60
        $region59: #{tpu_custom_call.1} parent=55 // pred_region
          %s1795 = sand.u32 %s120, 1
          %s1796 = scalar_lea.sflag [#allocation5], %s1795
          %s1797 = sand.u32 %s120, 1
          %s1798 = smul.addr %s1797, 8
          %s1799 = scalar_lea.vmem [#allocation9], %s1798
          %1800 = dma.done %s1796, 128
        $region60: #{tpu_custom_call.1} parent=55 // pred_fallthru
          _
      $region56: #{tpu_custom_call.1} parent=5 // pred_fallthru
        _
    $region6: #{tpu_custom_call.1} parent=1 // loop_footer
      %s21 = sadd.s32 1, %s17
    $region7: #{tpu_custom_call.1} parent=1 // loop_footer_branch
      %16 = sbr.rel target = $region3
    $region8: #{tpu_custom_call.1} parent=1 // loop_exit
      _
    %1801 = vsyncpa [#allocation4], 1
    %s1802 = scalar_lea.sflag [#allocation4], 1
    %1803 = vsyncpa %s1802, 1
    %1804 = vsyncpa [#allocation7], 1
    %1805 = vsyncpa [#allocation5], 1
    %s1806 = scalar_lea.sflag [#allocation5], 1
    %1807 = vsyncpa %s1806, 1

// kernel: tpu_custom_call.1
$region0: #{tpu_custom_call.1}
  #allocation0 [shape = 'u32[]', space=smem, size = 0x4, offset = 0x4, fixed_abs, tag = 'smem constant byte address 0x4 - core index']
  #allocation1 [shape = 'u32[144,128]{1,0:T(1,128)}', space=vmem, size = 0x12000, scoped, tag = 'internal scratch']
  #allocation2 [shape = 'f32[8,32]{1,0:T(8,128)}', space=vmem, size = 0x1000, scoped, tag = 'scratch operand']
  %s0 = inlined_call_operand.hbm [shape: f32[2,8,32], index: 0, kind: input, shape index: {}]
  %s1 = inlined_call_operand.hbm [shape: f32[32,96], index: 1, kind: input, shape index: {}]
  %s2 = inlined_call_operand.hbm [shape: f32[32,32], index: 2, kind: input, shape index: {}]
  %s3 = inlined_call_operand.vmem [shape: f32[1,32], index: 3, kind: input, shape index: {}]
  %s4 = inlined_call_operand.hbm [shape: f32[2,8,32], index: 4, kind: output, shape index: {}]
  %s5 = sld [smem:[#allocation0]]
  $region61: #{tpu_custom_call.1} parent=0
    _
  %s7 = ssub.s32 1, %s5
  %s8 = scalar_select 0, %s7, %s5
  $region1: #{tpu_custom_call.1} parent=0
    #allocation3 [shape = 'u8[8192]{0}', space=vmem, size = 0x2000, scoped, tag = 'input window, operand 0']
    #allocation4 [shape = 's32[2]{0}', space=sflag, size = 0x8, scoped, tag = 'scoped memory for tpu_custom_call.1']
    #allocation5 [shape = 's32[2]{0}', space=sflag, size = 0x8, scoped, tag = 'scoped memory for tpu_custom_call.1']
    #allocation6 [shape = 'u8[16384]{0}', space=vmem, size = 0x4000, scoped, tag = 'input window, operand 1, single buffered']
    #allocation7 [shape = 's32[1]{0}', space=sflag, size = 0x4, scoped, tag = 'scoped memory for tpu_custom_call.1']
    #allocation8 [shape = 'u8[16384]{0}', space=vmem, size = 0x4000, scoped, tag = 'input window, operand 2, single buffered']
    #allocation9 [shape = 'u8[8192]{0}', space=vmem, size = 0x2000, scoped, tag = 'output window, operand 0']
    %9 = vsyncpa [#allocation4], 0
    %s10 = scalar_lea.sflag [#allocation4], 1
    %11 = vsyncpa %s10, 0
    %12 = vsyncpa [#allocation7], 0
    %13 = vsyncpa [#allocation5], 0
    %s14 = scalar_lea.sflag [#allocation5], 1
    %15 = vsyncpa %s14, 0
    loop: start=0, step=1, limit=4
    $region2: #{tpu_custom_call.1} parent=1 // loop_pre_header
      _
    $region3: #{tpu_custom_call.1} parent=1 // loop_header
      %s17 = sphi 0, %s21
      %p18 = scmp.ge.s32.totalorder %s17, 4
      %s27 = sphi 0, %s29
      %s30 = sphi 0, %s27
      %s31 = sphi 0, %s30
      %s47 = sphi 0, %s31
      %s51 = sphi 0, %s51
      %s53 = sphi 0, %s51
      %s54 = sphi 0, %s53
      %s68 = sphi 0, %s54
      %s72 = sphi 0, %s72
      %s74 = sphi 0, %s72
      %s75 = sphi 0, %s74
      %s89 = sphi 0, %s75
      %s93 = sphi 0, %s93
      %s95 = sphi 0, %s93
      %s96 = sphi 0, %s95
      %s110 = sphi 0, %s96
      %s116 = sphi 0, %s118
      %s119 = sphi 0, %s116
      %s120 = sphi 0, %s119
      %s136 = sphi 0, %s120
    $region4: #{tpu_custom_call.1} parent=1 // loop_header_branch
      %20 = sbr.rel (%p18) target = $region8
    $region5: #{tpu_custom_call.1} parent=1 // loop_body
      %s22 = ssub.s32 %s17, 1
      %s23 = ssub.s32 %s17, 2
      %s24 = sadd.s32 %s17, 1
      %s25 = ssub.s32 %s17, %s24
      %p26 = scmp.eq.s32.totalorder %s25, 0
      %s28 = sadd.s32 %s27, 1
      %s29 = scalar_select %p26, %s27, %s28
      %p32 = pneg %p26
      %p33 = scmp.eq.s32.totalorder %s17, 1
      %p34 = por %p32, %p33
      %p35 = scmp.ne.s32.totalorder %s27, %s30
      %p36 = scmp.eq.s32.totalorder %s17, 0
      %p37 = por %p35, %p36
      %p38 = scmp.ne.s32.totalorder %s27, %s30
      %p39 = scmp.eq.s32.totalorder %s22, 1
      %p40 = por %p38, %p39
      %p41 = scmp.ne.s32.totalorder %s30, %s31
      %p42 = scmp.eq.s32.totalorder %s22, 0
      %p43 = por %p41, %p42
      %p44 = scmp.ne.s32.totalorder %s30, %s31
      %p45 = scmp.eq.s32.totalorder %s23, 1
      %p46 = por %p44, %p45
      %p48 = scmp.ne.s32.totalorder %s31, %s47
      %p49 = scmp.eq.s32.totalorder %s23, 0
      %p50 = por %p48, %p49
      %s52 = sadd.s32 %s51, 1
      %p55 = scmp.eq.s32.totalorder %s17, 1
      %p56 = scmp.ne.s32.totalorder %s51, %s53
      %p57 = scmp.eq.s32.totalorder %s17, 0
      %p58 = por %p56, %p57
      %p59 = scmp.ne.s32.totalorder %s51, %s53
      %p60 = scmp.eq.s32.totalorder %s22, 1
      %p61 = por %p59, %p60
      %p62 = scmp.ne.s32.totalorder %s53, %s54
      %p63 = scmp.eq.s32.totalorder %s22, 0
      %p64 = por %p62, %p63
      %p65 = scmp.ne.s32.totalorder %s53, %s54
      %p66 = scmp.eq.s32.totalorder %s23, 1
      %p67 = por %p65, %p66
      %p69 = scmp.ne.s32.totalorder %s54, %s68
      %p70 = scmp.eq.s32.totalorder %s23, 0
      %p71 = por %p69, %p70
      %s73 = sadd.s32 %s72, 1
      %p76 = scmp.eq.s32.totalorder %s17, 1
      %p77 = scmp.ne.s32.totalorder %s72, %s74
      %p78 = scmp.eq.s32.totalorder %s17, 0
      %p79 = por %p77, %p78
      %p80 = scmp.ne.s32.totalorder %s72, %s74
      %p81 = scmp.eq.s32.totalorder %s22, 1
      %p82 = por %p80, %p81
      %p83 = scmp.ne.s32.totalorder %s74, %s75
      %p84 = scmp.eq.s32.totalorder %s22, 0
      %p85 = por %p83, %p84
      %p86 = scmp.ne.s32.totalorder %s74, %s75
      %p87 = scmp.eq.s32.totalorder %s23, 1
      %p88 = por %p86, %p87
      %p90 = scmp.ne.s32.totalorder %s75, %s89
      %p91 = scmp.eq.s32.totalorder %s23, 0
      %p92 = por %p90, %p91
      %s94 = sadd.s32 %s93, 1
      %p97 = scmp.eq.s32.totalorder %s17, 1
      %p98 = scmp.ne.s32.totalorder %s93, %s95
      %p99 = scmp.eq.s32.totalorder %s17, 0
      %p100 = por %p98, %p99
      %p101 = scmp.ne.s32.totalorder %s93, %s95
      %p102 = scmp.eq.s32.totalorder %s22, 1
      %p103 = por %p101, %p102
      %p104 = scmp.ne.s32.totalorder %s95, %s96
      %p105 = scmp.eq.s32.totalorder %s22, 0
      %p106 = por %p104, %p105
      %p107 = scmp.ne.s32.totalorder %s95, %s96
      %p108 = scmp.eq.s32.totalorder %s23, 1
      %p109 = por %p107, %p108
      %p111 = scmp.ne.s32.totalorder %s96, %s110
      %p112 = scmp.eq.s32.totalorder %s23, 0
      %p113 = por %p111, %p112
      %s114 = ssub.s32 %s17, %s24
      %p115 = scmp.eq.s32.totalorder %s114, 0
      %s117 = sadd.s32 %s116, 1
      %s118 = scalar_select %p115, %s116, %s117
      %p121 = pneg %p115
      %p122 = scmp.eq.s32.totalorder %s17, 1
      %p123 = por %p121, %p122
      %p124 = scmp.ne.s32.totalorder %s116, %s119
      %p125 = scmp.eq.s32.totalorder %s17, 0
      %p126 = por %p124, %p125
      %p127 = scmp.ne.s32.totalorder %s116, %s119
      %p128 = scmp.eq.s32.totalorder %s22, 1
      %p129 = por %p127, %p128
      %p130 = scmp.ne.s32.totalorder %s119, %s120
      %p131 = scmp.eq.s32.totalorder %s22, 0
      %p132 = por %p130, %p131
      %p133 = scmp.ne.s32.totalorder %s119, %s120
      %p134 = scmp.eq.s32.totalorder %s23, 1
      %p135 = por %p133, %p134
      %p137 = scmp.ne.s32.totalorder %s120, %s136
      %p138 = scmp.eq.s32.totalorder %s23, 0
      %p139 = por %p137, %p138
      %p140 = scmp.le.s32.totalorder 1, %s17
      %p141 = scmp.lt.s32.totalorder %s17, 3
      %p142 = pnand %p140, %p141
      %p143 = pneg %p142
      // Predicated region
      $region9: #{tpu_custom_call.1} parent=5 // pred_check
        _
      $region10: #{tpu_custom_call.1} parent=5 // pred_check_branch
        %145 = sbr.rel (%p142) target = $region12
      $region11: #{tpu_custom_call.1} parent=5 // pred_region
        %s146 = ssub.s32 %s17, 1
        // Predicated region
        $region13: #{tpu_custom_call.1} parent=11 // pred_check
          %p147 = pneg %p64
        $region14: #{tpu_custom_call.1} parent=11 // pred_check_branch
          %149 = sbr.rel (%p147) target = $region16
        $region15: #{tpu_custom_call.1} parent=11 // pred_region
          %s151 = ssub.s32 512, 512
          %152 = vsyncadd [#allocation7], %s151
          %s153 = sshll.u32 [#allocation6], 4
          %s154 = int_to_ptr.vmem [resolvable:$true] %s153
          %159 = dma.hbm_to_vmem [thread:$0]  %s1, 512, %s154, [#allocation7], 128, 128, 8
        $region16: #{tpu_custom_call.1} parent=11 // pred_fallthru
          _
        // Predicated region
        $region17: #{tpu_custom_call.1} parent=11 // pred_check
          %p160 = pneg %p85
        $region18: #{tpu_custom_call.1} parent=11 // pred_check_branch
          %162 = sbr.rel (%p160) target = $region20
        $region19: #{tpu_custom_call.1} parent=11 // pred_region
          %s164 = ssub.s32 512, 512
          %165 = vsyncadd [#allocation7], %s164
          %s166 = sshll.u32 [#allocation8], 4
          %s167 = int_to_ptr.vmem [resolvable:$true] %s166
          %172 = dma.hbm_to_vmem [thread:$0]  %s2, 512, %s167, [#allocation7], 128, 128, 8
        $region20: #{tpu_custom_call.1} parent=11 // pred_fallthru
          _
        // Predicated region
        $region21: #{tpu_custom_call.1} parent=11 // pred_check
          %p173 = pneg %p106
        $region22: #{tpu_custom_call.1} parent=11 // pred_check_branch
          %175 = sbr.rel (%p173) target = $region24
        $region23: #{tpu_custom_call.1} parent=11 // pred_region
          _
        $region24: #{tpu_custom_call.1} parent=11 // pred_fallthru
          _
      $region12: #{tpu_custom_call.1} parent=5 // pred_fallthru
        _
      %p176 = scmp.lt.s32.totalorder %s17, 2
      // Predicated region
      $region25: #{tpu_custom_call.1} parent=5 // pred_check
        %p177 = pneg %p176
      $region26: #{tpu_custom_call.1} parent=5 // pred_check_branch
        %179 = sbr.rel (%p177) target = $region28
      $region27: #{tpu_custom_call.1} parent=5 // pred_region
        // Predicated region
        $region29: #{tpu_custom_call.1} parent=27 // pred_check
          %p180 = pneg %p37
        $region30: #{tpu_custom_call.1} parent=27 // pred_check_branch
          %182 = sbr.rel (%p180) target = $region32
        $region31: #{tpu_custom_call.1} parent=27 // pred_region
          %s183 = sand.u32 %s27, 1
          %s184 = scalar_lea.sflag [#allocation4], %s183
          %s185 = sand.u32 %s27, 1
          %s186 = smul.addr %s185, 8
          %s187 = scalar_lea.vmem [#allocation3], %s186
          %s189 = ssub.s32 128, 128
          %190 = vsyncadd %s184, %s189
          %s191 = smul.addr %s17, 128
          %s192 = scalar_lea.hbm %s0, %s191
          %s194 = sshll.u32 %s187, 4
          %s195 = int_to_ptr.vmem [resolvable:$true] %s194
          %197 = dma.hbm_to_vmem [thread:$0]  %s192, 128, %s195, %s184
        $region32: #{tpu_custom_call.1} parent=27 // pred_fallthru
          _
      $region28: #{tpu_custom_call.1} parent=5 // pred_fallthru
        _
      %p198 = scmp.le.s32.totalorder 1, %s17
      %p199 = scmp.lt.s32.totalorder %s17, 3
      %p200 = pnand %p198, %p199
      %p201 = pneg %p200
      // Predicated region
      $region33: #{tpu_custom_call.1} parent=5 // pred_check
        _
      $region34: #{tpu_custom_call.1} parent=5 // pred_check_branch
        %203 = sbr.rel (%p200) target = $region36
      $region35: #{tpu_custom_call.1} parent=5 // pred_region
        %s204 = ssub.s32 %s17, 1
        %s205 = sand.u32 %s30, 1
        %s206 = scalar_lea.sflag [#allocation4], %s205
        %s207 = sand.u32 %s30, 1
        %s208 = smul.addr %s207, 8
        %s209 = scalar_lea.vmem [#allocation3], %s208
        // Predicated region
        $region37: #{tpu_custom_call.1} parent=35 // pred_check
          %p210 = pneg %p43
        $region38: #{tpu_custom_call.1} parent=35 // pred_check_branch
          %212 = sbr.rel (%p210) target = $region40
        $region39: #{tpu_custom_call.1} parent=35 // pred_region
          %213 = dma.done %s206, 128
        $region40: #{tpu_custom_call.1} parent=35 // pred_fallthru
          _
        // Predicated region
        $region41: #{tpu_custom_call.1} parent=35 // pred_check
          %p214 = pneg %p64
        $region42: #{tpu_custom_call.1} parent=35 // pred_check_branch
          %216 = sbr.rel (%p214) target = $region44
        $region43: #{tpu_custom_call.1} parent=35 // pred_region
          %217 = dma.done [#allocation7], 512
        $region44: #{tpu_custom_call.1} parent=35 // pred_fallthru
          _
        // Predicated region
        $region45: #{tpu_custom_call.1} parent=35 // pred_check
          %p218 = pneg %p85
        $region46: #{tpu_custom_call.1} parent=35 // pred_check_branch
          %220 = sbr.rel (%p218) target = $region48
        $region47: #{tpu_custom_call.1} parent=35 // pred_region
          %221 = dma.done [#allocation7], 512
        $region48: #{tpu_custom_call.1} parent=35 // pred_fallthru
          _
        %s222 = sand.u32 %s30, 1
        %s223 = scalar_lea.sflag [#allocation4], %s222
        %s224 = sand.u32 %s30, 1
        %s225 = smul.addr %s224, 8
        %s226 = scalar_lea.vmem [#allocation3], %s225
        %p227 = pneg %p43
        %p228 = pneg %p40
        %p229 = pneg %p64
        %p230 = pneg %p61
        %p231 = pneg %p85
        %p232 = pneg %p82
        %p233 = pneg %p106
        %p234 = pneg %p103
        %p235 = pneg %p132
        %p236 = pneg %p129
        %s237 = sand.u32 %s119, 1
        %s238 = scalar_lea.sflag [#allocation5], %s237
        %s239 = sand.u32 %s119, 1
        %s240 = smul.addr %s239, 8
        %s241 = scalar_lea.vmem [#allocation9], %s240
        %v242 = vld [vmem:[%s209] sm:$0xff]
        %v243 = vld [vmem:[#allocation6] sm:$0xff]
        %v244 = vld [vmem:[#allocation6 + $0x8] sm:$0xff]
        %v245 = vld [vmem:[#allocation6 + $0x10] sm:$0xff]
        %v246 = vld [vmem:[#allocation6 + $0x18] sm:$0xff]
        %v247 = vld [vmem:[#allocation8] sm:$0xff]
        %v248 = vld [vmem:[#allocation8 + $0x8] sm:$0xff]
        %v249 = vld [vmem:[#allocation8 + $0x10] sm:$0xff]
        %v250 = vld [vmem:[#allocation8 + $0x18] sm:$0xff]
        %vm251 = vcmask 261120
        %v253 = vsel %vm251, %v242, 0
        %255 = vmatprep.subr.mxu0 0.0
        %256 = vmatpush1.msra.mxu0 %v243
        %257 = vmatprep.subr.mxu0 0.0
        %258 = vmatpush1.msra.mxu0 %v244
        %259 = vmatprep.subr.mxu0 0.0
        %260 = vmatpush1.msra.mxu0 %v245
        %261 = vmatprep.subr.mxu0 0.0
        %262 = vmatpush1.msra.mxu0 %v246
        %263 = vmatprep.subr.mxu0 0.0
        %264 = vmatpush1.msra.mxu0 0.0
        %265 = vmatprep.subr.mxu0 0.0
        %266 = vmatpush1.msra.mxu0 0.0
        %267 = vmatprep.subr.mxu0 0.0
        %268 = vmatpush1.msra.mxu0 0.0
        %269 = vmatprep.subr.mxu0 0.0
        %270 = vmatpush1.msra.mxu0 0.0
        %271 = vmatprep.subr.mxu0 0.0
        %272 = vmatpush1.msra.mxu0 0.0
        %273 = vmatprep.subr.mxu0 0.0
        %274 = vmatpush1.msra.mxu0 0.0
        %275 = vmatprep.subr.mxu0 0.0
        %276 = vmatpush1.msra.mxu0 0.0
        %277 = vmatprep.subr.mxu0 0.0
        %278 = vmatpush1.msra.mxu0 0.0
        %279 = vmatprep.subr.mxu0 0.0
        %280 = vmatpush1.msra.mxu0 0.0
        %281 = vmatprep.subr.mxu0 0.0
        %282 = vmatpush1.msra.mxu0 0.0
        %283 = vmatprep.subr.mxu0 0.0
        %284 = vmatpush1.msra.mxu0 0.0
        %285 = vmatprep.subr.mxu0 0.0
        %286 = vmatpush1.msra.mxu0 0.0
        %287 = vmatprep.subr.mxu0 0.0
        %288 = vmatpush1.msra.mxu0 0.0
        %289 = vmatprep.subr.mxu0 0.0
        %290 = vmatpush1.msra.mxu0 0.0
        %291 = vmatprep.subr.mxu0 0.0
        %292 = vmatpush1.msra.mxu0 0.0
        %293 = vmatprep.subr.mxu0 0.0
        %294 = vmatpush1.msra.mxu0 0.0
        %295 = vmatprep.subr.mxu0 0.0
        %296 = vmatpush1.msra.mxu0 0.0
        %297 = vmatprep.subr.mxu0 0.0
        %298 = vmatpush1.msra.mxu0 0.0
        %299 = vmatprep.subr.mxu0 0.0
        %300 = vmatpush1.msra.mxu0 0.0
        %301 = vmatprep.subr.mxu0 0.0
        %302 = vmatpush1.msra.mxu0 0.0
        %303 = vmatprep.subr.mxu0 0.0
        %304 = vmatpush1.msra.mxu0 0.0
        %305 = vmatprep.subr.mxu0 0.0
        %306 = vmatpush1.msra.mxu0 0.0
        %307 = vmatprep.subr.mxu0 0.0
        %308 = vmatpush1.msra.mxu0 0.0
        %309 = vmatprep.subr.mxu0 0.0
        %310 = vmatpush1.msra.mxu0 0.0
        %311 = vmatprep.subr.mxu0 0.0
        %312 = vmatpush1.msra.mxu0 0.0
        %313 = vmatprep.subr.mxu0 0.0
        %314 = vmatpush1.msra.mxu0 0.0
        %315 = vmatprep.subr.mxu0 0.0
        %316 = vmatpush1.msra.mxu0 0.0
        %317 = vmatprep.subr.mxu0 0.0
        %318 = vmatpush1.msra.mxu0 0.0
        %319 = vmatprep.mubr.f32.mxu0 0.0
        %320 = vmatmul.mubr.f32.gmra.mrb[0].mxu0 %v253
        %v321 = vpop.f32.mrb[0].mxu0
        %v322 = vadd.f32 0.0, %v321
        %v323 = vpop.f32.mrb[0].mxu0
        %324 = vdwg.mxu0
        %326 = vrot.lane.b32.xlu0 %v322, 96
        %v327 = vpop.permute.xlu0 %326
        %vm328 = vcmask 31744
        %v329 = vsel %vm328, %v322, 0
        %v331 = vsel %vm328, %v327, 0
        %333 = vmatprep.subr.mxu0 0.0
        %334 = vmatpush1.xpose.msra.mxu0 %v331
        %335 = vmatprep.subr.mxu0 0.0
        %336 = vmatpush1.xpose.msra.mxu0 0.0
        %337 = vmatprep.subr.mxu0 0.0
        %338 = vmatpush1.xpose.msra.mxu0 0.0
        %339 = vmatprep.subr.mxu0 0.0
        %340 = vmatpush1.xpose.msra.mxu0 0.0
        %341 = vmatprep.subr.mxu0 0.0
        %342 = vmatpush1.xpose.msra.mxu0 0.0
        %343 = vmatprep.subr.mxu0 0.0
        %344 = vmatpush1.xpose.msra.mxu0 0.0
        %345 = vmatprep.subr.mxu0 0.0
        %346 = vmatpush1.xpose.msra.mxu0 0.0
        %347 = vmatprep.subr.mxu0 0.0
        %348 = vmatpush1.xpose.msra.mxu0 0.0
        %349 = vmatprep.subr.mxu0 0.0
        %350 = vmatpush1.xpose.msra.mxu0 0.0
        %351 = vmatprep.subr.mxu0 0.0
        %352 = vmatpush1.xpose.msra.mxu0 0.0
        %353 = vmatprep.subr.mxu0 0.0
        %354 = vmatpush1.xpose.msra.mxu0 0.0
        %355 = vmatprep.subr.mxu0 0.0
        %356 = vmatpush1.xpose.msra.mxu0 0.0
        %357 = vmatprep.subr.mxu0 0.0
        %358 = vmatpush1.xpose.msra.mxu0 0.0
        %359 = vmatprep.subr.mxu0 0.0
        %360 = vmatpush1.xpose.msra.mxu0 0.0
        %361 = vmatprep.subr.mxu0 0.0
        %362 = vmatpush1.xpose.msra.mxu0 0.0
        %363 = vmatprep.subr.mxu0 0.0
        %364 = vmatpush1.xpose.msra.mxu0 0.0
        %365 = vmatprep.subr.mxu0 0.0
        %366 = vmatpush1.xpose.msra.mxu0 0.0
        %367 = vmatprep.subr.mxu0 0.0
        %368 = vmatpush1.xpose.msra.mxu0 0.0
        %369 = vmatprep.subr.mxu0 0.0
        %370 = vmatpush1.xpose.msra.mxu0 0.0
        %371 = vmatprep.subr.mxu0 0.0
        %372 = vmatpush1.xpose.msra.mxu0 0.0
        %373 = vmatprep.subr.mxu0 0.0
        %374 = vmatpush1.xpose.msra.mxu0 0.0
        %375 = vmatprep.subr.mxu0 0.0
        %376 = vmatpush1.xpose.msra.mxu0 0.0
        %377 = vmatprep.subr.mxu0 0.0
        %378 = vmatpush1.xpose.msra.mxu0 0.0
        %379 = vmatprep.subr.mxu0 0.0
        %380 = vmatpush1.xpose.msra.mxu0 0.0
        %381 = vmatprep.subr.mxu0 0.0
        %382 = vmatpush1.xpose.msra.mxu0 0.0
        %383 = vmatprep.subr.mxu0 0.0
        %384 = vmatpush1.xpose.msra.mxu0 0.0
        %385 = vmatprep.subr.mxu0 0.0
        %386 = vmatpush1.xpose.msra.mxu0 0.0
        %387 = vmatprep.subr.mxu0 0.0
        %388 = vmatpush1.xpose.msra.mxu0 0.0
        %389 = vmatprep.subr.mxu0 0.0
        %390 = vmatpush1.xpose.msra.mxu0 0.0
        %391 = vmatprep.subr.mxu0 0.0
        %392 = vmatpush1.xpose.msra.mxu0 0.0
        %393 = vmatprep.subr.mxu0 0.0
        %394 = vmatpush1.xpose.msra.mxu0 0.0
        %395 = vmatprep.subr.mxu0 0.0
        %396 = vmatpush1.xpose.msra.mxu0 0.0
        %397 = vmatprep.mubr.f32.mxu0 0.0
        %398 = vmatmul.mubr.f32.gmra.mrb[0].mxu0 %v329
        %v399 = vpop.f32.mrb[0].mxu0
        %v400 = vadd.f32 0.0, %v399
        %v401 = vpop.f32.mrb[0].mxu0
        %402 = vdwg.mxu0
        %vm403 = vcmask 64512
        %v404 = vsel %vm403, %v400, -inf
        %405 = vmax.xlane.f32.xlu0 %v404
        %v406 = vpop.xlane.xlu0 %405
        %v407 = vsub.f32 %v400, %v406
        %v408 = vmul.f32 %v407, 1.442695
        %v409 = vpow.pop %v408
        %v410 = vsel %vm403, %v409, 0.0
        %411 = vadd.xlane.f32.xlu0 %v410
        %v412 = vpop.xlane.xlu0 %411
        %413 = vrot.lane.b32.xlu0 %v322, 64
        %v414 = vpop.permute.xlu0 %413
        %v417 = vsel %vm403, %v409, 0
        %419 = vmatprep.subr.mxu0 0.0
        %420 = vmatpush1.msra.mxu0 %v414
        %421 = vmatprep.subr.mxu0 0.0
        %422 = vmatpush1.msra.mxu0 0.0
        %423 = vmatprep.subr.mxu0 0.0
        %424 = vmatpush1.msra.mxu0 0.0
        %425 = vmatprep.subr.mxu0 0.0
        %426 = vmatpush1.msra.mxu0 0.0
        %427 = vmatprep.subr.mxu0 0.0
        %428 = vmatpush1.msra.mxu0 0.0
        %429 = vmatprep.subr.mxu0 0.0
        %430 = vmatpush1.msra.mxu0 0.0
        %431 = vmatprep.subr.mxu0 0.0
        %432 = vmatpush1.msra.mxu0 0.0
        %433 = vmatprep.subr.mxu0 0.0
        %434 = vmatpush1.msra.mxu0 0.0
        %435 = vmatprep.subr.mxu0 0.0
        %436 = vmatpush1.msra.mxu0 0.0
        %437 = vmatprep.subr.mxu0 0.0
        %438 = vmatpush1.msra.mxu0 0.0
        %439 = vmatprep.subr.mxu0 0.0
        %440 = vmatpush1.msra.mxu0 0.0
        %441 = vmatprep.subr.mxu0 0.0
        %442 = vmatpush1.msra.mxu0 0.0
        %443 = vmatprep.subr.mxu0 0.0
        %444 = vmatpush1.msra.mxu0 0.0
        %445 = vmatprep.subr.mxu0 0.0
        %446 = vmatpush1.msra.mxu0 0.0
        %447 = vmatprep.subr.mxu0 0.0
        %448 = vmatpush1.msra.mxu0 0.0
        %449 = vmatprep.subr.mxu0 0.0
        %450 = vmatpush1.msra.mxu0 0.0
        %451 = vmatprep.subr.mxu0 0.0
        %452 = vmatpush1.msra.mxu0 0.0
        %453 = vmatprep.subr.mxu0 0.0
        %454 = vmatpush1.msra.mxu0 0.0
        %455 = vmatprep.subr.mxu0 0.0
        %456 = vmatpush1.msra.mxu0 0.0
        %457 = vmatprep.subr.mxu0 0.0
        %458 = vmatpush1.msra.mxu0 0.0
        %459 = vmatprep.subr.mxu0 0.0
        %460 = vmatpush1.msra.mxu0 0.0
        %461 = vmatprep.subr.mxu0 0.0
        %462 = vmatpush1.msra.mxu0 0.0
        %463 = vmatprep.subr.mxu0 0.0
        %464 = vmatpush1.msra.mxu0 0.0
        %465 = vmatprep.subr.mxu0 0.0
        %466 = vmatpush1.msra.mxu0 0.0
        %467 = vmatprep.subr.mxu0 0.0
        %468 = vmatpush1.msra.mxu0 0.0
        %469 = vmatprep.subr.mxu0 0.0
        %470 = vmatpush1.msra.mxu0 0.0
        %471 = vmatprep.subr.mxu0 0.0
        %472 = vmatpush1.msra.mxu0 0.0
        %473 = vmatprep.subr.mxu0 0.0
        %474 = vmatpush1.msra.mxu0 0.0
        %475 = vmatprep.subr.mxu0 0.0
        %476 = vmatpush1.msra.mxu0 0.0
        %477 = vmatprep.subr.mxu0 0.0
        %478 = vmatpush1.msra.mxu0 0.0
        %479 = vmatprep.subr.mxu0 0.0
        %480 = vmatpush1.msra.mxu0 0.0
        %481 = vmatprep.subr.mxu0 0.0
        %482 = vmatpush1.msra.mxu0 0.0
        %483 = vmatprep.mubr.f32.mxu0 0.0
        %484 = vmatmul.mubr.f32.gmra.mrb[0].mxu0 %v417
        %v485 = vpop.f32.mrb[0].mxu0
        %v486 = vadd.f32 0.0, %v485
        %v487 = vpop.f32.mrb[0].mxu0
        %488 = vdwg.mxu0
        %v489 = vrcp.pop %v412
        %v490 = vmul.f32 %v486, %v489
        %491 = vrot.lane.b32.xlu0 %v322, 124
        %v492 = vpop.permute.xlu0 %491
        %493 = vrot.lane.b32.xlu0 %v322, 92
        %v494 = vpop.permute.xlu0 %493
        %v495 = vsel %vm328, %v492, 0
        %v497 = vsel %vm328, %v494, 0
        %499 = vmatprep.subr.mxu0 0.0
        %500 = vmatpush1.xpose.msra.mxu0 %v497
        %501 = vmatprep.subr.mxu0 0.0
        %502 = vmatpush1.xpose.msra.mxu0 0.0
        %503 = vmatprep.subr.mxu0 0.0
        %504 = vmatpush1.xpose.msra.mxu0 0.0
        %505 = vmatprep.subr.mxu0 0.0
        %506 = vmatpush1.xpose.msra.mxu0 0.0
        %507 = vmatprep.subr.mxu0 0.0
        %508 = vmatpush1.xpose.msra.mxu0 0.0
        %509 = vmatprep.subr.mxu0 0.0
        %510 = vmatpush1.xpose.msra.mxu0 0.0
        %511 = vmatprep.subr.mxu0 0.0
        %512 = vmatpush1.xpose.msra.mxu0 0.0
        %513 = vmatprep.subr.mxu0 0.0
        %514 = vmatpush1.xpose.msra.mxu0 0.0
        %515 = vmatprep.subr.mxu0 0.0
        %516 = vmatpush1.xpose.msra.mxu0 0.0
        %517 = vmatprep.subr.mxu0 0.0
        %518 = vmatpush1.xpose.msra.mxu0 0.0
        %519 = vmatprep.subr.mxu0 0.0
        %520 = vmatpush1.xpose.msra.mxu0 0.0
        %521 = vmatprep.subr.mxu0 0.0
        %522 = vmatpush1.xpose.msra.mxu0 0.0
        %523 = vmatprep.subr.mxu0 0.0
        %524 = vmatpush1.xpose.msra.mxu0 0.0
        %525 = vmatprep.subr.mxu0 0.0
        %526 = vmatpush1.xpose.msra.mxu0 0.0
        %527 = vmatprep.subr.mxu0 0.0
        %528 = vmatpush1.xpose.msra.mxu0 0.0
        %529 = vmatprep.subr.mxu0 0.0
        %530 = vmatpush1.xpose.msra.mxu0 0.0
        %531 = vmatprep.subr.mxu0 0.0
        %532 = vmatpush1.xpose.msra.mxu0 0.0
        %533 = vmatprep.subr.mxu0 0.0
        %534 = vmatpush1.xpose.msra.mxu0 0.0
        %535 = vmatprep.subr.mxu0 0.0
        %536 = vmatpush1.xpose.msra.mxu0 0.0
        %537 = vmatprep.subr.mxu0 0.0
        %538 = vmatpush1.xpose.msra.mxu0 0.0
        %539 = vmatprep.subr.mxu0 0.0
        %540 = vmatpush1.xpose.msra.mxu0 0.0
        %541 = vmatprep.subr.mxu0 0.0
        %542 = vmatpush1.xpose.msra.mxu0 0.0
        %543 = vmatprep.subr.mxu0 0.0
        %544 = vmatpush1.xpose.msra.mxu0 0.0
        %545 = vmatprep.subr.mxu0 0.0
        %546 = vmatpush1.xpose.msra.mxu0 0.0
        %547 = vmatprep.subr.mxu0 0.0
        %548 = vmatpush1.xpose.msra.mxu0 0.0
        %549 = vmatprep.subr.mxu0 0.0
        %550 = vmatpush1.xpose.msra.mxu0 0.0
        %551 = vmatprep.subr.mxu0 0.0
        %552 = vmatpush1.xpose.msra.mxu0 0.0
        %553 = vmatprep.subr.mxu0 0.0
        %554 = vmatpush1.xpose.msra.mxu0 0.0
        %555 = vmatprep.subr.mxu0 0.0
        %556 = vmatpush1.xpose.msra.mxu0 0.0
        %557 = vmatprep.subr.mxu0 0.0
        %558 = vmatpush1.xpose.msra.mxu0 0.0
        %559 = vmatprep.subr.mxu0 0.0
        %560 = vmatpush1.xpose.msra.mxu0 0.0
        %561 = vmatprep.subr.mxu0 0.0
        %562 = vmatpush1.xpose.msra.mxu0 0.0
        %563 = vmatprep.mubr.f32.mxu0 0.0
        %564 = vmatmul.mubr.f32.gmra.mrb[0].mxu0 %v495
        %v565 = vpop.f32.mrb[0].mxu0
        %v566 = vadd.f32 0.0, %v565
        %v567 = vpop.f32.mrb[0].mxu0
        %568 = vdwg.mxu0
        %v569 = vsel %vm403, %v566, -inf
        %570 = vmax.xlane.f32.xlu0 %v569
        %v571 = vpop.xlane.xlu0 %570
        %v572 = vsub.f32 %v566, %v571
        %v573 = vmul.f32 %v572, 1.442695
        %v574 = vpow.pop %v573
        %v575 = vsel %vm403, %v574, 0.0
        %576 = vadd.xlane.f32.xlu0 %v575
        %v577 = vpop.xlane.xlu0 %576
        %578 = vrot.lane.b32.xlu0 %v322, 60
        %v579 = vpop.permute.xlu0 %578
        %v582 = vsel %vm403, %v574, 0
        %584 = vmatprep.subr.mxu0 0.0
        %585 = vmatpush1.msra.mxu0 %v579
        %586 = vmatprep.subr.mxu0 0.0
        %587 = vmatpush1.msra.mxu0 0.0
        %588 = vmatprep.subr.mxu0 0.0
        %589 = vmatpush1.msra.mxu0 0.0
        %590 = vmatprep.subr.mxu0 0.0
        %591 = vmatpush1.msra.mxu0 0.0
        %592 = vmatprep.subr.mxu0 0.0
        %593 = vmatpush1.msra.mxu0 0.0
        %594 = vmatprep.subr.mxu0 0.0
        %595 = vmatpush1.msra.mxu0 0.0
        %596 = vmatprep.subr.mxu0 0.0
        %597 = vmatpush1.msra.mxu0 0.0
        %598 = vmatprep.subr.mxu0 0.0
        %599 = vmatpush1.msra.mxu0 0.0
        %600 = vmatprep.subr.mxu0 0.0
        %601 = vmatpush1.msra.mxu0 0.0
        %602 = vmatprep.subr.mxu0 0.0
        %603 = vmatpush1.msra.mxu0 0.0
        %604 = vmatprep.subr.mxu0 0.0
        %605 = vmatpush1.msra.mxu0 0.0
        %606 = vmatprep.subr.mxu0 0.0
        %607 = vmatpush1.msra.mxu0 0.0
        %608 = vmatprep.subr.mxu0 0.0
        %609 = vmatpush1.msra.mxu0 0.0
        %610 = vmatprep.subr.mxu0 0.0
        %611 = vmatpush1.msra.mxu0 0.0
        %612 = vmatprep.subr.mxu0 0.0
        %613 = vmatpush1.msra.mxu0 0.0
        %614 = vmatprep.subr.mxu0 0.0
        %615 = vmatpush1.msra.mxu0 0.0
        %616 = vmatprep.subr.mxu0 0.0
        %617 = vmatpush1.msra.mxu0 0.0
        %618 = vmatprep.subr.mxu0 0.0
        %619 = vmatpush1.msra.mxu0 0.0
        %620 = vmatprep.subr.mxu0 0.0
        %621 = vmatpush1.msra.mxu0 0.0
        %622 = vmatprep.subr.mxu0 0.0
        %623 = vmatpush1.msra.mxu0 0.0
        %624 = vmatprep.subr.mxu0 0.0
        %625 = vmatpush1.msra.mxu0 0.0
        %626 = vmatprep.subr.mxu0 0.0
        %627 = vmatpush1.msra.mxu0 0.0
        %628 = vmatprep.subr.mxu0 0.0
        %629 = vmatpush1.msra.mxu0 0.0
        %630 = vmatprep.subr.mxu0 0.0
        %631 = vmatpush1.msra.mxu0 0.0
        %632 = vmatprep.subr.mxu0 0.0
        %633 = vmatpush1.msra.mxu0 0.0
        %634 = vmatprep.subr.mxu0 0.0
        %635 = vmatpush1.msra.mxu0 0.0
        %636 = vmatprep.subr.mxu0 0.0
        %637 = vmatpush1.msra.mxu0 0.0
        %638 = vmatprep.subr.mxu0 0.0
        %639 = vmatpush1.msra.mxu0 0.0
        %640 = vmatprep.subr.mxu0 0.0
        %641 = vmatpush1.msra.mxu0 0.0
        %642 = vmatprep.subr.mxu0 0.0
        %643 = vmatpush1.msra.mxu0 0.0
        %644 = vmatprep.subr.mxu0 0.0
        %645 = vmatpush1.msra.mxu0 0.0
        %646 = vmatprep.subr.mxu0 0.0
        %647 = vmatpush1.msra.mxu0 0.0
        %648 = vmatprep.mubr.f32.mxu0 0.0
        %649 = vmatmul.mubr.f32.gmra.mrb[0].mxu0 %v582
        %v650 = vpop.f32.mrb[0].mxu0
        %v651 = vadd.f32 0.0, %v650
        %v652 = vpop.f32.mrb[0].mxu0
        %653 = vdwg.mxu0
        %v654 = vrcp.pop %v577
        %v655 = vmul.f32 %v651, %v654
        %656 = vrot.lane.b32.xlu0 %v322, 120
        %v657 = vpop.permute.xlu0 %656
        %658 = vrot.lane.b32.xlu0 %v322, 88
        %v659 = vpop.permute.xlu0 %658
        %v660 = vsel %vm328, %v657, 0
        %v662 = vsel %vm328, %v659, 0
        %664 = vmatprep.subr.mxu0 0.0
        %665 = vmatpush1.xpose.msra.mxu0 %v662
        %666 = vmatprep.subr.mxu0 0.0
        %667 = vmatpush1.xpose.msra.mxu0 0.0
        %668 = vmatprep.subr.mxu0 0.0
        %669 = vmatpush1.xpose.msra.mxu0 0.0
        %670 = vmatprep.subr.mxu0 0.0
        %671 = vmatpush1.xpose.msra.mxu0 0.0
        %672 = vmatprep.subr.mxu0 0.0
        %673 = vmatpush1.xpose.msra.mxu0 0.0
        %674 = vmatprep.subr.mxu0 0.0
        %675 = vmatpush1.xpose.msra.mxu0 0.0
        %676 = vmatprep.subr.mxu0 0.0
        %677 = vmatpush1.xpose.msra.mxu0 0.0
        %678 = vmatprep.subr.mxu0 0.0
        %679 = vmatpush1.xpose.msra.mxu0 0.0
        %680 = vmatprep.subr.mxu0 0.0
        %681 = vmatpush1.xpose.msra.mxu0 0.0
        %682 = vmatprep.subr.mxu0 0.0
        %683 = vmatpush1.xpose.msra.mxu0 0.0
        %684 = vmatprep.subr.mxu0 0.0
        %685 = vmatpush1.xpose.msra.mxu0 0.0
        %686 = vmatprep.subr.mxu0 0.0
        %687 = vmatpush1.xpose.msra.mxu0 0.0
        %688 = vmatprep.subr.mxu0 0.0
        %689 = vmatpush1.xpose.msra.mxu0 0.0
        %690 = vmatprep.subr.mxu0 0.0
        %691 = vmatpush1.xpose.msra.mxu0 0.0
        %692 = vmatprep.subr.mxu0 0.0
        %693 = vmatpush1.xpose.msra.mxu0 0.0
        %694 = vmatprep.subr.mxu0 0.0
        %695 = vmatpush1.xpose.msra.mxu0 0.0
        %696 = vmatprep.subr.mxu0 0.0
        %697 = vmatpush1.xpose.msra.mxu0 0.0
        %698 = vmatprep.subr.mxu0 0.0
        %699 = vmatpush1.xpose.msra.mxu0 0.0
        %700 = vmatprep.subr.mxu0 0.0
        %701 = vmatpush1.xpose.msra.mxu0 0.0
        %702 = vmatprep.subr.mxu0 0.0
        %703 = vmatpush1.xpose.msra.mxu0 0.0
        %704 = vmatprep.subr.mxu0 0.0
        %705 = vmatpush1.xpose.msra.mxu0 0.0
        %706 = vmatprep.subr.mxu0 0.0
        %707 = vmatpush1.xpose.msra.mxu0 0.0
        %708 = vmatprep.subr.mxu0 0.0
        %709 = vmatpush1.xpose.msra.mxu0 0.0
        %710 = vmatprep.subr.mxu0 0.0
        %711 = vmatpush1.xpose.msra.mxu0 0.0
        %712 = vmatprep.subr.mxu0 0.0
        %713 = vmatpush1.xpose.msra.mxu0 0.0
        %714 = vmatprep.subr.mxu0 0.0
        %715 = vmatpush1.xpose.msra.mxu0 0.0
        %716 = vmatprep.subr.mxu0 0.0
        %717 = vmatpush1.xpose.msra.mxu0 0.0
        %718 = vmatprep.subr.mxu0 0.0
        %719 = vmatpush1.xpose.msra.mxu0 0.0
        %720 = vmatprep.subr.mxu0 0.0
        %721 = vmatpush1.xpose.msra.mxu0 0.0
        %722 = vmatprep.subr.mxu0 0.0
        %723 = vmatpush1.xpose.msra.mxu0 0.0
        %724 = vmatprep.subr.mxu0 0.0
        %725 = vmatpush1.xpose.msra.mxu0 0.0
        %726 = vmatprep.subr.mxu0 0.0
        %727 = vmatpush1.xpose.msra.mxu0 0.0
        %728 = vmatprep.mubr.f32.mxu0 0.0
        %729 = vmatmul.mubr.f32.gmra.mrb[0].mxu0 %v660
        %v730 = vpop.f32.mrb[0].mxu0
        %v731 = vadd.f32 0.0, %v730
        %v732 = vpop.f32.mrb[0].mxu0
        %733 = vdwg.mxu0
        %v734 = vsel %vm403, %v731, -inf
        %735 = vmax.xlane.f32.xlu0 %v734
        %v736 = vpop.xlane.xlu0 %735
        %v737 = vsub.f32 %v731, %v736
        %v738 = vmul.f32 %v737, 1.442695
        %v739 = vpow.pop %v738
        %v740 = vsel %vm403, %v739, 0.0
        %741 = vadd.xlane.f32.xlu0 %v740
        %v742 = vpop.xlane.xlu0 %741
        %743 = vrot.lane.b32.xlu0 %v322, 56
        %v744 = vpop.permute.xlu0 %743
        %v747 = vsel %vm403, %v739, 0
        %749 = vmatprep.subr.mxu0 0.0
        %750 = vmatpush1.msra.mxu0 %v744
        %751 = vmatprep.subr.mxu0 0.0
        %752 = vmatpush1.msra.mxu0 0.0
        %753 = vmatprep.subr.mxu0 0.0
        %754 = vmatpush1.msra.mxu0 0.0
        %755 = vmatprep.subr.mxu0 0.0
        %756 = vmatpush1.msra.mxu0 0.0
        %757 = vmatprep.subr.mxu0 0.0
        %758 = vmatpush1.msra.mxu0 0.0
        %759 = vmatprep.subr.mxu0 0.0
        %760 = vmatpush1.msra.mxu0 0.0
        %761 = vmatprep.subr.mxu0 0.0
        %762 = vmatpush1.msra.mxu0 0.0
        %763 = vmatprep.subr.mxu0 0.0
        %764 = vmatpush1.msra.mxu0 0.0
        %765 = vmatprep.subr.mxu0 0.0
        %766 = vmatpush1.msra.mxu0 0.0
        %767 = vmatprep.subr.mxu0 0.0
        %768 = vmatpush1.msra.mxu0 0.0
        %769 = vmatprep.subr.mxu0 0.0
        %770 = vmatpush1.msra.mxu0 0.0
        %771 = vmatprep.subr.mxu0 0.0
        %772 = vmatpush1.msra.mxu0 0.0
        %773 = vmatprep.subr.mxu0 0.0
        %774 = vmatpush1.msra.mxu0 0.0
        %775 = vmatprep.subr.mxu0 0.0
        %776 = vmatpush1.msra.mxu0 0.0
        %777 = vmatprep.subr.mxu0 0.0
        %778 = vmatpush1.msra.mxu0 0.0
        %779 = vmatprep.subr.mxu0 0.0
        %780 = vmatpush1.msra.mxu0 0.0
        %781 = vmatprep.subr.mxu0 0.0
        %782 = vmatpush1.msra.mxu0 0.0
        %783 = vmatprep.subr.mxu0 0.0
        %784 = vmatpush1.msra.mxu0 0.0
        %785 = vmatprep.subr.mxu0 0.0
        %786 = vmatpush1.msra.mxu0 0.0
        %787 = vmatprep.subr.mxu0 0.0
        %788 = vmatpush1.msra.mxu0 0.0
        %789 = vmatprep.subr.mxu0 0.0
        %790 = vmatpush1.msra.mxu0 0.0
        %791 = vmatprep.subr.mxu0 0.0
        %792 = vmatpush1.msra.mxu0 0.0
        %793 = vmatprep.subr.mxu0 0.0
        %794 = vmatpush1.msra.mxu0 0.0
        %795 = vmatprep.subr.mxu0 0.0
        %796 = vmatpush1.msra.mxu0 0.0
        %797 = vmatprep.subr.mxu0 0.0
        %798 = vmatpush1.msra.mxu0 0.0
        %799 = vmatprep.subr.mxu0 0.0
        %800 = vmatpush1.msra.mxu0 0.0
        %801 = vmatprep.subr.mxu0 0.0
        %802 = vmatpush1.msra.mxu0 0.0
        %803 = vmatprep.subr.mxu0 0.0
        %804 = vmatpush1.msra.mxu0 0.0
        %805 = vmatprep.subr.mxu0 0.0
        %806 = vmatpush1.msra.mxu0 0.0
        %807 = vmatprep.subr.mxu0 0.0
        %808 = vmatpush1.msra.mxu0 0.0
        %809 = vmatprep.subr.mxu0 0.0
        %810 = vmatpush1.msra.mxu0 0.0
        %811 = vmatprep.subr.mxu0 0.0
        %812 = vmatpush1.msra.mxu0 0.0
        %813 = vmatprep.mubr.f32.mxu0 0.0
        %814 = vmatmul.mubr.f32.gmra.mrb[0].mxu0 %v747
        %v815 = vpop.f32.mrb[0].mxu0
        %v816 = vadd.f32 0.0, %v815
        %v817 = vpop.f32.mrb[0].mxu0
        %818 = vdwg.mxu0
        %v819 = vrcp.pop %v742
        %v820 = vmul.f32 %v816, %v819
        %821 = vrot.lane.b32.xlu0 %v322, 116
        %v822 = vpop.permute.xlu0 %821
        %823 = vrot.lane.b32.xlu0 %v322, 84
        %v824 = vpop.permute.xlu0 %823
        %v825 = vsel %vm328, %v822, 0
        %v827 = vsel %vm328, %v824, 0
        %829 = vmatprep.subr.mxu0 0.0
        %830 = vmatpush1.xpose.msra.mxu0 %v827
        %831 = vmatprep.subr.mxu0 0.0
        %832 = vmatpush1.xpose.msra.mxu0 0.0
        %833 = vmatprep.subr.mxu0 0.0
        %834 = vmatpush1.xpose.msra.mxu0 0.0
        %835 = vmatprep.subr.mxu0 0.0
        %836 = vmatpush1.xpose.msra.mxu0 0.0
        %837 = vmatprep.subr.mxu0 0.0
        %838 = vmatpush1.xpose.msra.mxu0 0.0
        %839 = vmatprep.subr.mxu0 0.0
        %840 = vmatpush1.xpose.msra.mxu0 0.0
        %841 = vmatprep.subr.mxu0 0.0
        %842 = vmatpush1.xpose.msra.mxu0 0.0
        %843 = vmatprep.subr.mxu0 0.0
        %844 = vmatpush1.xpose.msra.mxu0 0.0
        %845 = vmatprep.subr.mxu0 0.0
        %846 = vmatpush1.xpose.msra.mxu0 0.0
        %847 = vmatprep.subr.mxu0 0.0
        %848 = vmatpush1.xpose.msra.mxu0 0.0
        %849 = vmatprep.subr.mxu0 0.0
        %850 = vmatpush1.xpose.msra.mxu0 0.0
        %851 = vmatprep.subr.mxu0 0.0
        %852 = vmatpush1.xpose.msra.mxu0 0.0
        %853 = vmatprep.subr.mxu0 0.0
        %854 = vmatpush1.xpose.msra.mxu0 0.0
        %855 = vmatprep.subr.mxu0 0.0
        %856 = vmatpush1.xpose.msra.mxu0 0.0
        %857 = vmatprep.subr.mxu0 0.0
        %858 = vmatpush1.xpose.msra.mxu0 0.0
        %859 = vmatprep.subr.mxu0 0.0
        %860 = vmatpush1.xpose.msra.mxu0 0.0
        %861 = vmatprep.subr.mxu0 0.0
        %862 = vmatpush1.xpose.msra.mxu0 0.0
        %863 = vmatprep.subr.mxu0 0.0
        %864 = vmatpush1.xpose.msra.mxu0 0.0
        %865 = vmatprep.subr.mxu0 0.0
        %866 = vmatpush1.xpose.msra.mxu0 0.0
        %867 = vmatprep.subr.mxu0 0.0
        %868 = vmatpush1.xpose.msra.mxu0 0.0
        %869 = vmatprep.subr.mxu0 0.0
        %870 = vmatpush1.xpose.msra.mxu0 0.0
        %871 = vmatprep.subr.mxu0 0.0
        %872 = vmatpush1.xpose.msra.mxu0 0.0
        %873 = vmatprep.subr.mxu0 0.0
        %874 = vmatpush1.xpose.msra.mxu0 0.0
        %875 = vmatprep.subr.mxu0 0.0
        %876 = vmatpush1.xpose.msra.mxu0 0.0
        %877 = vmatprep.subr.mxu0 0.0
        %878 = vmatpush1.xpose.msra.mxu0 0.0
        %879 = vmatprep.subr.mxu0 0.0
        %880 = vmatpush1.xpose.msra.mxu0 0.0
        %881 = vmatprep.subr.mxu0 0.0
        %882 = vmatpush1.xpose.msra.mxu0 0.0
        %883 = vmatprep.subr.mxu0 0.0
        %884 = vmatpush1.xpose.msra.mxu0 0.0
        %885 = vmatprep.subr.mxu0 0.0
        %886 = vmatpush1.xpose.msra.mxu0 0.0
        %887 = vmatprep.subr.mxu0 0.0
        %888 = vmatpush1.xpose.msra.mxu0 0.0
        %889 = vmatprep.subr.mxu0 0.0
        %890 = vmatpush1.xpose.msra.mxu0 0.0
        %891 = vmatprep.subr.mxu0 0.0
        %892 = vmatpush1.xpose.msra.mxu0 0.0
        %893 = vmatprep.mubr.f32.mxu0 0.0
        %894 = vmatmul.mubr.f32.gmra.mrb[0].mxu0 %v825
        %v895 = vpop.f32.mrb[0].mxu0
        %v896 = vadd.f32 0.0, %v895
        %v897 = vpop.f32.mrb[0].mxu0
        %898 = vdwg.mxu0
        %v899 = vsel %vm403, %v896, -inf
        %900 = vmax.xlane.f32.xlu0 %v899
        %v901 = vpop.xlane.xlu0 %900
        %v902 = vsub.f32 %v896, %v901
        %v903 = vmul.f32 %v902, 1.442695
        %v904 = vpow.pop %v903
        %v905 = vsel %vm403, %v904, 0.0
        %906 = vadd.xlane.f32.xlu0 %v905
        %v907 = vpop.xlane.xlu0 %906
        %908 = vrot.lane.b32.xlu0 %v322, 52
        %v909 = vpop.permute.xlu0 %908
        %v912 = vsel %vm403, %v904, 0
        %914 = vmatprep.subr.mxu0 0.0
        %915 = vmatpush1.msra.mxu0 %v909
        %916 = vmatprep.subr.mxu0 0.0
        %917 = vmatpush1.msra.mxu0 0.0
        %918 = vmatprep.subr.mxu0 0.0
        %919 = vmatpush1.msra.mxu0 0.0
        %920 = vmatprep.subr.mxu0 0.0
        %921 = vmatpush1.msra.mxu0 0.0
        %922 = vmatprep.subr.mxu0 0.0
        %923 = vmatpush1.msra.mxu0 0.0
        %924 = vmatprep.subr.mxu0 0.0
        %925 = vmatpush1.msra.mxu0 0.0
        %926 = vmatprep.subr.mxu0 0.0
        %927 = vmatpush1.msra.mxu0 0.0
        %928 = vmatprep.subr.mxu0 0.0
        %929 = vmatpush1.msra.mxu0 0.0
        %930 = vmatprep.subr.mxu0 0.0
        %931 = vmatpush1.msra.mxu0 0.0
        %932 = vmatprep.subr.mxu0 0.0
        %933 = vmatpush1.msra.mxu0 0.0
        %934 = vmatprep.subr.mxu0 0.0
        %935 = vmatpush1.msra.mxu0 0.0
        %936 = vmatprep.subr.mxu0 0.0
        %937 = vmatpush1.msra.mxu0 0.0
        %938 = vmatprep.subr.mxu0 0.0
        %939 = vmatpush1.msra.mxu0 0.0
        %940 = vmatprep.subr.mxu0 0.0
        %941 = vmatpush1.msra.mxu0 0.0
        %942 = vmatprep.subr.mxu0 0.0
        %943 = vmatpush1.msra.mxu0 0.0
        %944 = vmatprep.subr.mxu0 0.0
        %945 = vmatpush1.msra.mxu0 0.0
        %946 = vmatprep.subr.mxu0 0.0
        %947 = vmatpush1.msra.mxu0 0.0
        %948 = vmatprep.subr.mxu0 0.0
        %949 = vmatpush1.msra.mxu0 0.0
        %950 = vmatprep.subr.mxu0 0.0
        %951 = vmatpush1.msra.mxu0 0.0
        %952 = vmatprep.subr.mxu0 0.0
        %953 = vmatpush1.msra.mxu0 0.0
        %954 = vmatprep.subr.mxu0 0.0
        %955 = vmatpush1.msra.mxu0 0.0
        %956 = vmatprep.subr.mxu0 0.0
        %957 = vmatpush1.msra.mxu0 0.0
        %958 = vmatprep.subr.mxu0 0.0
        %959 = vmatpush1.msra.mxu0 0.0
        %960 = vmatprep.subr.mxu0 0.0
        %961 = vmatpush1.msra.mxu0 0.0
        %962 = vmatprep.subr.mxu0 0.0
        %963 = vmatpush1.msra.mxu0 0.0
        %964 = vmatprep.subr.mxu0 0.0
        %965 = vmatpush1.msra.mxu0 0.0
        %966 = vmatprep.subr.mxu0 0.0
        %967 = vmatpush1.msra.mxu0 0.0
        %968 = vmatprep.subr.mxu0 0.0
        %969 = vmatpush1.msra.mxu0 0.0
        %970 = vmatprep.subr.mxu0 0.0
        %971 = vmatpush1.msra.mxu0 0.0
        %972 = vmatprep.subr.mxu0 0.0
        %973 = vmatpush1.msra.mxu0 0.0
        %974 = vmatprep.subr.mxu0 0.0
        %975 = vmatpush1.msra.mxu0 0.0
        %976 = vmatprep.subr.mxu0 0.0
        %977 = vmatpush1.msra.mxu0 0.0
        %978 = vmatprep.mubr.f32.mxu0 0.0
        %979 = vmatmul.mubr.f32.gmra.mrb[0].mxu0 %v912
        %v980 = vpop.f32.mrb[0].mxu0
        %v981 = vadd.f32 0.0, %v980
        %v982 = vpop.f32.mrb[0].mxu0
        %983 = vdwg.mxu0
        %v984 = vrcp.pop %v907
        %v985 = vmul.f32 %v981, %v984
        %986 = vrot.lane.b32.xlu0 %v322, 112
        %v987 = vpop.permute.xlu0 %986
        %988 = vrot.lane.b32.xlu0 %v322, 80
        %v989 = vpop.permute.xlu0 %988
        %v990 = vsel %vm328, %v987, 0
        %v992 = vsel %vm328, %v989, 0
        %994 = vmatprep.subr.mxu0 0.0
        %995 = vmatpush1.xpose.msra.mxu0 %v992
        %996 = vmatprep.subr.mxu0 0.0
        %997 = vmatpush1.xpose.msra.mxu0 0.0
        %998 = vmatprep.subr.mxu0 0.0
        %999 = vmatpush1.xpose.msra.mxu0 0.0
        %1000 = vmatprep.subr.mxu0 0.0
        %1001 = vmatpush1.xpose.msra.mxu0 0.0
        %1002 = vmatprep.subr.mxu0 0.0
        %1003 = vmatpush1.xpose.msra.mxu0 0.0
        %1004 = vmatprep.subr.mxu0 0.0
        %1005 = vmatpush1.xpose.msra.mxu0 0.0
        %1006 = vmatprep.subr.mxu0 0.0
        %1007 = vmatpush1.xpose.msra.mxu0 0.0
        %1008 = vmatprep.subr.mxu0 0.0
        %1009 = vmatpush1.xpose.msra.mxu0 0.0
        %1010 = vmatprep.subr.mxu0 0.0
        %1011 = vmatpush1.xpose.msra.mxu0 0.0
        %1012 = vmatprep.subr.mxu0 0.0
        %1013 = vmatpush1.xpose.msra.mxu0 0.0
        %1014 = vmatprep.subr.mxu0 0.0
        %1015 = vmatpush1.xpose.msra.mxu0 0.0
        %1016 = vmatprep.subr.mxu0 0.0
        %1017 = vmatpush1.xpose.msra.mxu0 0.0
        %1018 = vmatprep.subr.mxu0 0.0
        %1019 = vmatpush1.xpose.msra.mxu0 0.0
        %1020 = vmatprep.subr.mxu0 0.0
        %1021 = vmatpush1.xpose.msra.mxu0 0.0
        %1022 = vmatprep.subr.mxu0 0.0
        %1023 = vmatpush1.xpose.msra.mxu0 0.0
        %1024 = vmatprep.subr.mxu0 0.0
        %1025 = vmatpush1.xpose.msra.mxu0 0.0
        %1026 = vmatprep.subr.mxu0 0.0
        %1027 = vmatpush1.xpose.msra.mxu0 0.0
        %1028 = vmatprep.subr.mxu0 0.0
        %1029 = vmatpush1.xpose.msra.mxu0 0.0
        %1030 = vmatprep.subr.mxu0 0.0
        %1031 = vmatpush1.xpose.msra.mxu0 0.0
        %1032 = vmatprep.subr.mxu0 0.0
        %1033 = vmatpush1.xpose.msra.mxu0 0.0
        %1034 = vmatprep.subr.mxu0 0.0
        %1035 = vmatpush1.xpose.msra.mxu0 0.0
        %1036 = vmatprep.subr.mxu0 0.0
        %1037 = vmatpush1.xpose.msra.mxu0 0.0
        %1038 = vmatprep.subr.mxu0 0.0
        %1039 = vmatpush1.xpose.msra.mxu0 0.0
        %1040 = vmatprep.subr.mxu0 0.0
        %1041 = vmatpush1.xpose.msra.mxu0 0.0
        %1042 = vmatprep.subr.mxu0 0.0
        %1043 = vmatpush1.xpose.msra.mxu0 0.0
        %1044 = vmatprep.subr.mxu0 0.0
        %1045 = vmatpush1.xpose.msra.mxu0 0.0
        %1046 = vmatprep.subr.mxu0 0.0
        %1047 = vmatpush1.xpose.msra.mxu0 0.0
        %1048 = vmatprep.subr.mxu0 0.0
        %1049 = vmatpush1.xpose.msra.mxu0 0.0
        %1050 = vmatprep.subr.mxu0 0.0
        %1051 = vmatpush1.xpose.msra.mxu0 0.0
        %1052 = vmatprep.subr.mxu0 0.0
        %1053 = vmatpush1.xpose.msra.mxu0 0.0
        %1054 = vmatprep.subr.mxu0 0.0
        %1055 = vmatpush1.xpose.msra.mxu0 0.0
        %1056 = vmatprep.subr.mxu0 0.0
        %1057 = vmatpush1.xpose.msra.mxu0 0.0
        %1058 = vmatprep.mubr.f32.mxu0 0.0
        %1059 = vmatmul.mubr.f32.gmra.mrb[0].mxu0 %v990
        %v1060 = vpop.f32.mrb[0].mxu0
        %v1061 = vadd.f32 0.0, %v1060
        %v1062 = vpop.f32.mrb[0].mxu0
        %1063 = vdwg.mxu0
        %v1064 = vsel %vm403, %v1061, -inf
        %1065 = vmax.xlane.f32.xlu0 %v1064
        %v1066 = vpop.xlane.xlu0 %1065
        %v1067 = vsub.f32 %v1061, %v1066
        %v1068 = vmul.f32 %v1067, 1.442695
        %v1069 = vpow.pop %v1068
        %v1070 = vsel %vm403, %v1069, 0.0
        %1071 = vadd.xlane.f32.xlu0 %v1070
        %v1072 = vpop.xlane.xlu0 %1071
        %1073 = vrot.lane.b32.xlu0 %v322, 48
        %v1074 = vpop.permute.xlu0 %1073
        %v1077 = vsel %vm403, %v1069, 0
        %1079 = vmatprep.subr.mxu0 0.0
        %1080 = vmatpush1.msra.mxu0 %v1074
        %1081 = vmatprep.subr.mxu0 0.0
        %1082 = vmatpush1.msra.mxu0 0.0
        %1083 = vmatprep.subr.mxu0 0.0
        %1084 = vmatpush1.msra.mxu0 0.0
        %1085 = vmatprep.subr.mxu0 0.0
        %1086 = vmatpush1.msra.mxu0 0.0
        %1087 = vmatprep.subr.mxu0 0.0
        %1088 = vmatpush1.msra.mxu0 0.0
        %1089 = vmatprep.subr.mxu0 0.0
        %1090 = vmatpush1.msra.mxu0 0.0
        %1091 = vmatprep.subr.mxu0 0.0
        %1092 = vmatpush1.msra.mxu0 0.0
        %1093 = vmatprep.subr.mxu0 0.0
        %1094 = vmatpush1.msra.mxu0 0.0
        %1095 = vmatprep.subr.mxu0 0.0
        %1096 = vmatpush1.msra.mxu0 0.0
        %1097 = vmatprep.subr.mxu0 0.0
        %1098 = vmatpush1.msra.mxu0 0.0
        %1099 = vmatprep.subr.mxu0 0.0
        %1100 = vmatpush1.msra.mxu0 0.0
        %1101 = vmatprep.subr.mxu0 0.0
        %1102 = vmatpush1.msra.mxu0 0.0
        %1103 = vmatprep.subr.mxu0 0.0
        %1104 = vmatpush1.msra.mxu0 0.0
        %1105 = vmatprep.subr.mxu0 0.0
        %1106 = vmatpush1.msra.mxu0 0.0
        %1107 = vmatprep.subr.mxu0 0.0
        %1108 = vmatpush1.msra.mxu0 0.0
        %1109 = vmatprep.subr.mxu0 0.0
        %1110 = vmatpush1.msra.mxu0 0.0
        %1111 = vmatprep.subr.mxu0 0.0
        %1112 = vmatpush1.msra.mxu0 0.0
        %1113 = vmatprep.subr.mxu0 0.0
        %1114 = vmatpush1.msra.mxu0 0.0
        %1115 = vmatprep.subr.mxu0 0.0
        %1116 = vmatpush1.msra.mxu0 0.0
        %1117 = vmatprep.subr.mxu0 0.0
        %1118 = vmatpush1.msra.mxu0 0.0
        %1119 = vmatprep.subr.mxu0 0.0
        %1120 = vmatpush1.msra.mxu0 0.0
        %1121 = vmatprep.subr.mxu0 0.0
        %1122 = vmatpush1.msra.mxu0 0.0
        %1123 = vmatprep.subr.mxu0 0.0
        %1124 = vmatpush1.msra.mxu0 0.0
        %1125 = vmatprep.subr.mxu0 0.0
        %1126 = vmatpush1.msra.mxu0 0.0
        %1127 = vmatprep.subr.mxu0 0.0
        %1128 = vmatpush1.msra.mxu0 0.0
        %1129 = vmatprep.subr.mxu0 0.0
        %1130 = vmatpush1.msra.mxu0 0.0
        %1131 = vmatprep.subr.mxu0 0.0
        %1132 = vmatpush1.msra.mxu0 0.0
        %1133 = vmatprep.subr.mxu0 0.0
        %1134 = vmatpush1.msra.mxu0 0.0
        %1135 = vmatprep.subr.mxu0 0.0
        %1136 = vmatpush1.msra.mxu0 0.0
        %1137 = vmatprep.subr.mxu0 0.0
        %1138 = vmatpush1.msra.mxu0 0.0
        %1139 = vmatprep.subr.mxu0 0.0
        %1140 = vmatpush1.msra.mxu0 0.0
        %1141 = vmatprep.subr.mxu0 0.0
        %1142 = vmatpush1.msra.mxu0 0.0
        %1143 = vmatprep.mubr.f32.mxu0 0.0
        %1144 = vmatmul.mubr.f32.gmra.mrb[0].mxu0 %v1077
        %v1145 = vpop.f32.mrb[0].mxu0
        %v1146 = vadd.f32 0.0, %v1145
        %v1147 = vpop.f32.mrb[0].mxu0
        %1148 = vdwg.mxu0
        %v1149 = vrcp.pop %v1072
        %v1150 = vmul.f32 %v1146, %v1149
        %1151 = vrot.lane.b32.xlu0 %v322, 108
        %v1152 = vpop.permute.xlu0 %1151
        %1153 = vrot.lane.b32.xlu0 %v322, 76
        %v1154 = vpop.permute.xlu0 %1153
        %v1155 = vsel %vm328, %v1152, 0
        %v1157 = vsel %vm328, %v1154, 0
        %1159 = vmatprep.subr.mxu0 0.0
        %1160 = vmatpush1.xpose.msra.mxu0 %v1157
        %1161 = vmatprep.subr.mxu0 0.0
        %1162 = vmatpush1.xpose.msra.mxu0 0.0
        %1163 = vmatprep.subr.mxu0 0.0
        %1164 = vmatpush1.xpose.msra.mxu0 0.0
        %1165 = vmatprep.subr.mxu0 0.0
        %1166 = vmatpush1.xpose.msra.mxu0 0.0
        %1167 = vmatprep.subr.mxu0 0.0
        %1168 = vmatpush1.xpose.msra.mxu0 0.0
        %1169 = vmatprep.subr.mxu0 0.0
        %1170 = vmatpush1.xpose.msra.mxu0 0.0
        %1171 = vmatprep.subr.mxu0 0.0
        %1172 = vmatpush1.xpose.msra.mxu0 0.0
        %1173 = vmatprep.subr.mxu0 0.0
        %1174 = vmatpush1.xpose.msra.mxu0 0.0
        %1175 = vmatprep.subr.mxu0 0.0
        %1176 = vmatpush1.xpose.msra.mxu0 0.0
        %1177 = vmatprep.subr.mxu0 0.0
        %1178 = vmatpush1.xpose.msra.mxu0 0.0
        %1179 = vmatprep.subr.mxu0 0.0
        %1180 = vmatpush1.xpose.msra.mxu0 0.0
        %1181 = vmatprep.subr.mxu0 0.0
        %1182 = vmatpush1.xpose.msra.mxu0 0.0
        %1183 = vmatprep.subr.mxu0 0.0
        %1184 = vmatpush1.xpose.msra.mxu0 0.0
        %1185 = vmatprep.subr.mxu0 0.0
        %1186 = vmatpush1.xpose.msra.mxu0 0.0
        %1187 = vmatprep.subr.mxu0 0.0
        %1188 = vmatpush1.xpose.msra.mxu0 0.0
        %1189 = vmatprep.subr.mxu0 0.0
        %1190 = vmatpush1.xpose.msra.mxu0 0.0
        %1191 = vmatprep.subr.mxu0 0.0
        %1192 = vmatpush1.xpose.msra.mxu0 0.0
        %1193 = vmatprep.subr.mxu0 0.0
        %1194 = vmatpush1.xpose.msra.mxu0 0.0
        %1195 = vmatprep.subr.mxu0 0.0
        %1196 = vmatpush1.xpose.msra.mxu0 0.0
        %1197 = vmatprep.subr.mxu0 0.0
        %1198 = vmatpush1.xpose.msra.mxu0 0.0
        %1199 = vmatprep.subr.mxu0 0.0
        %1200 = vmatpush1.xpose.msra.mxu0 0.0
        %1201 = vmatprep.subr.mxu0 0.0
        %1202 = vmatpush1.xpose.msra.mxu0 0.0
        %1203 = vmatprep.subr.mxu0 0.0
        %1204 = vmatpush1.xpose.msra.mxu0 0.0
        %1205 = vmatprep.subr.mxu0 0.0
        %1206 = vmatpush1.xpose.msra.mxu0 0.0
        %1207 = vmatprep.subr.mxu0 0.0
        %1208 = vmatpush1.xpose.msra.mxu0 0.0
        %1209 = vmatprep.subr.mxu0 0.0
        %1210 = vmatpush1.xpose.msra.mxu0 0.0
        %1211 = vmatprep.subr.mxu0 0.0
        %1212 = vmatpush1.xpose.msra.mxu0 0.0
        %1213 = vmatprep.subr.mxu0 0.0
        %1214 = vmatpush1.xpose.msra.mxu0 0.0
        %1215 = vmatprep.subr.mxu0 0.0
        %1216 = vmatpush1.xpose.msra.mxu0 0.0
        %1217 = vmatprep.subr.mxu0 0.0
        %1218 = vmatpush1.xpose.msra.mxu0 0.0
        %1219 = vmatprep.subr.mxu0 0.0
        %1220 = vmatpush1.xpose.msra.mxu0 0.0
        %1221 = vmatprep.subr.mxu0 0.0
        %1222 = vmatpush1.xpose.msra.mxu0 0.0
        %1223 = vmatprep.mubr.f32.mxu0 0.0
        %1224 = vmatmul.mubr.f32.gmra.mrb[0].mxu0 %v1155
        %v1225 = vpop.f32.mrb[0].mxu0
        %v1226 = vadd.f32 0.0, %v1225
        %v1227 = vpop.f32.mrb[0].mxu0
        %1228 = vdwg.mxu0
        %v1229 = vsel %vm403, %v1226, -inf
        %1230 = vmax.xlane.f32.xlu0 %v1229
        %v1231 = vpop.xlane.xlu0 %1230
        %v1232 = vsub.f32 %v1226, %v1231
        %v1233 = vmul.f32 %v1232, 1.442695
        %v1234 = vpow.pop %v1233
        %v1235 = vsel %vm403, %v1234, 0.0
        %1236 = vadd.xlane.f32.xlu0 %v1235
        %v1237 = vpop.xlane.xlu0 %1236
        %1238 = vrot.lane.b32.xlu0 %v322, 44
        %v1239 = vpop.permute.xlu0 %1238
        %v1242 = vsel %vm403, %v1234, 0
        %1244 = vmatprep.subr.mxu0 0.0
        %1245 = vmatpush1.msra.mxu0 %v1239
        %1246 = vmatprep.subr.mxu0 0.0
        %1247 = vmatpush1.msra.mxu0 0.0
        %1248 = vmatprep.subr.mxu0 0.0
        %1249 = vmatpush1.msra.mxu0 0.0
        %1250 = vmatprep.subr.mxu0 0.0
        %1251 = vmatpush1.msra.mxu0 0.0
        %1252 = vmatprep.subr.mxu0 0.0
        %1253 = vmatpush1.msra.mxu0 0.0
        %1254 = vmatprep.subr.mxu0 0.0
        %1255 = vmatpush1.msra.mxu0 0.0
        %1256 = vmatprep.subr.mxu0 0.0
        %1257 = vmatpush1.msra.mxu0 0.0
        %1258 = vmatprep.subr.mxu0 0.0
        %1259 = vmatpush1.msra.mxu0 0.0
        %1260 = vmatprep.subr.mxu0 0.0
        %1261 = vmatpush1.msra.mxu0 0.0
        %1262 = vmatprep.subr.mxu0 0.0
        %1263 = vmatpush1.msra.mxu0 0.0
        %1264 = vmatprep.subr.mxu0 0.0
        %1265 = vmatpush1.msra.mxu0 0.0
        %1266 = vmatprep.subr.mxu0 0.0
        %1267 = vmatpush1.msra.mxu0 0.0
        %1268 = vmatprep.subr.mxu0 0.0
        %1269 = vmatpush1.msra.mxu0 0.0
        %1270 = vmatprep.subr.mxu0 0.0
        %1271 = vmatpush1.msra.mxu0 0.0
        %1272 = vmatprep.subr.mxu0 0.0
        %1273 = vmatpush1.msra.mxu0 0.0
        %1274 = vmatprep.subr.mxu0 0.0
        %1275 = vmatpush1.msra.mxu0 0.0
        %1276 = vmatprep.subr.mxu0 0.0
        %1277 = vmatpush1.msra.mxu0 0.0
        %1278 = vmatprep.subr.mxu0 0.0
        %1279 = vmatpush1.msra.mxu0 0.0
        %1280 = vmatprep.subr.mxu0 0.0
        %1281 = vmatpush1.msra.mxu0 0.0
        %1282 = vmatprep.subr.mxu0 0.0
        %1283 = vmatpush1.msra.mxu0 0.0
        %1284 = vmatprep.subr.mxu0 0.0
        %1285 = vmatpush1.msra.mxu0 0.0
        %1286 = vmatprep.subr.mxu0 0.0
        %1287 = vmatpush1.msra.mxu0 0.0
        %1288 = vmatprep.subr.mxu0 0.0
        %1289 = vmatpush1.msra.mxu0 0.0
        %1290 = vmatprep.subr.mxu0 0.0
        %1291 = vmatpush1.msra.mxu0 0.0
        %1292 = vmatprep.subr.mxu0 0.0
        %1293 = vmatpush1.msra.mxu0 0.0
        %1294 = vmatprep.subr.mxu0 0.0
        %1295 = vmatpush1.msra.mxu0 0.0
        %1296 = vmatprep.subr.mxu0 0.0
        %1297 = vmatpush1.msra.mxu0 0.0
        %1298 = vmatprep.subr.mxu0 0.0
        %1299 = vmatpush1.msra.mxu0 0.0
        %1300 = vmatprep.subr.mxu0 0.0
        %1301 = vmatpush1.msra.mxu0 0.0
        %1302 = vmatprep.subr.mxu0 0.0
        %1303 = vmatpush1.msra.mxu0 0.0
        %1304 = vmatprep.subr.mxu0 0.0
        %1305 = vmatpush1.msra.mxu0 0.0
        %1306 = vmatprep.subr.mxu0 0.0
        %1307 = vmatpush1.msra.mxu0 0.0
        %1308 = vmatprep.mubr.f32.mxu0 0.0
        %1309 = vmatmul.mubr.f32.gmra.mrb[0].mxu0 %v1242
        %v1310 = vpop.f32.mrb[0].mxu0
        %v1311 = vadd.f32 0.0, %v1310
        %v1312 = vpop.f32.mrb[0].mxu0
        %1313 = vdwg.mxu0
        %v1314 = vrcp.pop %v1237
        %v1315 = vmul.f32 %v1311, %v1314
        %1316 = vrot.lane.b32.xlu0 %v322, 104
        %v1317 = vpop.permute.xlu0 %1316
        %1318 = vrot.lane.b32.xlu0 %v322, 72
        %v1319 = vpop.permute.xlu0 %1318
        %v1320 = vsel %vm328, %v1317, 0
        %v1322 = vsel %vm328, %v1319, 0
        %1324 = vmatprep.subr.mxu0 0.0
        %1325 = vmatpush1.xpose.msra.mxu0 %v1322
        %1326 = vmatprep.subr.mxu0 0.0
        %1327 = vmatpush1.xpose.msra.mxu0 0.0
        %1328 = vmatprep.subr.mxu0 0.0
        %1329 = vmatpush1.xpose.msra.mxu0 0.0
        %1330 = vmatprep.subr.mxu0 0.0
        %1331 = vmatpush1.xpose.msra.mxu0 0.0
        %1332 = vmatprep.subr.mxu0 0.0
        %1333 = vmatpush1.xpose.msra.mxu0 0.0
        %1334 = vmatprep.subr.mxu0 0.0
        %1335 = vmatpush1.xpose.msra.mxu0 0.0
        %1336 = vmatprep.subr.mxu0 0.0
        %1337 = vmatpush1.xpose.msra.mxu0 0.0
        %1338 = vmatprep.subr.mxu0 0.0
        %1339 = vmatpush1.xpose.msra.mxu0 0.0
        %1340 = vmatprep.subr.mxu0 0.0
        %1341 = vmatpush1.xpose.msra.mxu0 0.0
        %1342 = vmatprep.subr.mxu0 0.0
        %1343 = vmatpush1.xpose.msra.mxu0 0.0
        %1344 = vmatprep.subr.mxu0 0.0
        %1345 = vmatpush1.xpose.msra.mxu0 0.0
        %1346 = vmatprep.subr.mxu0 0.0
        %1347 = vmatpush1.xpose.msra.mxu0 0.0
        %1348 = vmatprep.subr.mxu0 0.0
        %1349 = vmatpush1.xpose.msra.mxu0 0.0
        %1350 = vmatprep.subr.mxu0 0.0
        %1351 = vmatpush1.xpose.msra.mxu0 0.0
        %1352 = vmatprep.subr.mxu0 0.0
        %1353 = vmatpush1.xpose.msra.mxu0 0.0
        %1354 = vmatprep.subr.mxu0 0.0
        %1355 = vmatpush1.xpose.msra.mxu0 0.0
        %1356 = vmatprep.subr.mxu0 0.0
        %1357 = vmatpush1.xpose.msra.mxu0 0.0
        %1358 = vmatprep.subr.mxu0 0.0
        %1359 = vmatpush1.xpose.msra.mxu0 0.0
        %1360 = vmatprep.subr.mxu0 0.0
        %1361 = vmatpush1.xpose.msra.mxu0 0.0
        %1362 = vmatprep.subr.mxu0 0.0
        %1363 = vmatpush1.xpose.msra.mxu0 0.0
        %1364 = vmatprep.subr.mxu0 0.0
        %1365 = vmatpush1.xpose.msra.mxu0 0.0
        %1366 = vmatprep.subr.mxu0 0.0
        %1367 = vmatpush1.xpose.msra.mxu0 0.0
        %1368 = vmatprep.subr.mxu0 0.0
        %1369 = vmatpush1.xpose.msra.mxu0 0.0
        %1370 = vmatprep.subr.mxu0 0.0
        %1371 = vmatpush1.xpose.msra.mxu0 0.0
        %1372 = vmatprep.subr.mxu0 0.0
        %1373 = vmatpush1.xpose.msra.mxu0 0.0
        %1374 = vmatprep.subr.mxu0 0.0
        %1375 = vmatpush1.xpose.msra.mxu0 0.0
        %1376 = vmatprep.subr.mxu0 0.0
        %1377 = vmatpush1.xpose.msra.mxu0 0.0
        %1378 = vmatprep.subr.mxu0 0.0
        %1379 = vmatpush1.xpose.msra.mxu0 0.0
        %1380 = vmatprep.subr.mxu0 0.0
        %1381 = vmatpush1.xpose.msra.mxu0 0.0
        %1382 = vmatprep.subr.mxu0 0.0
        %1383 = vmatpush1.xpose.msra.mxu0 0.0
        %1384 = vmatprep.subr.mxu0 0.0
        %1385 = vmatpush1.xpose.msra.mxu0 0.0
        %1386 = vmatprep.subr.mxu0 0.0
        %1387 = vmatpush1.xpose.msra.mxu0 0.0
        %1388 = vmatprep.mubr.f32.mxu0 0.0
        %1389 = vmatmul.mubr.f32.gmra.mrb[0].mxu0 %v1320
        %v1390 = vpop.f32.mrb[0].mxu0
        %v1391 = vadd.f32 0.0, %v1390
        %v1392 = vpop.f32.mrb[0].mxu0
        %1393 = vdwg.mxu0
        %v1394 = vsel %vm403, %v1391, -inf
        %1395 = vmax.xlane.f32.xlu0 %v1394
        %v1396 = vpop.xlane.xlu0 %1395
        %v1397 = vsub.f32 %v1391, %v1396
        %v1398 = vmul.f32 %v1397, 1.442695
        %v1399 = vpow.pop %v1398
        %v1400 = vsel %vm403, %v1399, 0.0
        %1401 = vadd.xlane.f32.xlu0 %v1400
        %v1402 = vpop.xlane.xlu0 %1401
        %1403 = vrot.lane.b32.xlu0 %v322, 40
        %v1404 = vpop.permute.xlu0 %1403
        %v1407 = vsel %vm403, %v1399, 0
        %1409 = vmatprep.subr.mxu0 0.0
        %1410 = vmatpush1.msra.mxu0 %v1404
        %1411 = vmatprep.subr.mxu0 0.0
        %1412 = vmatpush1.msra.mxu0 0.0
        %1413 = vmatprep.subr.mxu0 0.0
        %1414 = vmatpush1.msra.mxu0 0.0
        %1415 = vmatprep.subr.mxu0 0.0
        %1416 = vmatpush1.msra.mxu0 0.0
        %1417 = vmatprep.subr.mxu0 0.0
        %1418 = vmatpush1.msra.mxu0 0.0
        %1419 = vmatprep.subr.mxu0 0.0
        %1420 = vmatpush1.msra.mxu0 0.0
        %1421 = vmatprep.subr.mxu0 0.0
        %1422 = vmatpush1.msra.mxu0 0.0
        %1423 = vmatprep.subr.mxu0 0.0
        %1424 = vmatpush1.msra.mxu0 0.0
        %1425 = vmatprep.subr.mxu0 0.0
        %1426 = vmatpush1.msra.mxu0 0.0
        %1427 = vmatprep.subr.mxu0 0.0
        %1428 = vmatpush1.msra.mxu0 0.0
        %1429 = vmatprep.subr.mxu0 0.0
        %1430 = vmatpush1.msra.mxu0 0.0
        %1431 = vmatprep.subr.mxu0 0.0
        %1432 = vmatpush1.msra.mxu0 0.0
        %1433 = vmatprep.subr.mxu0 0.0
        %1434 = vmatpush1.msra.mxu0 0.0
        %1435 = vmatprep.subr.mxu0 0.0
        %1436 = vmatpush1.msra.mxu0 0.0
        %1437 = vmatprep.subr.mxu0 0.0
        %1438 = vmatpush1.msra.mxu0 0.0
        %1439 = vmatprep.subr.mxu0 0.0
        %1440 = vmatpush1.msra.mxu0 0.0
        %1441 = vmatprep.subr.mxu0 0.0
        %1442 = vmatpush1.msra.mxu0 0.0
        %1443 = vmatprep.subr.mxu0 0.0
        %1444 = vmatpush1.msra.mxu0 0.0
        %1445 = vmatprep.subr.mxu0 0.0
        %1446 = vmatpush1.msra.mxu0 0.0
        %1447 = vmatprep.subr.mxu0 0.0
        %1448 = vmatpush1.msra.mxu0 0.0
        %1449 = vmatprep.subr.mxu0 0.0
        %1450 = vmatpush1.msra.mxu0 0.0
        %1451 = vmatprep.subr.mxu0 0.0
        %1452 = vmatpush1.msra.mxu0 0.0
        %1453 = vmatprep.subr.mxu0 0.0
        %1454 = vmatpush1.msra.mxu0 0.0
        %1455 = vmatprep.subr.mxu0 0.0
        %1456 = vmatpush1.msra.mxu0 0.0
        %1457 = vmatprep.subr.mxu0 0.0
        %1458 = vmatpush1.msra.mxu0 0.0
        %1459 = vmatprep.subr.mxu0 0.0
        %1460 = vmatpush1.msra.mxu0 0.0
        %1461 = vmatprep.subr.mxu0 0.0
        %1462 = vmatpush1.msra.mxu0 0.0
        %1463 = vmatprep.subr.mxu0 0.0
        %1464 = vmatpush1.msra.mxu0 0.0
        %1465 = vmatprep.subr.mxu0 0.0
        %1466 = vmatpush1.msra.mxu0 0.0
        %1467 = vmatprep.subr.mxu0 0.0
        %1468 = vmatpush1.msra.mxu0 0.0
        %1469 = vmatprep.subr.mxu0 0.0
        %1470 = vmatpush1.msra.mxu0 0.0
        %1471 = vmatprep.subr.mxu0 0.0
        %1472 = vmatpush1.msra.mxu0 0.0
        %1473 = vmatprep.mubr.f32.mxu0 0.0
        %1474 = vmatmul.mubr.f32.gmra.mrb[0].mxu0 %v1407
        %v1475 = vpop.f32.mrb[0].mxu0
        %v1476 = vadd.f32 0.0, %v1475
        %v1477 = vpop.f32.mrb[0].mxu0
        %1478 = vdwg.mxu0
        %v1479 = vrcp.pop %v1402
        %v1480 = vmul.f32 %v1476, %v1479
        %1481 = vrot.lane.b32.xlu0 %v322, 100
        %v1482 = vpop.permute.xlu0 %1481
        %1483 = vrot.lane.b32.xlu0 %v322, 68
        %v1484 = vpop.permute.xlu0 %1483
        %v1485 = vsel %vm328, %v1482, 0
        %v1487 = vsel %vm328, %v1484, 0
        %1489 = vmatprep.subr.mxu0 0.0
        %1490 = vmatpush1.xpose.msra.mxu0 %v1487
        %1491 = vmatprep.subr.mxu0 0.0
        %1492 = vmatpush1.xpose.msra.mxu0 0.0
        %1493 = vmatprep.subr.mxu0 0.0
        %1494 = vmatpush1.xpose.msra.mxu0 0.0
        %1495 = vmatprep.subr.mxu0 0.0
        %1496 = vmatpush1.xpose.msra.mxu0 0.0
        %1497 = vmatprep.subr.mxu0 0.0
        %1498 = vmatpush1.xpose.msra.mxu0 0.0
        %1499 = vmatprep.subr.mxu0 0.0
        %1500 = vmatpush1.xpose.msra.mxu0 0.0
        %1501 = vmatprep.subr.mxu0 0.0
        %1502 = vmatpush1.xpose.msra.mxu0 0.0
        %1503 = vmatprep.subr.mxu0 0.0
        %1504 = vmatpush1.xpose.msra.mxu0 0.0
        %1505 = vmatprep.subr.mxu0 0.0
        %1506 = vmatpush1.xpose.msra.mxu0 0.0
        %1507 = vmatprep.subr.mxu0 0.0
        %1508 = vmatpush1.xpose.msra.mxu0 0.0
        %1509 = vmatprep.subr.mxu0 0.0
        %1510 = vmatpush1.xpose.msra.mxu0 0.0
        %1511 = vmatprep.subr.mxu0 0.0
        %1512 = vmatpush1.xpose.msra.mxu0 0.0
        %1513 = vmatprep.subr.mxu0 0.0
        %1514 = vmatpush1.xpose.msra.mxu0 0.0
        %1515 = vmatprep.subr.mxu0 0.0
        %1516 = vmatpush1.xpose.msra.mxu0 0.0
        %1517 = vmatprep.subr.mxu0 0.0
        %1518 = vmatpush1.xpose.msra.mxu0 0.0
        %1519 = vmatprep.subr.mxu0 0.0
        %1520 = vmatpush1.xpose.msra.mxu0 0.0
        %1521 = vmatprep.subr.mxu0 0.0
        %1522 = vmatpush1.xpose.msra.mxu0 0.0
        %1523 = vmatprep.subr.mxu0 0.0
        %1524 = vmatpush1.xpose.msra.mxu0 0.0
        %1525 = vmatprep.subr.mxu0 0.0
        %1526 = vmatpush1.xpose.msra.mxu0 0.0
        %1527 = vmatprep.subr.mxu0 0.0
        %1528 = vmatpush1.xpose.msra.mxu0 0.0
        %1529 = vmatprep.subr.mxu0 0.0
        %1530 = vmatpush1.xpose.msra.mxu0 0.0
        %1531 = vmatprep.subr.mxu0 0.0
        %1532 = vmatpush1.xpose.msra.mxu0 0.0
        %1533 = vmatprep.subr.mxu0 0.0
        %1534 = vmatpush1.xpose.msra.mxu0 0.0
        %1535 = vmatprep.subr.mxu0 0.0
        %1536 = vmatpush1.xpose.msra.mxu0 0.0
        %1537 = vmatprep.subr.mxu0 0.0
        %1538 = vmatpush1.xpose.msra.mxu0 0.0
        %1539 = vmatprep.subr.mxu0 0.0
        %1540 = vmatpush1.xpose.msra.mxu0 0.0
        %1541 = vmatprep.subr.mxu0 0.0
        %1542 = vmatpush1.xpose.msra.mxu0 0.0
        %1543 = vmatprep.subr.mxu0 0.0
        %1544 = vmatpush1.xpose.msra.mxu0 0.0
        %1545 = vmatprep.subr.mxu0 0.0
        %1546 = vmatpush1.xpose.msra.mxu0 0.0
        %1547 = vmatprep.subr.mxu0 0.0
        %1548 = vmatpush1.xpose.msra.mxu0 0.0
        %1549 = vmatprep.subr.mxu0 0.0
        %1550 = vmatpush1.xpose.msra.mxu0 0.0
        %1551 = vmatprep.subr.mxu0 0.0
        %1552 = vmatpush1.xpose.msra.mxu0 0.0
        %1553 = vmatprep.mubr.f32.mxu0 0.0
        %1554 = vmatmul.mubr.f32.gmra.mrb[0].mxu0 %v1485
        %v1555 = vpop.f32.mrb[0].mxu0
        %v1556 = vadd.f32 0.0, %v1555
        %v1557 = vpop.f32.mrb[0].mxu0
        %1558 = vdwg.mxu0
        %v1559 = vsel %vm403, %v1556, -inf
        %1560 = vmax.xlane.f32.xlu0 %v1559
        %v1561 = vpop.xlane.xlu0 %1560
        %v1562 = vsub.f32 %v1556, %v1561
        %v1563 = vmul.f32 %v1562, 1.442695
        %v1564 = vpow.pop %v1563
        %v1565 = vsel %vm403, %v1564, 0.0
        %1566 = vadd.xlane.f32.xlu0 %v1565
        %v1567 = vpop.xlane.xlu0 %1566
        %1568 = vrot.lane.b32.xlu0 %v322, 36
        %v1569 = vpop.permute.xlu0 %1568
        %v1572 = vsel %vm403, %v1564, 0
        %1574 = vmatprep.subr.mxu0 0.0
        %1575 = vmatpush1.msra.mxu0 %v1569
        %1576 = vmatprep.subr.mxu0 0.0
        %1577 = vmatpush1.msra.mxu0 0.0
        %1578 = vmatprep.subr.mxu0 0.0
        %1579 = vmatpush1.msra.mxu0 0.0
        %1580 = vmatprep.subr.mxu0 0.0
        %1581 = vmatpush1.msra.mxu0 0.0
        %1582 = vmatprep.subr.mxu0 0.0
        %1583 = vmatpush1.msra.mxu0 0.0
        %1584 = vmatprep.subr.mxu0 0.0
        %1585 = vmatpush1.msra.mxu0 0.0
        %1586 = vmatprep.subr.mxu0 0.0
        %1587 = vmatpush1.msra.mxu0 0.0
        %1588 = vmatprep.subr.mxu0 0.0
        %1589 = vmatpush1.msra.mxu0 0.0
        %1590 = vmatprep.subr.mxu0 0.0
        %1591 = vmatpush1.msra.mxu0 0.0
        %1592 = vmatprep.subr.mxu0 0.0
        %1593 = vmatpush1.msra.mxu0 0.0
        %1594 = vmatprep.subr.mxu0 0.0
        %1595 = vmatpush1.msra.mxu0 0.0
        %1596 = vmatprep.subr.mxu0 0.0
        %1597 = vmatpush1.msra.mxu0 0.0
        %1598 = vmatprep.subr.mxu0 0.0
        %1599 = vmatpush1.msra.mxu0 0.0
        %1600 = vmatprep.subr.mxu0 0.0
        %1601 = vmatpush1.msra.mxu0 0.0
        %1602 = vmatprep.subr.mxu0 0.0
        %1603 = vmatpush1.msra.mxu0 0.0
        %1604 = vmatprep.subr.mxu0 0.0
        %1605 = vmatpush1.msra.mxu0 0.0
        %1606 = vmatprep.subr.mxu0 0.0
        %1607 = vmatpush1.msra.mxu0 0.0
        %1608 = vmatprep.subr.mxu0 0.0
        %1609 = vmatpush1.msra.mxu0 0.0
        %1610 = vmatprep.subr.mxu0 0.0
        %1611 = vmatpush1.msra.mxu0 0.0
        %1612 = vmatprep.subr.mxu0 0.0
        %1613 = vmatpush1.msra.mxu0 0.0
        %1614 = vmatprep.subr.mxu0 0.0
        %1615 = vmatpush1.msra.mxu0 0.0
        %1616 = vmatprep.subr.mxu0 0.0
        %1617 = vmatpush1.msra.mxu0 0.0
        %1618 = vmatprep.subr.mxu0 0.0
        %1619 = vmatpush1.msra.mxu0 0.0
        %1620 = vmatprep.subr.mxu0 0.0
        %1621 = vmatpush1.msra.mxu0 0.0
        %1622 = vmatprep.subr.mxu0 0.0
        %1623 = vmatpush1.msra.mxu0 0.0
        %1624 = vmatprep.subr.mxu0 0.0
        %1625 = vmatpush1.msra.mxu0 0.0
        %1626 = vmatprep.subr.mxu0 0.0
        %1627 = vmatpush1.msra.mxu0 0.0
        %1628 = vmatprep.subr.mxu0 0.0
        %1629 = vmatpush1.msra.mxu0 0.0
        %1630 = vmatprep.subr.mxu0 0.0
        %1631 = vmatpush1.msra.mxu0 0.0
        %1632 = vmatprep.subr.mxu0 0.0
        %1633 = vmatpush1.msra.mxu0 0.0
        %1634 = vmatprep.subr.mxu0 0.0
        %1635 = vmatpush1.msra.mxu0 0.0
        %1636 = vmatprep.subr.mxu0 0.0
        %1637 = vmatpush1.msra.mxu0 0.0
        %1638 = vmatprep.mubr.f32.mxu0 0.0
        %1639 = vmatmul.mubr.f32.gmra.mrb[0].mxu0 %v1572
        %v1640 = vpop.f32.mrb[0].mxu0
        %v1641 = vadd.f32 0.0, %v1640
        %v1642 = vpop.f32.mrb[0].mxu0
        %1643 = vdwg.mxu0
        %v1644 = vrcp.pop %v1567
        %v1645 = vmul.f32 %v1641, %v1644
        %1647 = vrot.lane.b32.xlu0 %v655, 4
        %v1648 = vpop.permute.xlu0 %1647
        %1651 = vrot.lane.b32.xlu0 %v820, 8
        %v1652 = vpop.permute.xlu0 %1651
        %1655 = vrot.lane.b32.xlu0 %v985, 12
        %v1656 = vpop.permute.xlu0 %1655
        %1659 = vrot.lane.b32.xlu0 %v1150, 16
        %v1660 = vpop.permute.xlu0 %1659
        %1663 = vrot.lane.b32.xlu0 %v1315, 20
        %v1664 = vpop.permute.xlu0 %1663
        %1667 = vrot.lane.b32.xlu0 %v1480, 24
        %v1668 = vpop.permute.xlu0 %1667
        %1671 = vrot.lane.b32.xlu0 %v1645, 28
        %v1672 = vpop.permute.xlu0 %1671
        %v1674 = vsel %vm328, %v490, %v1648
        %v1675 = vsel %vm403, %v1674, %v1652
        %vm1676 = vcmask 97280
        %v1677 = vsel %vm1676, %v1675, %v1656
        %vm1678 = vcmask 130048
        %v1679 = vsel %vm1678, %v1677, %v1660
        %vm1680 = vcmask 162816
        %v1681 = vsel %vm1680, %v1679, %v1664
        %vm1682 = vcmask 195584
        %v1683 = vsel %vm1682, %v1681, %v1668
        %vm1684 = vcmask 228352
        %v1685 = vsel %vm1684, %v1683, %v1672
        %1686 = vst.msk [vmem:[#allocation2] sm:$0xff] %vm251, %v1685
        %v1687 = vld [vmem:[#allocation2] sm:$0xff]
        %v1688 = vld [vmem:[%s3] sm:$0x1]
        %v1690 = vlaneseq
        %v1691 = vshrl.u32 %v1690, 7
        %v1692 = vsub.s32 0, %v1691
        %v1693 = vrot.slane %v1688, %v1692
        %v1696 = vsel %vm251, %v1687, 0
        %1698 = vmatprep.subr.mxu0 0.0
        %1699 = vmatpush1.msra.mxu0 %v247
        %1700 = vmatprep.subr.mxu0 0.0
        %1701 = vmatpush1.msra.mxu0 %v248
        %1702 = vmatprep.subr.mxu0 0.0
        %1703 = vmatpush1.msra.mxu0 %v249
        %1704 = vmatprep.subr.mxu0 0.0
        %1705 = vmatpush1.msra.mxu0 %v250
        %1706 = vmatprep.subr.mxu0 0.0
        %1707 = vmatpush1.msra.mxu0 0.0
        %1708 = vmatprep.subr.mxu0 0.0
        %1709 = vmatpush1.msra.mxu0 0.0
        %1710 = vmatprep.subr.mxu0 0.0
        %1711 = vmatpush1.msra.mxu0 0.0
        %1712 = vmatprep.subr.mxu0 0.0
        %1713 = vmatpush1.msra.mxu0 0.0
        %1714 = vmatprep.subr.mxu0 0.0
        %1715 = vmatpush1.msra.mxu0 0.0
        %1716 = vmatprep.subr.mxu0 0.0
        %1717 = vmatpush1.msra.mxu0 0.0
        %1718 = vmatprep.subr.mxu0 0.0
        %1719 = vmatpush1.msra.mxu0 0.0
        %1720 = vmatprep.subr.mxu0 0.0
        %1721 = vmatpush1.msra.mxu0 0.0
        %1722 = vmatprep.subr.mxu0 0.0
        %1723 = vmatpush1.msra.mxu0 0.0
        %1724 = vmatprep.subr.mxu0 0.0
        %1725 = vmatpush1.msra.mxu0 0.0
        %1726 = vmatprep.subr.mxu0 0.0
        %1727 = vmatpush1.msra.mxu0 0.0
        %1728 = vmatprep.subr.mxu0 0.0
        %1729 = vmatpush1.msra.mxu0 0.0
        %1730 = vmatprep.subr.mxu0 0.0
        %1731 = vmatpush1.msra.mxu0 0.0
        %1732 = vmatprep.subr.mxu0 0.0
        %1733 = vmatpush1.msra.mxu0 0.0
        %1734 = vmatprep.subr.mxu0 0.0
        %1735 = vmatpush1.msra.mxu0 0.0
        %1736 = vmatprep.subr.mxu0 0.0
        %1737 = vmatpush1.msra.mxu0 0.0
        %1738 = vmatprep.subr.mxu0 0.0
        %1739 = vmatpush1.msra.mxu0 0.0
        %1740 = vmatprep.subr.mxu0 0.0
        %1741 = vmatpush1.msra.mxu0 0.0
        %1742 = vmatprep.subr.mxu0 0.0
        %1743 = vmatpush1.msra.mxu0 0.0
        %1744 = vmatprep.subr.mxu0 0.0
        %1745 = vmatpush1.msra.mxu0 0.0
        %1746 = vmatprep.subr.mxu0 0.0
        %1747 = vmatpush1.msra.mxu0 0.0
        %1748 = vmatprep.subr.mxu0 0.0
        %1749 = vmatpush1.msra.mxu0 0.0
        %1750 = vmatprep.subr.mxu0 0.0
        %1751 = vmatpush1.msra.mxu0 0.0
        %1752 = vmatprep.subr.mxu0 0.0
        %1753 = vmatpush1.msra.mxu0 0.0
        %1754 = vmatprep.subr.mxu0 0.0
        %1755 = vmatpush1.msra.mxu0 0.0
        %1756 = vmatprep.subr.mxu0 0.0
        %1757 = vmatpush1.msra.mxu0 0.0
        %1758 = vmatprep.subr.mxu0 0.0
        %1759 = vmatpush1.msra.mxu0 0.0
        %1760 = vmatprep.subr.mxu0 0.0
        %1761 = vmatpush1.msra.mxu0 0.0
        %1762 = vmatprep.mubr.f32.mxu0 0.0
        %1763 = vmatmul.mubr.f32.gmra.mrb[0].mxu0 %v1696
        %v1764 = vpop.f32.mrb[0].mxu0
        %v1765 = vadd.f32 %v1693, %v1764
        %v1766 = vpop.f32.mrb[0].mxu0
        %1767 = vdwg.mxu0
        %1768 = vst.msk [vmem:[%s241] sm:$0xff] %vm251, %v1765
        %s1769 = sand.u32 %s119, 1
        %s1770 = scalar_lea.sflag [#allocation5], %s1769
        %s1771 = sand.u32 %s119, 1
        %s1772 = smul.addr %s1771, 8
        %s1773 = scalar_lea.vmem [#allocation9], %s1772
        // Predicated region
        $region49: #{tpu_custom_call.1} parent=35 // pred_check
          %p1774 = pneg %p129
        $region50: #{tpu_custom_call.1} parent=35 // pred_check_branch
          %1776 = sbr.rel (%p1774) target = $region52
        $region51: #{tpu_custom_call.1} parent=35 // pred_region
          %s1778 = ssub.s32 128, 128
          %1779 = vsyncadd %s1770, %s1778
          %s1780 = smul.addr %s22, 128
          %s1781 = scalar_lea.hbm %s4, %s1780
          %s1783 = sshll.u32 %s1773, 4
          %s1784 = int_to_ptr.vmem [resolvable:$true] %s1783
          %1786 = dma.vmem_to_hbm [thread:$0]  %s1784, 128, %s1781, %s1770
        $region52: #{tpu_custom_call.1} parent=35 // pred_fallthru
          _
      $region36: #{tpu_custom_call.1} parent=5 // pred_fallthru
        _
      %p1787 = scmp.le.s32.totalorder 2, %s17
      // Predicated region
      $region53: #{tpu_custom_call.1} parent=5 // pred_check
        %p1788 = pneg %p1787
      $region54: #{tpu_custom_call.1} parent=5 // pred_check_branch
        %1790 = sbr.rel (%p1788) target = $region56
      $region55: #{tpu_custom_call.1} parent=5 // pred_region
        %s1791 = ssub.s32 %s17, 2
        // Predicated region
        $region57: #{tpu_custom_call.1} parent=55 // pred_check
          %p1792 = pneg %p135
        $region58: #{tpu_custom_call.1} parent=55 // pred_check_branch
          %1794 = sbr.rel (%p1792) target = $region60
        $region59: #{tpu_custom_call.1} parent=55 // pred_region
          %s1795 = sand.u32 %s120, 1
          %s1796 = scalar_lea.sflag [#allocation5], %s1795
          %s1797 = sand.u32 %s120, 1
          %s1798 = smul.addr %s1797, 8
          %s1799 = scalar_lea.vmem [#allocation9], %s1798
          %1800 = dma.done %s1796, 128
        $region60: #{tpu_custom_call.1} parent=55 // pred_fallthru
          _
      $region56: #{tpu_custom_call.1} parent=5 // pred_fallthru
        _
    $region6: #{tpu_custom_call.1} parent=1 // loop_footer
      %s21 = sadd.s32 1, %s17
    $region7: #{tpu_custom_call.1} parent=1 // loop_footer_branch
      %16 = sbr.rel target = $region3
    $region8: #{tpu_custom_call.1} parent=1 // loop_exit
      _
    %1801 = vsyncpa [#allocation4], 1
    %s1802 = scalar_lea.sflag [#allocation4], 1
    %1803 = vsyncpa %s1802, 1
    %1804 = vsyncpa [#allocation7], 1
    %1805 = vsyncpa [#allocation5], 1
    %s1806 = scalar_lea.sflag [#allocation5], 1
    %1807 = vsyncpa %s1806, 1

</llo_original>
